<compile_context>
chip_gen: v7x
topology: tpu7x:2x2x1
jax: 0.10.0
libtpu: 0.0.40
codegen_flags: <defaults>
</compile_context>

<pallas_src>
import functools

import jax
import jax.numpy as jnp
from jax import lax
from jax.experimental import pallas as pl
from jax.experimental.pallas import tpu as pltpu


def _encoder_layer_kernel(maskq_ref, maskk_ref, edge_ref, x_ref,
                          wg_ref, wqkv_ref, wo_ref, w1_ref, w2_ref, slab_ref,
                          xo_ref, *, num_heads, causal, use_gcn):
    f32, bf16 = jnp.float32, jnp.bfloat16
    Bb, T, D = x_ref.shape
    H = num_heads
    dh = D // H
    M = Bb * T
    dff = w1_ref.shape[1]

    # packed bias / LayerNorm slab (rows set in the wrapper); each read is (1, width)
    bg = slab_ref[0:1, 0:D]
    bqkv = slab_ref[1:2, 0:3 * D]
    bo = slab_ref[2:3, 0:D]
    b1 = slab_ref[3:4, 0:dff]
    b2 = slab_ref[4:5, 0:D]
    ln_g = slab_ref[5:6, 0:D]
    ln_b = slab_ref[6:7, 0:D]

    x3 = x_ref[...].astype(f32)                         # (Bb, T, D)
    validq = 1.0 - maskq_ref[...]                       # (Bb, T, 1)  1 = valid token
    maskk = maskk_ref[...]                              # (Bb, 1, T)  1 = padded key

    # ---- GCN: relu(adj_norm @ x @ Wg + bg) ----
    # masked adjacency is rank-1 (valid_i*valid_j/n), so adj_norm @ x collapses to a
    # per-row scaled masked mean; the Wg matmul then runs on the flat (Bb*T, D) slab.
    if use_gcn:
        n_valid = jnp.sum(validq, axis=1, keepdims=True)               # (Bb,1,1)
        inv_n = 1.0 / jnp.maximum(n_valid, 1.0)
        pooled = jnp.sum(x3 * validq, axis=1, keepdims=True)           # (Bb,1,D)
        pre = (validq * inv_n * pooled).reshape(M, D)                  # adj_norm @ x
        x2 = jnp.maximum(
            jnp.dot(pre.astype(bf16), wg_ref[...],
                    preferred_element_type=f32) + bg, 0.0)             # (M, D)
        # TODO(synk): MultiGCNLayer's edge_fea update rule is unspecified; edge passes through.
    else:
        x2 = x3.reshape(M, D)

    # ---- multi-head self-attention (q = k = v = x2) ----
    # fused QKV projection: one (M, D) @ (D, 3D) matmul; 1/sqrt(dh) pre-folded into Wq / bq.
    qkv = jnp.dot(x2.astype(bf16), wqkv_ref[...],
                  preferred_element_type=f32) + bqkv                   # (M, 3D)

    # per-(batch, head) views with a single leading batch dim: (H*Bb, T, dh)
    # TODO(synk): replace the per-head lane slices + stack with one grouped relayout
    # (pltpu.einshape) once that form is verified on all target generations.
    def heads(col0):
        parts = [qkv[:, col0 + h * dh: col0 + (h + 1) * dh].reshape(Bb, T, dh)
                 for h in range(H)]
        return jnp.stack(parts, axis=0).astype(bf16).reshape(H * Bb, T, dh)

    qh, kh, vh = heads(0), heads(D), heads(2 * D)

    # additive score bias (edge + key-padding [+ causal]) built ONCE, shared across heads
    bias = edge_ref[...].astype(f32) + maskk * (-1e9)                  # (Bb, T, T)
    if causal:
        row = lax.broadcasted_iota(jnp.int32, (T, T), 0)
        col = lax.broadcasted_iota(jnp.int32, (T, T), 1)
        bias = bias + jnp.where(col > row, -1e9, 0.0)

    scores = jnp.einsum('bqd,bkd->bqk', qh, kh,
                        preferred_element_type=f32)                    # (H*Bb, T, T)
    scores = (scores.reshape(H, Bb, T, T) + bias[None]).reshape(H * Bb, T, T)

    m_max = jnp.max(scores, axis=-1, keepdims=True)
    p = jnp.exp(scores - m_max)
    p = p * pl.reciprocal(jnp.sum(p, axis=-1, keepdims=True), approx=True)

    o = jnp.einsum('bqk,bkd->bqd', p.astype(bf16), vh,
                   preferred_element_type=f32)                         # (H*Bb, T, dh)

    # head merge without a lane concat: concat_h(o_h) @ Wo == sum_h o_h @ Wo[h]
    o = o.reshape(H, M, dh).astype(bf16)
    attn = jnp.sum(
        jnp.einsum('hmd,hdn->hmn', o, wo_ref[...], preferred_element_type=f32),
        axis=0) + bo                                                   # (M, D)

    x2 = attn + x2                                                     # residual

    # ---- position-wise FFN + residual + LayerNorm (f32 statistics) ----
    h1 = jnp.maximum(
        jnp.dot(x2.astype(bf16), w1_ref[...], preferred_element_type=f32) + b1, 0.0)
    h2 = jnp.dot(h1.astype(bf16), w2_ref[...], preferred_element_type=f32) + b2
    y = x2 + h2
    mu = jnp.mean(y, axis=-1, keepdims=True)
    var = jnp.mean((y - mu) ** 2, axis=-1, keepdims=True)
    y = (y - mu) * lax.rsqrt(var + 1e-5)                               # nn.LayerNorm eps
    y = y * ln_g + ln_b

    xo_ref[...] = y.reshape(Bb, T, D).astype(xo_ref.dtype)


def _pick_block_b(batch, target=8):
    """Largest divisor of `batch` <= target that still leaves >= 2 grid steps
    (so both v7x TensorCores get work via the 'parallel' batch axis)."""
    best = 1
    for cand in range(1, min(batch, target) + 1):
        if batch % cand == 0 and (batch // cand >= 2 or batch == 1):
            best = cand
    return best


def _vmem_limit_bytes():
    # generation-aware cap: ~75% of physical VMEM, never above 96 MiB, so v7x
    # (64 MiB / TC) keeps compiler headroom while v5e / v6e (128 MiB) get a big budget.
    try:
        cap = int(pltpu.get_tpu_info().vmem_capacity_bytes)
        return min((cap * 3) // 4, 96 * 1024 * 1024)
    except Exception:
        return 48 * 1024 * 1024


def transformer_encoder_layer(x, src_mask, edge_fea, params, *,
                              num_heads, causality, count, block_b=None):
    """count and causality are static Python values (baked into the kernel)."""
    B, T, D = x.shape
    assert D % num_heads == 0
    dh = D // num_heads
    (wg, bg, wq, bq, wk, bk, wv, bv, wo, bo, w1, b1, w2, b2, ln_g, ln_b) = params
    dff = w1.shape[-1]

    f32, bf16 = jnp.float32, jnp.bfloat16
    flat = lambda v: jnp.asarray(v, f32).reshape(-1)

    # ---- offline weight prep: fused QKV (scale folded into the Q columns), bf16 matmul weights
    scale = 1.0 / float(dh) ** 0.5
    wqkv = jnp.concatenate(
        [jnp.asarray(wq, f32) * scale, jnp.asarray(wk, f32), jnp.asarray(wv, f32)],
        axis=1).astype(bf16)                                           # (D, 3D)
    bqkv = jnp.concatenate([flat(bq) * scale, flat(bk), flat(bv)])     # (3D,)
    wo3 = jnp.asarray(wo, f32).reshape(num_heads, dh, D).astype(bf16)  # (H, dh, D)
    wg_b = jnp.asarray(wg, f32).astype(bf16)
    w1_b = jnp.asarray(w1, f32).astype(bf16)
    w2_b = jnp.asarray(w2, f32).astype(bf16)

    # ---- pack every bias / LayerNorm vector into one f32 slab (one input instead of nine)
    width = max(3 * D, dff, D)
    rows = [flat(bg), bqkv, flat(bo), flat(b1), flat(b2), flat(ln_g), flat(ln_b)]
    slab = jnp.zeros((len(rows), width), f32)
    for i, r in enumerate(rows):
        slab = slab.at[i, :r.shape[0]].set(r)

    # ---- data prep: mask in both broadcast layouts; edge (the O(T^2) input) in bf16
    mask_q = src_mask.astype(f32).reshape(B, T, 1)   # 1.0 = pad, per-query/row view
    mask_k = src_mask.astype(f32).reshape(B, 1, T)   # 1.0 = pad, per-key view
    edge_b = edge_fea.astype(bf16)

    if block_b is None:
        block_b = _pick_block_b(B)
    assert B % block_b == 0
    n_blocks = B // block_b

    kernel = functools.partial(
        _encoder_layer_kernel,
        num_heads=num_heads, causal=bool(causality), use_gcn=(count > 0))

    vmem_limit = _vmem_limit_bytes()

    def _run(single_buffer_weights):
        def _wspec(shape):
            n = len(shape)
            if single_buffer_weights:
                # constant index_map -> no need to double-buffer these blocks
                return pl.BlockSpec(shape, lambda b, _n=n: (0,) * _n,
                                    pipeline_mode=pl.Buffered(1))
            return pl.BlockSpec(shape, lambda b, _n=n: (0,) * _n)

        in_specs = [
            pl.BlockSpec((block_b, T, 1), lambda b: (b, 0, 0)),   # mask_q
            pl.BlockSpec((block_b, 1, T), lambda b: (b, 0, 0)),   # mask_k
            pl.BlockSpec((block_b, T, T), lambda b: (b, 0, 0)),   # edge (bf16)
            pl.BlockSpec((block_b, T, D), lambda b: (b, 0, 0)),   # x
            _wspec(wg_b.shape), _wspec(wqkv.shape), _wspec(wo3.shape),
            _wspec(w1_b.shape), _wspec(w2_b.shape), _wspec(slab.shape),
        ]
        # TODO(synk): if production D < 128, present a lane-dense (block_b, T*D) output
        # and reshape in the wrapper (skipped here; D >= 128 expected in production).
        out = pl.pallas_call(
            kernel,
            out_shape=jax.ShapeDtypeStruct((B, T, D), x.dtype),
            grid=(n_blocks,),
            in_specs=in_specs,
            out_specs=pl.BlockSpec((block_b, T, D), lambda b: (b, 0, 0)),
            compiler_params=pltpu.CompilerParams(
                dimension_semantics=("parallel",),
                vmem_limit_bytes=vmem_limit),
        )(mask_q, mask_k, edge_b, x, wg_b, wqkv, wo3, w1_b, w2_b, slab)
        return jax.block_until_ready(out)

    try:
        x_out = _run(single_buffer_weights=True)
    except Exception:
        # pipeline_mode=pl.Buffered(1) not supported on this jax version -> default buffering
        x_out = _run(single_buffer_weights=False)

    # edge_fea is returned unchanged (GCN passthrough, see TODO in kernel)
    return x_out, edge_fea


if __name__ == "__main__":
    B, T, D, H, DFF = 2, 8, 32, 4, 64

    key = jax.random.PRNGKey(0)
    ks = jax.random.split(key, 12)

    x = jax.random.normal(ks[0], (B, T, D), jnp.float32)
    edge_fea = 0.1 * jax.random.normal(ks[1], (B, T, T), jnp.float32)
    # padding mask: True = pad.  Batch 0 has the last 2 positions padded.
    src_mask = jnp.array([[False] * 6 + [True] * 2,
                          [False] * 8], dtype=jnp.bool_)

    def w(k, shape, s=0.05):
        return s * jax.random.normal(k, shape, jnp.float32)

    z = lambda n: jnp.zeros((1, n), jnp.float32)
    params = [
        w(ks[2], (D, D)), z(D),                    # GCN:  Wg, bg
        w(ks[3], (D, D)), z(D),                    # attn: Wq, bq
        w(ks[4], (D, D)), z(D),                    #       Wk, bk
        w(ks[5], (D, D)), z(D),                    #       Wv, bv
        w(ks[6], (D, D)), z(D),                    #       Wo, bo
        w(ks[7], (D, DFF)), z(DFF),                # FFN:  W1, b1
        w(ks[8], (DFF, D)), z(D),                  #       W2, b2
        jnp.ones((1, D), jnp.float32), z(D),       # LayerNorm gamma, beta
    ]

    x_out, edge_out = transformer_encoder_layer(
        x, src_mask, edge_fea, params, num_heads=H, causality=False, count=1)
    jax.block_until_ready((x_out, edge_out))
    assert x_out.shape == (B, T, D)
    print("KERNEL_OK")
</pallas_src>

<mosaic_0001>
module attributes {stable_mosaic.version = 11 : i64} {
  func.func @_encoder_layer_kernel(%arg0: i32, %arg1: memref<1x8x1xf32, #tpu.memory_space<vmem>>, %arg2: memref<1x1x8xf32, #tpu.memory_space<vmem>>, %arg3: memref<1x8x8xbf16, #tpu.memory_space<vmem>>, %arg4: memref<1x8x32xf32, #tpu.memory_space<vmem>>, %arg5: memref<32x32xbf16, #tpu.memory_space<vmem>>, %arg6: memref<32x96xbf16, #tpu.memory_space<vmem>>, %arg7: memref<4x8x32xbf16, #tpu.memory_space<vmem>>, %arg8: memref<32x64xbf16, #tpu.memory_space<vmem>>, %arg9: memref<64x32xbf16, #tpu.memory_space<vmem>>, %arg10: memref<7x96xf32, #tpu.memory_space<vmem>>, %arg11: memref<1x8x32xf32, #tpu.memory_space<vmem>>) attributes {dimension_semantics = [#tpu.dimension_semantics<parallel>], iteration_bounds = array<i64: 2>, scalar_prefetch = 0 : i64, scratch_operands = 0 : i64, tpu.core_type = #tpu.core_type<tc>, window_params = [{transform_indices = @transform_0, window_bounds = array<i64: 1, 8, 1>}, {transform_indices = @transform_1, window_bounds = array<i64: 1, 1, 8>}, {transform_indices = @transform_2, window_bounds = array<i64: 1, 8, 8>}, {transform_indices = @transform_3, window_bounds = array<i64: 1, 8, 32>}, {pipeline_mode = #tpu.pipeline_mode<synchronous>, transform_indices = @transform_4, window_bounds = array<i64: 32, 32>}, {pipeline_mode = #tpu.pipeline_mode<synchronous>, transform_indices = @transform_5, window_bounds = array<i64: 32, 96>}, {pipeline_mode = #tpu.pipeline_mode<synchronous>, transform_indices = @transform_6, window_bounds = array<i64: 4, 8, 32>}, {pipeline_mode = #tpu.pipeline_mode<synchronous>, transform_indices = @transform_7, window_bounds = array<i64: 32, 64>}, {pipeline_mode = #tpu.pipeline_mode<synchronous>, transform_indices = @transform_8, window_bounds = array<i64: 64, 32>}, {pipeline_mode = #tpu.pipeline_mode<synchronous>, transform_indices = @transform_9, window_bounds = array<i64: 7, 96>}, {transform_indices = @transform_10, window_bounds = array<i64: 1, 8, 32>}]} {
    %c0 = arith.constant 0 : index
    %c0_0 = arith.constant 0 : index
    %0 = vector.load %arg10[%c0, %c0_0] : memref<7x96xf32, #tpu.memory_space<vmem>>, vector<1x32xf32>
    %c1 = arith.constant 1 : index
    %c0_1 = arith.constant 0 : index
    %1 = vector.load %arg10[%c1, %c0_1] : memref<7x96xf32, #tpu.memory_space<vmem>>, vector<1x96xf32>
    %c2 = arith.constant 2 : index
    %c0_2 = arith.constant 0 : index
    %2 = vector.load %arg10[%c2, %c0_2] : memref<7x96xf32, #tpu.memory_space<vmem>>, vector<1x32xf32>
    %c3 = arith.constant 3 : index
    %c0_3 = arith.constant 0 : index
    %3 = vector.load %arg10[%c3, %c0_3] : memref<7x96xf32, #tpu.memory_space<vmem>>, vector<1x64xf32>
    %c4 = arith.constant 4 : index
    %c0_4 = arith.constant 0 : index
    %4 = vector.load %arg10[%c4, %c0_4] : memref<7x96xf32, #tpu.memory_space<vmem>>, vector<1x32xf32>
    %c5 = arith.constant 5 : index
    %c0_5 = arith.constant 0 : index
    %5 = vector.load %arg10[%c5, %c0_5] : memref<7x96xf32, #tpu.memory_space<vmem>>, vector<1x32xf32>
    %c6 = arith.constant 6 : index
    %c0_6 = arith.constant 0 : index
    %6 = vector.load %arg10[%c6, %c0_6] : memref<7x96xf32, #tpu.memory_space<vmem>>, vector<1x32xf32>
    %c0_7 = arith.constant 0 : index
    %c0_8 = arith.constant 0 : index
    %c0_9 = arith.constant 0 : index
    %7 = vector.load %arg4[%c0_7, %c0_8, %c0_9] : memref<1x8x32xf32, #tpu.memory_space<vmem>>, vector<1x8x32xf32>
    %c0_10 = arith.constant 0 : index
    %c0_11 = arith.constant 0 : index
    %c0_12 = arith.constant 0 : index
    %8 = vector.load %arg1[%c0_10, %c0_11, %c0_12] : memref<1x8x1xf32, #tpu.memory_space<vmem>>, vector<1x8x1xf32>
    %cst = arith.constant 1.000000e+00 : f32
    %9 = vector.broadcast %cst : f32 to vector<1x8x1xf32>
    %10 = arith.subf %9, %8 : vector<1x8x1xf32>
    %c0_13 = arith.constant 0 : index
    %c0_14 = arith.constant 0 : index
    %c0_15 = arith.constant 0 : index
    %11 = vector.load %arg2[%c0_13, %c0_14, %c0_15] : memref<1x1x8xf32, #tpu.memory_space<vmem>>, vector<1x1x8xf32>
    %cst_16 = arith.constant dense<0.000000e+00> : vector<1x1xf32>
    %12 = vector.multi_reduction <add>, %10, %cst_16 [1] : vector<1x8x1xf32> to vector<1x1xf32>
    %13 = vector.shape_cast %12 : vector<1x1xf32> to vector<1x1x1xf32>
    %cst_17 = arith.constant 1.000000e+00 : f32
    %14 = vector.broadcast %cst_17 : f32 to vector<1x1x1xf32>
    %15 = arith.maximumf %13, %14 : vector<1x1x1xf32>
    %cst_18 = arith.constant 1.000000e+00 : f32
    %16 = vector.broadcast %cst_18 : f32 to vector<1x1x1xf32>
    %17 = arith.divf %16, %15 : vector<1x1x1xf32>
    %18 = vector.broadcast %10 : vector<1x8x1xf32> to vector<1x8x32xf32>
    %19 = arith.mulf %7, %18 : vector<1x8x32xf32>
    %cst_19 = arith.constant dense<0.000000e+00> : vector<1x32xf32>
    %20 = vector.multi_reduction <add>, %19, %cst_19 [1] : vector<1x8x32xf32> to vector<1x32xf32>
    %21 = vector.shape_cast %20 : vector<1x32xf32> to vector<1x1x32xf32>
    %22 = vector.broadcast %17 : vector<1x1x1xf32> to vector<1x8x1xf32>
    %23 = arith.mulf %10, %22 : vector<1x8x1xf32>
    %24 = vector.broadcast %23 : vector<1x8x1xf32> to vector<1x8x32xf32>
    %25 = vector.broadcast %21 : vector<1x1x32xf32> to vector<1x8x32xf32>
    %26 = arith.mulf %24, %25 : vector<1x8x32xf32>
    %27 = vector.shape_cast %26 : vector<1x8x32xf32> to vector<8x32xf32>
    %28 = arith.truncf %27 : vector<8x32xf32> to vector<8x32xbf16>
    %c0_20 = arith.constant 0 : index
    %c0_21 = arith.constant 0 : index
    %29 = vector.load %arg5[%c0_20, %c0_21] : memref<32x32xbf16, #tpu.memory_space<vmem>>, vector<32x32xbf16>
    %cst_22 = arith.constant dense<0.000000e+00> : vector<8x32xf32>
    %30 = tpu.matmul %28, %29, %cst_22 {dimension_numbers = #tpu.dot_dimension_numbers<[1], [0], [0], [1], [0, 0, 1, 1], [], []>} : vector<8x32xbf16>, vector<32x32xbf16>, vector<8x32xf32> -> vector<8x32xf32>
    %31 = vector.broadcast %0 : vector<1x32xf32> to vector<8x32xf32>
    %32 = arith.addf %30, %31 : vector<8x32xf32>
    %cst_23 = arith.constant 0.000000e+00 : f32
    %33 = vector.broadcast %cst_23 : f32 to vector<8x32xf32>
    %34 = arith.maximumf %32, %33 : vector<8x32xf32>
    %35 = arith.truncf %34 : vector<8x32xf32> to vector<8x32xbf16>
    %c0_24 = arith.constant 0 : index
    %c0_25 = arith.constant 0 : index
    %36 = vector.load %arg6[%c0_24, %c0_25] : memref<32x96xbf16, #tpu.memory_space<vmem>>, vector<32x96xbf16>
    %cst_26 = arith.constant dense<0.000000e+00> : vector<8x96xf32>
    %37 = tpu.matmul %35, %36, %cst_26 {dimension_numbers = #tpu.dot_dimension_numbers<[1], [0], [0], [1], [0, 0, 1, 1], [], []>} : vector<8x32xbf16>, vector<32x96xbf16>, vector<8x96xf32> -> vector<8x96xf32>
    %38 = vector.broadcast %1 : vector<1x96xf32> to vector<8x96xf32>
    %39 = arith.addf %37, %38 : vector<8x96xf32>
    %40 = vector.extract_strided_slice %39 {offsets = [0, 0], sizes = [8, 8], strides = [1, 1]} : vector<8x96xf32> to vector<8x8xf32>
    %41 = vector.shape_cast %40 : vector<8x8xf32> to vector<1x8x8xf32>
    %42 = vector.extract_strided_slice %39 {offsets = [0, 8], sizes = [8, 8], strides = [1, 1]} : vector<8x96xf32> to vector<8x8xf32>
    %43 = vector.shape_cast %42 : vector<8x8xf32> to vector<1x8x8xf32>
    %44 = vector.extract_strided_slice %39 {offsets = [0, 16], sizes = [8, 8], strides = [1, 1]} : vector<8x96xf32> to vector<8x8xf32>
    %45 = vector.shape_cast %44 : vector<8x8xf32> to vector<1x8x8xf32>
    %46 = vector.extract_strided_slice %39 {offsets = [0, 24], sizes = [8, 8], strides = [1, 1]} : vector<8x96xf32> to vector<8x8xf32>
    %47 = vector.shape_cast %46 : vector<8x8xf32> to vector<1x8x8xf32>
    %48 = vector.shape_cast %41 : vector<1x8x8xf32> to vector<1x1x8x8xf32>
    %49 = vector.shape_cast %43 : vector<1x8x8xf32> to vector<1x1x8x8xf32>
    %50 = vector.shape_cast %45 : vector<1x8x8xf32> to vector<1x1x8x8xf32>
    %51 = vector.shape_cast %47 : vector<1x8x8xf32> to vector<1x1x8x8xf32>
    %52 = tpu.concatenate %48, %49, %50, %51 in 0 : vector<1x1x8x8xf32>, vector<1x1x8x8xf32>, vector<1x1x8x8xf32>, vector<1x1x8x8xf32> -> vector<4x1x8x8xf32>
    %53 = arith.truncf %52 : vector<4x1x8x8xf32> to vector<4x1x8x8xbf16>
    %54 = vector.shape_cast %53 : vector<4x1x8x8xbf16> to vector<4x8x8xbf16>
    %55 = vector.extract_strided_slice %39 {offsets = [0, 32], sizes = [8, 8], strides = [1, 1]} : vector<8x96xf32> to vector<8x8xf32>
    %56 = vector.shape_cast %55 : vector<8x8xf32> to vector<1x8x8xf32>
    %57 = vector.extract_strided_slice %39 {offsets = [0, 40], sizes = [8, 8], strides = [1, 1]} : vector<8x96xf32> to vector<8x8xf32>
    %58 = vector.shape_cast %57 : vector<8x8xf32> to vector<1x8x8xf32>
    %59 = vector.extract_strided_slice %39 {offsets = [0, 48], sizes = [8, 8], strides = [1, 1]} : vector<8x96xf32> to vector<8x8xf32>
    %60 = vector.shape_cast %59 : vector<8x8xf32> to vector<1x8x8xf32>
    %61 = vector.extract_strided_slice %39 {offsets = [0, 56], sizes = [8, 8], strides = [1, 1]} : vector<8x96xf32> to vector<8x8xf32>
    %62 = vector.shape_cast %61 : vector<8x8xf32> to vector<1x8x8xf32>
    %63 = vector.shape_cast %56 : vector<1x8x8xf32> to vector<1x1x8x8xf32>
    %64 = vector.shape_cast %58 : vector<1x8x8xf32> to vector<1x1x8x8xf32>
    %65 = vector.shape_cast %60 : vector<1x8x8xf32> to vector<1x1x8x8xf32>
    %66 = vector.shape_cast %62 : vector<1x8x8xf32> to vector<1x1x8x8xf32>
    %67 = tpu.concatenate %63, %64, %65, %66 in 0 : vector<1x1x8x8xf32>, vector<1x1x8x8xf32>, vector<1x1x8x8xf32>, vector<1x1x8x8xf32> -> vector<4x1x8x8xf32>
    %68 = arith.truncf %67 : vector<4x1x8x8xf32> to vector<4x1x8x8xbf16>
    %69 = vector.shape_cast %68 : vector<4x1x8x8xbf16> to vector<4x8x8xbf16>
    %70 = vector.extract_strided_slice %39 {offsets = [0, 64], sizes = [8, 8], strides = [1, 1]} : vector<8x96xf32> to vector<8x8xf32>
    %71 = vector.shape_cast %70 : vector<8x8xf32> to vector<1x8x8xf32>
    %72 = vector.extract_strided_slice %39 {offsets = [0, 72], sizes = [8, 8], strides = [1, 1]} : vector<8x96xf32> to vector<8x8xf32>
    %73 = vector.shape_cast %72 : vector<8x8xf32> to vector<1x8x8xf32>
    %74 = vector.extract_strided_slice %39 {offsets = [0, 80], sizes = [8, 8], strides = [1, 1]} : vector<8x96xf32> to vector<8x8xf32>
    %75 = vector.shape_cast %74 : vector<8x8xf32> to vector<1x8x8xf32>
    %76 = vector.extract_strided_slice %39 {offsets = [0, 88], sizes = [8, 8], strides = [1, 1]} : vector<8x96xf32> to vector<8x8xf32>
    %77 = vector.shape_cast %76 : vector<8x8xf32> to vector<1x8x8xf32>
    %78 = vector.shape_cast %71 : vector<1x8x8xf32> to vector<1x1x8x8xf32>
    %79 = vector.shape_cast %73 : vector<1x8x8xf32> to vector<1x1x8x8xf32>
    %80 = vector.shape_cast %75 : vector<1x8x8xf32> to vector<1x1x8x8xf32>
    %81 = vector.shape_cast %77 : vector<1x8x8xf32> to vector<1x1x8x8xf32>
    %82 = tpu.concatenate %78, %79, %80, %81 in 0 : vector<1x1x8x8xf32>, vector<1x1x8x8xf32>, vector<1x1x8x8xf32>, vector<1x1x8x8xf32> -> vector<4x1x8x8xf32>
    %83 = arith.truncf %82 : vector<4x1x8x8xf32> to vector<4x1x8x8xbf16>
    %84 = vector.shape_cast %83 : vector<4x1x8x8xbf16> to vector<4x8x8xbf16>
    %c0_27 = arith.constant 0 : index
    %c0_28 = arith.constant 0 : index
    %c0_29 = arith.constant 0 : index
    %85 = vector.load %arg3[%c0_27, %c0_28, %c0_29] : memref<1x8x8xbf16, #tpu.memory_space<vmem>>, vector<1x8x8xbf16>
    %86 = arith.extf %85 : vector<1x8x8xbf16> to vector<1x8x8xf32>
    %cst_30 = arith.constant -1.000000e+09 : f32
    %87 = vector.broadcast %cst_30 : f32 to vector<1x1x8xf32>
    %88 = arith.mulf %11, %87 : vector<1x1x8xf32>
    %89 = vector.broadcast %88 : vector<1x1x8xf32> to vector<1x8x8xf32>
    %90 = arith.addf %86, %89 : vector<1x8x8xf32>
    "tpu.trace_start"() <{level = 10 : i32, message = "bqd,bkd->bqk"}> : () -> ()
    %cst_31 = arith.constant dense<0.000000e+00> : vector<4x8x8xf32>
    %91 = tpu.matmul %54, %69, %cst_31 {dimension_numbers = #tpu.dot_dimension_numbers<[2], [2], [1], [1], [0, 0, 0, 1, 1, 1], [0], [0]>} : vector<4x8x8xbf16>, vector<4x8x8xbf16>, vector<4x8x8xf32> -> vector<4x8x8xf32>
    "tpu.trace_stop"() : () -> ()
    %92 = vector.shape_cast %91 : vector<4x8x8xf32> to vector<4x1x8x8xf32>
    %93 = vector.shape_cast %90 : vector<1x8x8xf32> to vector<1x1x8x8xf32>
    %94 = vector.broadcast %93 : vector<1x1x8x8xf32> to vector<4x1x8x8xf32>
    %95 = arith.addf %92, %94 : vector<4x1x8x8xf32>
    %96 = vector.shape_cast %95 : vector<4x1x8x8xf32> to vector<4x8x8xf32>
    %cst_32 = arith.constant dense<0xFF800000> : vector<4x8xf32>
    %97 = vector.multi_reduction <maximumf>, %96, %cst_32 [2] : vector<4x8x8xf32> to vector<4x8xf32>
    %98 = vector.shape_cast %97 : vector<4x8xf32> to vector<4x8x1xf32>
    %99 = vector.broadcast %98 : vector<4x8x1xf32> to vector<4x8x8xf32>
    %100 = arith.subf %96, %99 : vector<4x8x8xf32>
    %101 = math.exp %100 : vector<4x8x8xf32>
    %cst_33 = arith.constant dense<0.000000e+00> : vector<4x8xf32>
    %102 = vector.multi_reduction <add>, %101, %cst_33 [2] : vector<4x8x8xf32> to vector<4x8xf32>
    %103 = vector.shape_cast %102 : vector<4x8xf32> to vector<4x8x1xf32>
    %104 = tpu.reciprocal %103 {approx = true} : vector<4x8x1xf32> -> vector<4x8x1xf32>
    %105 = vector.broadcast %104 : vector<4x8x1xf32> to vector<4x8x8xf32>
    %106 = arith.mulf %101, %105 : vector<4x8x8xf32>
    %107 = arith.truncf %106 : vector<4x8x8xf32> to vector<4x8x8xbf16>
    "tpu.trace_start"() <{level = 10 : i32, message = "bqk,bkd->bqd"}> : () -> ()
    %cst_34 = arith.constant dense<0.000000e+00> : vector<4x8x8xf32>
    %108 = tpu.matmul %107, %84, %cst_34 {dimension_numbers = #tpu.dot_dimension_numbers<[2], [1], [1], [2], [0, 0, 0, 1, 1, 2], [0], [0]>} : vector<4x8x8xbf16>, vector<4x8x8xbf16>, vector<4x8x8xf32> -> vector<4x8x8xf32>
    "tpu.trace_stop"() : () -> ()
    %109 = arith.truncf %108 : vector<4x8x8xf32> to vector<4x8x8xbf16>
    %c0_35 = arith.constant 0 : index
    %c0_36 = arith.constant 0 : index
    %c0_37 = arith.constant 0 : index
    %110 = vector.load %arg7[%c0_35, %c0_36, %c0_37] : memref<4x8x32xbf16, #tpu.memory_space<vmem>>, vector<4x8x32xbf16>
    "tpu.trace_start"() <{level = 10 : i32, message = "hmd,hdn->hmn"}> : () -> ()
    %cst_38 = arith.constant dense<0.000000e+00> : vector<4x8x32xf32>
    %111 = tpu.matmul %109, %110, %cst_38 {dimension_numbers = #tpu.dot_dimension_numbers<[2], [1], [1], [2], [0, 0, 0, 1, 1, 2], [0], [0]>} : vector<4x8x8xbf16>, vector<4x8x32xbf16>, vector<4x8x32xf32> -> vector<4x8x32xf32>
    "tpu.trace_stop"() : () -> ()
    %cst_39 = arith.constant dense<0.000000e+00> : vector<8x32xf32>
    %112 = vector.multi_reduction <add>, %111, %cst_39 [0] : vector<4x8x32xf32> to vector<8x32xf32>
    %113 = vector.broadcast %2 : vector<1x32xf32> to vector<8x32xf32>
    %114 = arith.addf %112, %113 : vector<8x32xf32>
    %115 = arith.addf %114, %34 : vector<8x32xf32>
    %116 = arith.truncf %115 : vector<8x32xf32> to vector<8x32xbf16>
    %c0_40 = arith.constant 0 : index
    %c0_41 = arith.constant 0 : index
    %117 = vector.load %arg8[%c0_40, %c0_41] : memref<32x64xbf16, #tpu.memory_space<vmem>>, vector<32x64xbf16>
    %cst_42 = arith.constant dense<0.000000e+00> : vector<8x64xf32>
    %118 = tpu.matmul %116, %117, %cst_42 {dimension_numbers = #tpu.dot_dimension_numbers<[1], [0], [0], [1], [0, 0, 1, 1], [], []>} : vector<8x32xbf16>, vector<32x64xbf16>, vector<8x64xf32> -> vector<8x64xf32>
    %119 = vector.broadcast %3 : vector<1x64xf32> to vector<8x64xf32>
    %120 = arith.addf %118, %119 : vector<8x64xf32>
    %cst_43 = arith.constant 0.000000e+00 : f32
    %121 = vector.broadcast %cst_43 : f32 to vector<8x64xf32>
    %122 = arith.maximumf %120, %121 : vector<8x64xf32>
    %123 = arith.truncf %122 : vector<8x64xf32> to vector<8x64xbf16>
    %c0_44 = arith.constant 0 : index
    %c0_45 = arith.constant 0 : index
    %124 = vector.load %arg9[%c0_44, %c0_45] : memref<64x32xbf16, #tpu.memory_space<vmem>>, vector<64x32xbf16>
    %cst_46 = arith.constant dense<0.000000e+00> : vector<8x32xf32>
    %125 = tpu.matmul %123, %124, %cst_46 {dimension_numbers = #tpu.dot_dimension_numbers<[1], [0], [0], [1], [0, 0, 1, 1], [], []>} : vector<8x64xbf16>, vector<64x32xbf16>, vector<8x32xf32> -> vector<8x32xf32>
    %126 = vector.broadcast %4 : vector<1x32xf32> to vector<8x32xf32>
    %127 = arith.addf %125, %126 : vector<8x32xf32>
    %128 = arith.addf %115, %127 : vector<8x32xf32>
    %cst_47 = arith.constant dense<0.000000e+00> : vector<8xf32>
    %129 = vector.multi_reduction <add>, %128, %cst_47 [1] : vector<8x32xf32> to vector<8xf32>
    %130 = vector.shape_cast %129 : vector<8xf32> to vector<8x1xf32>
    %cst_48 = arith.constant 3.200000e+01 : f32
    %131 = vector.broadcast %cst_48 : f32 to vector<8x1xf32>
    %132 = arith.divf %130, %131 : vector<8x1xf32>
    %133 = vector.broadcast %132 : vector<8x1xf32> to vector<8x32xf32>
    %134 = arith.subf %128, %133 : vector<8x32xf32>
    %135 = arith.mulf %134, %134 : vector<8x32xf32>
    %cst_49 = arith.constant dense<0.000000e+00> : vector<8xf32>
    %136 = vector.multi_reduction <add>, %135, %cst_49 [1] : vector<8x32xf32> to vector<8xf32>
    %137 = vector.shape_cast %136 : vector<8xf32> to vector<8x1xf32>
    %cst_50 = arith.constant 3.200000e+01 : f32
    %138 = vector.broadcast %cst_50 : f32 to vector<8x1xf32>
    %139 = arith.divf %137, %138 : vector<8x1xf32>
    %140 = vector.broadcast %132 : vector<8x1xf32> to vector<8x32xf32>
    %141 = arith.subf %128, %140 : vector<8x32xf32>
    %cst_51 = arith.constant 9.99999974E-6 : f32
    %142 = vector.broadcast %cst_51 : f32 to vector<8x1xf32>
    %143 = arith.addf %139, %142 : vector<8x1xf32>
    %144 = math.rsqrt %143 : vector<8x1xf32>
    %145 = vector.broadcast %144 : vector<8x1xf32> to vector<8x32xf32>
    %146 = arith.mulf %141, %145 : vector<8x32xf32>
    %147 = vector.broadcast %5 : vector<1x32xf32> to vector<8x32xf32>
    %148 = arith.mulf %146, %147 : vector<8x32xf32>
    %149 = vector.broadcast %6 : vector<1x32xf32> to vector<8x32xf32>
    %150 = arith.addf %148, %149 : vector<8x32xf32>
    %151 = vector.shape_cast %150 : vector<8x32xf32> to vector<1x8x32xf32>
    %c0_52 = arith.constant 0 : index
    %c0_53 = arith.constant 0 : index
    %c0_54 = arith.constant 0 : index
    %152 = vector.load %arg11[%c0_52, %c0_53, %c0_54] : memref<1x8x32xf32, #tpu.memory_space<vmem>>, vector<1x8x32xf32>
    tpu.vector_store %arg11[%c0_52, %c0_53, %c0_54], %151 {strides = array<i32>} : memref<1x8x32xf32, #tpu.memory_space<vmem>>, vector<1x8x32xf32>,
    return
  }
  func.func @transform_0(%arg0: i32) -> (i32, i32, i32) {
    %c0_i32 = arith.constant 0 : i32
    %c0_i32_0 = arith.constant 0 : i32
    %c0_i32_1 = arith.constant 0 : i32
    return %arg0, %c0_i32, %c0_i32_0 : i32, i32, i32
  }
  func.func @transform_1(%arg0: i32) -> (i32, i32, i32) {
    %c0_i32 = arith.constant 0 : i32
    %c0_i32_0 = arith.constant 0 : i32
    %c0_i32_1 = arith.constant 0 : i32
    return %arg0, %c0_i32, %c0_i32_0 : i32, i32, i32
  }
  func.func @transform_2(%arg0: i32) -> (i32, i32, i32) {
    %c0_i32 = arith.constant 0 : i32
    %c0_i32_0 = arith.constant 0 : i32
    %c0_i32_1 = arith.constant 0 : i32
    return %arg0, %c0_i32, %c0_i32_0 : i32, i32, i32
  }
  func.func @transform_3(%arg0: i32) -> (i32, i32, i32) {
    %c0_i32 = arith.constant 0 : i32
    %c0_i32_0 = arith.constant 0 : i32
    %c0_i32_1 = arith.constant 0 : i32
    return %arg0, %c0_i32, %c0_i32_0 : i32, i32, i32
  }
  func.func @transform_4(%arg0: i32) -> (i32, i32) {
    %c0_i32 = arith.constant 0 : i32
    %c0_i32_0 = arith.constant 0 : i32
    %c0_i32_1 = arith.constant 0 : i32
    return %c0_i32, %c0_i32_0 : i32, i32
  }
  func.func @transform_5(%arg0: i32) -> (i32, i32) {
    %c0_i32 = arith.constant 0 : i32
    %c0_i32_0 = arith.constant 0 : i32
    %c0_i32_1 = arith.constant 0 : i32
    return %c0_i32, %c0_i32_0 : i32, i32
  }
  func.func @transform_6(%arg0: i32) -> (i32, i32, i32) {
    %c0_i32 = arith.constant 0 : i32
    %c0_i32_0 = arith.constant 0 : i32
    %c0_i32_1 = arith.constant 0 : i32
    %c0_i32_2 = arith.constant 0 : i32
    return %c0_i32, %c0_i32_0, %c0_i32_1 : i32, i32, i32
  }
  func.func @transform_7(%arg0: i32) -> (i32, i32) {
    %c0_i32 = arith.constant 0 : i32
    %c0_i32_0 = arith.constant 0 : i32
    %c0_i32_1 = arith.constant 0 : i32
    return %c0_i32, %c0_i32_0 : i32, i32
  }
  func.func @transform_8(%arg0: i32) -> (i32, i32) {
    %c0_i32 = arith.constant 0 : i32
    %c0_i32_0 = arith.constant 0 : i32
    %c0_i32_1 = arith.constant 0 : i32
    return %c0_i32, %c0_i32_0 : i32, i32
  }
  func.func @transform_9(%arg0: i32) -> (i32, i32) {
    %c0_i32 = arith.constant 0 : i32
    %c0_i32_0 = arith.constant 0 : i32
    %c0_i32_1 = arith.constant 0 : i32
    return %c0_i32, %c0_i32_0 : i32, i32
  }
  func.func @transform_10(%arg0: i32) -> (i32, i32, i32) {
    %c0_i32 = arith.constant 0 : i32
    %c0_i32_0 = arith.constant 0 : i32
    %c0_i32_1 = arith.constant 0 : i32
    return %arg0, %c0_i32, %c0_i32_0 : i32, i32, i32
  }
}

module attributes {stable_mosaic.version = 11 : i64} {
  func.func @_encoder_layer_kernel(%arg0: i32, %arg1: memref<1x8x1xf32, #tpu.memory_space<vmem>>, %arg2: memref<1x1x8xf32, #tpu.memory_space<vmem>>, %arg3: memref<1x8x8xbf16, #tpu.memory_space<vmem>>, %arg4: memref<1x8x32xf32, #tpu.memory_space<vmem>>, %arg5: memref<32x32xbf16, #tpu.memory_space<vmem>>, %arg6: memref<32x96xbf16, #tpu.memory_space<vmem>>, %arg7: memref<4x8x32xbf16, #tpu.memory_space<vmem>>, %arg8: memref<32x64xbf16, #tpu.memory_space<vmem>>, %arg9: memref<64x32xbf16, #tpu.memory_space<vmem>>, %arg10: memref<7x96xf32, #tpu.memory_space<vmem>>, %arg11: memref<1x8x32xf32, #tpu.memory_space<vmem>>) attributes {dimension_semantics = [#tpu.dimension_semantics<parallel>], iteration_bounds = array<i64: 2>, scalar_prefetch = 0 : i64, scratch_operands = 0 : i64, tpu.core_type = #tpu.core_type<tc>, window_params = [{transform_indices = @transform_0, window_bounds = array<i64: 1, 8, 1>}, {transform_indices = @transform_1, window_bounds = array<i64: 1, 1, 8>}, {transform_indices = @transform_2, window_bounds = array<i64: 1, 8, 8>}, {transform_indices = @transform_3, window_bounds = array<i64: 1, 8, 32>}, {pipeline_mode = #tpu.pipeline_mode<synchronous>, transform_indices = @transform_4, window_bounds = array<i64: 32, 32>}, {pipeline_mode = #tpu.pipeline_mode<synchronous>, transform_indices = @transform_5, window_bounds = array<i64: 32, 96>}, {pipeline_mode = #tpu.pipeline_mode<synchronous>, transform_indices = @transform_6, window_bounds = array<i64: 4, 8, 32>}, {pipeline_mode = #tpu.pipeline_mode<synchronous>, transform_indices = @transform_7, window_bounds = array<i64: 32, 64>}, {pipeline_mode = #tpu.pipeline_mode<synchronous>, transform_indices = @transform_8, window_bounds = array<i64: 64, 32>}, {pipeline_mode = #tpu.pipeline_mode<synchronous>, transform_indices = @transform_9, window_bounds = array<i64: 7, 96>}, {transform_indices = @transform_10, window_bounds = array<i64: 1, 8, 32>}]} {
    %c0 = arith.constant 0 : index
    %c0_0 = arith.constant 0 : index
    %0 = vector.load %arg10[%c0, %c0_0] : memref<7x96xf32, #tpu.memory_space<vmem>>, vector<1x32xf32>
    %c1 = arith.constant 1 : index
    %c0_1 = arith.constant 0 : index
    %1 = vector.load %arg10[%c1, %c0_1] : memref<7x96xf32, #tpu.memory_space<vmem>>, vector<1x96xf32>
    %c2 = arith.constant 2 : index
    %c0_2 = arith.constant 0 : index
    %2 = vector.load %arg10[%c2, %c0_2] : memref<7x96xf32, #tpu.memory_space<vmem>>, vector<1x32xf32>
    %c3 = arith.constant 3 : index
    %c0_3 = arith.constant 0 : index
    %3 = vector.load %arg10[%c3, %c0_3] : memref<7x96xf32, #tpu.memory_space<vmem>>, vector<1x64xf32>
    %c4 = arith.constant 4 : index
    %c0_4 = arith.constant 0 : index
    %4 = vector.load %arg10[%c4, %c0_4] : memref<7x96xf32, #tpu.memory_space<vmem>>, vector<1x32xf32>
    %c5 = arith.constant 5 : index
    %c0_5 = arith.constant 0 : index
    %5 = vector.load %arg10[%c5, %c0_5] : memref<7x96xf32, #tpu.memory_space<vmem>>, vector<1x32xf32>
    %c6 = arith.constant 6 : index
    %c0_6 = arith.constant 0 : index
    %6 = vector.load %arg10[%c6, %c0_6] : memref<7x96xf32, #tpu.memory_space<vmem>>, vector<1x32xf32>
    %c0_7 = arith.constant 0 : index
    %c0_8 = arith.constant 0 : index
    %c0_9 = arith.constant 0 : index
    %7 = vector.load %arg4[%c0_7, %c0_8, %c0_9] : memref<1x8x32xf32, #tpu.memory_space<vmem>>, vector<1x8x32xf32>
    %c0_10 = arith.constant 0 : index
    %c0_11 = arith.constant 0 : index
    %c0_12 = arith.constant 0 : index
    %8 = vector.load %arg1[%c0_10, %c0_11, %c0_12] : memref<1x8x1xf32, #tpu.memory_space<vmem>>, vector<1x8x1xf32>
    %cst = arith.constant 1.000000e+00 : f32
    %9 = vector.broadcast %cst : f32 to vector<1x8x1xf32>
    %10 = arith.subf %9, %8 : vector<1x8x1xf32>
    %c0_13 = arith.constant 0 : index
    %c0_14 = arith.constant 0 : index
    %c0_15 = arith.constant 0 : index
    %11 = vector.load %arg2[%c0_13, %c0_14, %c0_15] : memref<1x1x8xf32, #tpu.memory_space<vmem>>, vector<1x1x8xf32>
    %cst_16 = arith.constant dense<0.000000e+00> : vector<1x1xf32>
    %12 = vector.multi_reduction <add>, %10, %cst_16 [1] : vector<1x8x1xf32> to vector<1x1xf32>
    %13 = vector.shape_cast %12 : vector<1x1xf32> to vector<1x1x1xf32>
    %cst_17 = arith.constant 1.000000e+00 : f32
    %14 = vector.broadcast %cst_17 : f32 to vector<1x1x1xf32>
    %15 = arith.maximumf %13, %14 : vector<1x1x1xf32>
    %cst_18 = arith.constant 1.000000e+00 : f32
    %16 = vector.broadcast %cst_18 : f32 to vector<1x1x1xf32>
    %17 = arith.divf %16, %15 : vector<1x1x1xf32>
    %18 = vector.broadcast %10 : vector<1x8x1xf32> to vector<1x8x32xf32>
    %19 = arith.mulf %7, %18 : vector<1x8x32xf32>
    %cst_19 = arith.constant dense<0.000000e+00> : vector<1x32xf32>
    %20 = vector.multi_reduction <add>, %19, %cst_19 [1] : vector<1x8x32xf32> to vector<1x32xf32>
    %21 = vector.shape_cast %20 : vector<1x32xf32> to vector<1x1x32xf32>
    %22 = vector.broadcast %17 : vector<1x1x1xf32> to vector<1x8x1xf32>
    %23 = arith.mulf %10, %22 : vector<1x8x1xf32>
    %24 = vector.broadcast %23 : vector<1x8x1xf32> to vector<1x8x32xf32>
    %25 = vector.broadcast %21 : vector<1x1x32xf32> to vector<1x8x32xf32>
    %26 = arith.mulf %24, %25 : vector<1x8x32xf32>
    %27 = vector.shape_cast %26 : vector<1x8x32xf32> to vector<8x32xf32>
    %28 = arith.truncf %27 : vector<8x32xf32> to vector<8x32xbf16>
    %c0_20 = arith.constant 0 : index
    %c0_21 = arith.constant 0 : index
    %29 = vector.load %arg5[%c0_20, %c0_21] : memref<32x32xbf16, #tpu.memory_space<vmem>>, vector<32x32xbf16>
    %cst_22 = arith.constant dense<0.000000e+00> : vector<8x32xf32>
    %30 = tpu.matmul %28, %29, %cst_22 {dimension_numbers = #tpu.dot_dimension_numbers<[1], [0], [0], [1], [0, 0, 1, 1], [], []>} : vector<8x32xbf16>, vector<32x32xbf16>, vector<8x32xf32> -> vector<8x32xf32>
    %31 = vector.broadcast %0 : vector<1x32xf32> to vector<8x32xf32>
    %32 = arith.addf %30, %31 : vector<8x32xf32>
    %cst_23 = arith.constant 0.000000e+00 : f32
    %33 = vector.broadcast %cst_23 : f32 to vector<8x32xf32>
    %34 = arith.maximumf %32, %33 : vector<8x32xf32>
    %35 = arith.truncf %34 : vector<8x32xf32> to vector<8x32xbf16>
    %c0_24 = arith.constant 0 : index
    %c0_25 = arith.constant 0 : index
    %36 = vector.load %arg6[%c0_24, %c0_25] : memref<32x96xbf16, #tpu.memory_space<vmem>>, vector<32x96xbf16>
    %cst_26 = arith.constant dense<0.000000e+00> : vector<8x96xf32>
    %37 = tpu.matmul %35, %36, %cst_26 {dimension_numbers = #tpu.dot_dimension_numbers<[1], [0], [0], [1], [0, 0, 1, 1], [], []>} : vector<8x32xbf16>, vector<32x96xbf16>, vector<8x96xf32> -> vector<8x96xf32>
    %38 = vector.broadcast %1 : vector<1x96xf32> to vector<8x96xf32>
    %39 = arith.addf %37, %38 : vector<8x96xf32>
    %40 = vector.extract_strided_slice %39 {offsets = [0, 0], sizes = [8, 8], strides = [1, 1]} : vector<8x96xf32> to vector<8x8xf32>
    %41 = vector.shape_cast %40 : vector<8x8xf32> to vector<1x8x8xf32>
    %42 = vector.extract_strided_slice %39 {offsets = [0, 8], sizes = [8, 8], strides = [1, 1]} : vector<8x96xf32> to vector<8x8xf32>
    %43 = vector.shape_cast %42 : vector<8x8xf32> to vector<1x8x8xf32>
    %44 = vector.extract_strided_slice %39 {offsets = [0, 16], sizes = [8, 8], strides = [1, 1]} : vector<8x96xf32> to vector<8x8xf32>
    %45 = vector.shape_cast %44 : vector<8x8xf32> to vector<1x8x8xf32>
    %46 = vector.extract_strided_slice %39 {offsets = [0, 24], sizes = [8, 8], strides = [1, 1]} : vector<8x96xf32> to vector<8x8xf32>
    %47 = vector.shape_cast %46 : vector<8x8xf32> to vector<1x8x8xf32>
    %48 = vector.shape_cast %41 : vector<1x8x8xf32> to vector<1x1x8x8xf32>
    %49 = vector.shape_cast %43 : vector<1x8x8xf32> to vector<1x1x8x8xf32>
    %50 = vector.shape_cast %45 : vector<1x8x8xf32> to vector<1x1x8x8xf32>
    %51 = vector.shape_cast %47 : vector<1x8x8xf32> to vector<1x1x8x8xf32>
    %52 = tpu.concatenate %48, %49, %50, %51 in 0 : vector<1x1x8x8xf32>, vector<1x1x8x8xf32>, vector<1x1x8x8xf32>, vector<1x1x8x8xf32> -> vector<4x1x8x8xf32>
    %53 = arith.truncf %52 : vector<4x1x8x8xf32> to vector<4x1x8x8xbf16>
    %54 = vector.shape_cast %53 : vector<4x1x8x8xbf16> to vector<4x8x8xbf16>
    %55 = vector.extract_strided_slice %39 {offsets = [0, 32], sizes = [8, 8], strides = [1, 1]} : vector<8x96xf32> to vector<8x8xf32>
    %56 = vector.shape_cast %55 : vector<8x8xf32> to vector<1x8x8xf32>
    %57 = vector.extract_strided_slice %39 {offsets = [0, 40], sizes = [8, 8], strides = [1, 1]} : vector<8x96xf32> to vector<8x8xf32>
    %58 = vector.shape_cast %57 : vector<8x8xf32> to vector<1x8x8xf32>
    %59 = vector.extract_strided_slice %39 {offsets = [0, 48], sizes = [8, 8], strides = [1, 1]} : vector<8x96xf32> to vector<8x8xf32>
    %60 = vector.shape_cast %59 : vector<8x8xf32> to vector<1x8x8xf32>
    %61 = vector.extract_strided_slice %39 {offsets = [0, 56], sizes = [8, 8], strides = [1, 1]} : vector<8x96xf32> to vector<8x8xf32>
    %62 = vector.shape_cast %61 : vector<8x8xf32> to vector<1x8x8xf32>
    %63 = vector.shape_cast %56 : vector<1x8x8xf32> to vector<1x1x8x8xf32>
    %64 = vector.shape_cast %58 : vector<1x8x8xf32> to vector<1x1x8x8xf32>
    %65 = vector.shape_cast %60 : vector<1x8x8xf32> to vector<1x1x8x8xf32>
    %66 = vector.shape_cast %62 : vector<1x8x8xf32> to vector<1x1x8x8xf32>
    %67 = tpu.concatenate %63, %64, %65, %66 in 0 : vector<1x1x8x8xf32>, vector<1x1x8x8xf32>, vector<1x1x8x8xf32>, vector<1x1x8x8xf32> -> vector<4x1x8x8xf32>
    %68 = arith.truncf %67 : vector<4x1x8x8xf32> to vector<4x1x8x8xbf16>
    %69 = vector.shape_cast %68 : vector<4x1x8x8xbf16> to vector<4x8x8xbf16>
    %70 = vector.extract_strided_slice %39 {offsets = [0, 64], sizes = [8, 8], strides = [1, 1]} : vector<8x96xf32> to vector<8x8xf32>
    %71 = vector.shape_cast %70 : vector<8x8xf32> to vector<1x8x8xf32>
    %72 = vector.extract_strided_slice %39 {offsets = [0, 72], sizes = [8, 8], strides = [1, 1]} : vector<8x96xf32> to vector<8x8xf32>
    %73 = vector.shape_cast %72 : vector<8x8xf32> to vector<1x8x8xf32>
    %74 = vector.extract_strided_slice %39 {offsets = [0, 80], sizes = [8, 8], strides = [1, 1]} : vector<8x96xf32> to vector<8x8xf32>
    %75 = vector.shape_cast %74 : vector<8x8xf32> to vector<1x8x8xf32>
    %76 = vector.extract_strided_slice %39 {offsets = [0, 88], sizes = [8, 8], strides = [1, 1]} : vector<8x96xf32> to vector<8x8xf32>
    %77 = vector.shape_cast %76 : vector<8x8xf32> to vector<1x8x8xf32>
    %78 = vector.shape_cast %71 : vector<1x8x8xf32> to vector<1x1x8x8xf32>
    %79 = vector.shape_cast %73 : vector<1x8x8xf32> to vector<1x1x8x8xf32>
    %80 = vector.shape_cast %75 : vector<1x8x8xf32> to vector<1x1x8x8xf32>
    %81 = vector.shape_cast %77 : vector<1x8x8xf32> to vector<1x1x8x8xf32>
    %82 = tpu.concatenate %78, %79, %80, %81 in 0 : vector<1x1x8x8xf32>, vector<1x1x8x8xf32>, vector<1x1x8x8xf32>, vector<1x1x8x8xf32> -> vector<4x1x8x8xf32>
    %83 = arith.truncf %82 : vector<4x1x8x8xf32> to vector<4x1x8x8xbf16>
    %84 = vector.shape_cast %83 : vector<4x1x8x8xbf16> to vector<4x8x8xbf16>
    %c0_27 = arith.constant 0 : index
    %c0_28 = arith.constant 0 : index
    %c0_29 = arith.constant 0 : index
    %85 = vector.load %arg3[%c0_27, %c0_28, %c0_29] : memref<1x8x8xbf16, #tpu.memory_space<vmem>>, vector<1x8x8xbf16>
    %86 = arith.extf %85 : vector<1x8x8xbf16> to vector<1x8x8xf32>
    %cst_30 = arith.constant -1.000000e+09 : f32
    %87 = vector.broadcast %cst_30 : f32 to vector<1x1x8xf32>
    %88 = arith.mulf %11, %87 : vector<1x1x8xf32>
    %89 = vector.broadcast %88 : vector<1x1x8xf32> to vector<1x8x8xf32>
    %90 = arith.addf %86, %89 : vector<1x8x8xf32>
    "tpu.trace_start"() <{level = 10 : i32, message = "bqd,bkd->bqk"}> : () -> ()
    %cst_31 = arith.constant dense<0.000000e+00> : vector<4x8x8xf32>
    %91 = tpu.matmul %54, %69, %cst_31 {dimension_numbers = #tpu.dot_dimension_numbers<[2], [2], [1], [1], [0, 0, 0, 1, 1, 1], [0], [0]>} : vector<4x8x8xbf16>, vector<4x8x8xbf16>, vector<4x8x8xf32> -> vector<4x8x8xf32>
    "tpu.trace_stop"() : () -> ()
    %92 = vector.shape_cast %91 : vector<4x8x8xf32> to vector<4x1x8x8xf32>
    %93 = vector.shape_cast %90 : vector<1x8x8xf32> to vector<1x1x8x8xf32>
    %94 = vector.broadcast %93 : vector<1x1x8x8xf32> to vector<4x1x8x8xf32>
    %95 = arith.addf %92, %94 : vector<4x1x8x8xf32>
    %96 = vector.shape_cast %95 : vector<4x1x8x8xf32> to vector<4x8x8xf32>
    %cst_32 = arith.constant dense<0xFF800000> : vector<4x8xf32>
    %97 = vector.multi_reduction <maximumf>, %96, %cst_32 [2] : vector<4x8x8xf32> to vector<4x8xf32>
    %98 = vector.shape_cast %97 : vector<4x8xf32> to vector<4x8x1xf32>
    %99 = vector.broadcast %98 : vector<4x8x1xf32> to vector<4x8x8xf32>
    %100 = arith.subf %96, %99 : vector<4x8x8xf32>
    %101 = math.exp %100 : vector<4x8x8xf32>
    %cst_33 = arith.constant dense<0.000000e+00> : vector<4x8xf32>
    %102 = vector.multi_reduction <add>, %101, %cst_33 [2] : vector<4x8x8xf32> to vector<4x8xf32>
    %103 = vector.shape_cast %102 : vector<4x8xf32> to vector<4x8x1xf32>
    %104 = tpu.reciprocal %103 {approx = true} : vector<4x8x1xf32> -> vector<4x8x1xf32>
    %105 = vector.broadcast %104 : vector<4x8x1xf32> to vector<4x8x8xf32>
    %106 = arith.mulf %101, %105 : vector<4x8x8xf32>
    %107 = arith.truncf %106 : vector<4x8x8xf32> to vector<4x8x8xbf16>
    "tpu.trace_start"() <{level = 10 : i32, message = "bqk,bkd->bqd"}> : () -> ()
    %cst_34 = arith.constant dense<0.000000e+00> : vector<4x8x8xf32>
    %108 = tpu.matmul %107, %84, %cst_34 {dimension_numbers = #tpu.dot_dimension_numbers<[2], [1], [1], [2], [0, 0, 0, 1, 1, 2], [0], [0]>} : vector<4x8x8xbf16>, vector<4x8x8xbf16>, vector<4x8x8xf32> -> vector<4x8x8xf32>
    "tpu.trace_stop"() : () -> ()
    %109 = arith.truncf %108 : vector<4x8x8xf32> to vector<4x8x8xbf16>
    %c0_35 = arith.constant 0 : index
    %c0_36 = arith.constant 0 : index
    %c0_37 = arith.constant 0 : index
    %110 = vector.load %arg7[%c0_35, %c0_36, %c0_37] : memref<4x8x32xbf16, #tpu.memory_space<vmem>>, vector<4x8x32xbf16>
    "tpu.trace_start"() <{level = 10 : i32, message = "hmd,hdn->hmn"}> : () -> ()
    %cst_38 = arith.constant dense<0.000000e+00> : vector<4x8x32xf32>
    %111 = tpu.matmul %109, %110, %cst_38 {dimension_numbers = #tpu.dot_dimension_numbers<[2], [1], [1], [2], [0, 0, 0, 1, 1, 2], [0], [0]>} : vector<4x8x8xbf16>, vector<4x8x32xbf16>, vector<4x8x32xf32> -> vector<4x8x32xf32>
    "tpu.trace_stop"() : () -> ()
    %cst_39 = arith.constant dense<0.000000e+00> : vector<8x32xf32>
    %112 = vector.multi_reduction <add>, %111, %cst_39 [0] : vector<4x8x32xf32> to vector<8x32xf32>
    %113 = vector.broadcast %2 : vector<1x32xf32> to vector<8x32xf32>
    %114 = arith.addf %112, %113 : vector<8x32xf32>
    %115 = arith.addf %114, %34 : vector<8x32xf32>
    %116 = arith.truncf %115 : vector<8x32xf32> to vector<8x32xbf16>
    %c0_40 = arith.constant 0 : index
    %c0_41 = arith.constant 0 : index
    %117 = vector.load %arg8[%c0_40, %c0_41] : memref<32x64xbf16, #tpu.memory_space<vmem>>, vector<32x64xbf16>
    %cst_42 = arith.constant dense<0.000000e+00> : vector<8x64xf32>
    %118 = tpu.matmul %116, %117, %cst_42 {dimension_numbers = #tpu.dot_dimension_numbers<[1], [0], [0], [1], [0, 0, 1, 1], [], []>} : vector<8x32xbf16>, vector<32x64xbf16>, vector<8x64xf32> -> vector<8x64xf32>
    %119 = vector.broadcast %3 : vector<1x64xf32> to vector<8x64xf32>
    %120 = arith.addf %118, %119 : vector<8x64xf32>
    %cst_43 = arith.constant 0.000000e+00 : f32
    %121 = vector.broadcast %cst_43 : f32 to vector<8x64xf32>
    %122 = arith.maximumf %120, %121 : vector<8x64xf32>
    %123 = arith.truncf %122 : vector<8x64xf32> to vector<8x64xbf16>
    %c0_44 = arith.constant 0 : index
    %c0_45 = arith.constant 0 : index
    %124 = vector.load %arg9[%c0_44, %c0_45] : memref<64x32xbf16, #tpu.memory_space<vmem>>, vector<64x32xbf16>
    %cst_46 = arith.constant dense<0.000000e+00> : vector<8x32xf32>
    %125 = tpu.matmul %123, %124, %cst_46 {dimension_numbers = #tpu.dot_dimension_numbers<[1], [0], [0], [1], [0, 0, 1, 1], [], []>} : vector<8x64xbf16>, vector<64x32xbf16>, vector<8x32xf32> -> vector<8x32xf32>
    %126 = vector.broadcast %4 : vector<1x32xf32> to vector<8x32xf32>
    %127 = arith.addf %125, %126 : vector<8x32xf32>
    %128 = arith.addf %115, %127 : vector<8x32xf32>
    %cst_47 = arith.constant dense<0.000000e+00> : vector<8xf32>
    %129 = vector.multi_reduction <add>, %128, %cst_47 [1] : vector<8x32xf32> to vector<8xf32>
    %130 = vector.shape_cast %129 : vector<8xf32> to vector<8x1xf32>
    %cst_48 = arith.constant 3.200000e+01 : f32
    %131 = vector.broadcast %cst_48 : f32 to vector<8x1xf32>
    %132 = arith.divf %130, %131 : vector<8x1xf32>
    %133 = vector.broadcast %132 : vector<8x1xf32> to vector<8x32xf32>
    %134 = arith.subf %128, %133 : vector<8x32xf32>
    %135 = arith.mulf %134, %134 : vector<8x32xf32>
    %cst_49 = arith.constant dense<0.000000e+00> : vector<8xf32>
    %136 = vector.multi_reduction <add>, %135, %cst_49 [1] : vector<8x32xf32> to vector<8xf32>
    %137 = vector.shape_cast %136 : vector<8xf32> to vector<8x1xf32>
    %cst_50 = arith.constant 3.200000e+01 : f32
    %138 = vector.broadcast %cst_50 : f32 to vector<8x1xf32>
    %139 = arith.divf %137, %138 : vector<8x1xf32>
    %140 = vector.broadcast %132 : vector<8x1xf32> to vector<8x32xf32>
    %141 = arith.subf %128, %140 : vector<8x32xf32>
    %cst_51 = arith.constant 9.99999974E-6 : f32
    %142 = vector.broadcast %cst_51 : f32 to vector<8x1xf32>
    %143 = arith.addf %139, %142 : vector<8x1xf32>
    %144 = math.rsqrt %143 : vector<8x1xf32>
    %145 = vector.broadcast %144 : vector<8x1xf32> to vector<8x32xf32>
    %146 = arith.mulf %141, %145 : vector<8x32xf32>
    %147 = vector.broadcast %5 : vector<1x32xf32> to vector<8x32xf32>
    %148 = arith.mulf %146, %147 : vector<8x32xf32>
    %149 = vector.broadcast %6 : vector<1x32xf32> to vector<8x32xf32>
    %150 = arith.addf %148, %149 : vector<8x32xf32>
    %151 = vector.shape_cast %150 : vector<8x32xf32> to vector<1x8x32xf32>
    %c0_52 = arith.constant 0 : index
    %c0_53 = arith.constant 0 : index
    %c0_54 = arith.constant 0 : index
    %152 = vector.load %arg11[%c0_52, %c0_53, %c0_54] : memref<1x8x32xf32, #tpu.memory_space<vmem>>, vector<1x8x32xf32>
    tpu.vector_store %arg11[%c0_52, %c0_53, %c0_54], %151 {strides = array<i32>} : memref<1x8x32xf32, #tpu.memory_space<vmem>>, vector<1x8x32xf32>,
    return
  }
  func.func @transform_0(%arg0: i32) -> (i32, i32, i32) {
    %c0_i32 = arith.constant 0 : i32
    %c0_i32_0 = arith.constant 0 : i32
    %c0_i32_1 = arith.constant 0 : i32
    return %arg0, %c0_i32, %c0_i32_0 : i32, i32, i32
  }
  func.func @transform_1(%arg0: i32) -> (i32, i32, i32) {
    %c0_i32 = arith.constant 0 : i32
    %c0_i32_0 = arith.constant 0 : i32
    %c0_i32_1 = arith.constant 0 : i32
    return %arg0, %c0_i32, %c0_i32_0 : i32, i32, i32
  }
  func.func @transform_2(%arg0: i32) -> (i32, i32, i32) {
    %c0_i32 = arith.constant 0 : i32
    %c0_i32_0 = arith.constant 0 : i32
    %c0_i32_1 = arith.constant 0 : i32
    return %arg0, %c0_i32, %c0_i32_0 : i32, i32, i32
  }
  func.func @transform_3(%arg0: i32) -> (i32, i32, i32) {
    %c0_i32 = arith.constant 0 : i32
    %c0_i32_0 = arith.constant 0 : i32
    %c0_i32_1 = arith.constant 0 : i32
    return %arg0, %c0_i32, %c0_i32_0 : i32, i32, i32
  }
  func.func @transform_4(%arg0: i32) -> (i32, i32) {
    %c0_i32 = arith.constant 0 : i32
    %c0_i32_0 = arith.constant 0 : i32
    %c0_i32_1 = arith.constant 0 : i32
    return %c0_i32, %c0_i32_0 : i32, i32
  }
  func.func @transform_5(%arg0: i32) -> (i32, i32) {
    %c0_i32 = arith.constant 0 : i32
    %c0_i32_0 = arith.constant 0 : i32
    %c0_i32_1 = arith.constant 0 : i32
    return %c0_i32, %c0_i32_0 : i32, i32
  }
  func.func @transform_6(%arg0: i32) -> (i32, i32, i32) {
    %c0_i32 = arith.constant 0 : i32
    %c0_i32_0 = arith.constant 0 : i32
    %c0_i32_1 = arith.constant 0 : i32
    %c0_i32_2 = arith.constant 0 : i32
    return %c0_i32, %c0_i32_0, %c0_i32_1 : i32, i32, i32
  }
  func.func @transform_7(%arg0: i32) -> (i32, i32) {
    %c0_i32 = arith.constant 0 : i32
    %c0_i32_0 = arith.constant 0 : i32
    %c0_i32_1 = arith.constant 0 : i32
    return %c0_i32, %c0_i32_0 : i32, i32
  }
  func.func @transform_8(%arg0: i32) -> (i32, i32) {
    %c0_i32 = arith.constant 0 : i32
    %c0_i32_0 = arith.constant 0 : i32
    %c0_i32_1 = arith.constant 0 : i32
    return %c0_i32, %c0_i32_0 : i32, i32
  }
  func.func @transform_9(%arg0: i32) -> (i32, i32) {
    %c0_i32 = arith.constant 0 : i32
    %c0_i32_0 = arith.constant 0 : i32
    %c0_i32_1 = arith.constant 0 : i32
    return %c0_i32, %c0_i32_0 : i32, i32
  }
  func.func @transform_10(%arg0: i32) -> (i32, i32, i32) {
    %c0_i32 = arith.constant 0 : i32
    %c0_i32_0 = arith.constant 0 : i32
    %c0_i32_1 = arith.constant 0 : i32
    return %arg0, %c0_i32, %c0_i32_0 : i32, i32, i32
  }
}

</mosaic_0001>

<llo_original>
// kernel: tpu_custom_call.1
$region0: #{tpu_custom_call.1}
  #allocation0 [shape = 'u32[]', space=smem, size = 0x4, offset = 0x4, fixed_abs, tag = 'smem constant byte address 0x4 - core index']
  #allocation1 [shape = 'u32[144,128]{1,0:T(1,128)}', space=vmem, size = 0x12000, scoped, tag = 'internal scratch']
  %s0 = inlined_call_operand.vmem [shape: f32[2,8,1], index: 0, kind: input, shape index: {}]
  %s1 = inlined_call_operand.hbm [shape: f32[2,1,8], index: 1, kind: input, shape index: {}]
  %s2 = inlined_call_operand.hbm [shape: bf16[2,8,8], index: 2, kind: input, shape index: {}]
  %s3 = inlined_call_operand.vmem [shape: f32[2,8,32], index: 3, kind: input, shape index: {}]
  %s4 = inlined_call_operand.vmem [shape: bf16[32,32], index: 4, kind: input, shape index: {}]
  %s5 = inlined_call_operand.vmem [shape: bf16[32,96], index: 5, kind: input, shape index: {}]
  %s6 = inlined_call_operand.vmem [shape: bf16[4,8,32], index: 6, kind: input, shape index: {}]
  %s7 = inlined_call_operand.hbm [shape: bf16[32,64], index: 7, kind: input, shape index: {}]
  %s8 = inlined_call_operand.vmem [shape: bf16[64,32], index: 8, kind: input, shape index: {}]
  %s9 = inlined_call_operand.vmem [shape: f32[7,96], index: 9, kind: input, shape index: {}]
  %s10 = inlined_call_operand.hbm [shape: f32[2,8,32], index: 10, kind: output, shape index: {}]
  %s11 = sld [smem:[#allocation0]]
  $region85: #{tpu_custom_call.1} parent=0
    _
  %s13 = ssub.s32 1, %s11
  %s14 = scalar_select 0, %s13, %s11
  $region1: #{tpu_custom_call.1} parent=0
    #allocation2 [shape = 'u8[1024]{0}', space=vmem, size = 0x400, scoped, tag = 'input window, operand 1']
    #allocation3 [shape = 's32[2]{0}', space=sflag, size = 0x8, scoped, tag = 'scoped memory for tpu_custom_call.1']
    #allocation4 [shape = 's32[2]{0}', space=sflag, size = 0x8, scoped, tag = 'scoped memory for tpu_custom_call.1']
    #allocation5 [shape = 'u8[4096]{0}', space=vmem, size = 0x1000, scoped, tag = 'input window, operand 2']
    #allocation6 [shape = 's32[2]{0}', space=sflag, size = 0x8, scoped, tag = 'scoped memory for tpu_custom_call.1']
    #allocation7 [shape = 'u8[8192]{0}', space=vmem, size = 0x2000, scoped, tag = 'input window, operand 7, single buffered']
    #allocation8 [shape = 'u8[8192]{0}', space=vmem, size = 0x2000, scoped, tag = 'output window, operand 0']
    %15 = vsyncpa [#allocation3], 0
    %s16 = scalar_lea.sflag [#allocation3], 1
    %17 = vsyncpa %s16, 0
    %18 = vsyncpa [#allocation6], 0
    %s19 = scalar_lea.sflag [#allocation6], 1
    %20 = vsyncpa %s19, 0
    %21 = vsyncpa [#allocation4], 0
    %s22 = scalar_lea.sflag [#allocation4], 1
    %23 = vsyncpa %s22, 0
    loop: start=0, step=1, limit=4
    $region2: #{tpu_custom_call.1} parent=1 // loop_pre_header
      _
    $region3: #{tpu_custom_call.1} parent=1 // loop_header
      %s25 = sphi 0, %s29
      %p26 = scmp.ge.s32.totalorder %s25, 4
      %s35 = sphi 0, %s37
      %s38 = sphi 0, %s35
      %s39 = sphi 0, %s38
      %s55 = sphi 0, %s39
      %s61 = sphi 0, %s63
      %s64 = sphi 0, %s61
      %s65 = sphi 0, %s64
      %s81 = sphi 0, %s65
      %s87 = sphi 0, %s89
      %s90 = sphi 0, %s87
      %s91 = sphi 0, %s90
      %s107 = sphi 0, %s91
      %s113 = sphi 0, %s115
      %s116 = sphi 0, %s113
      %s117 = sphi 0, %s116
      %s133 = sphi 0, %s117
      %s137 = sphi 0, %s137
      %s139 = sphi 0, %s137
      %s140 = sphi 0, %s139
      %s154 = sphi 0, %s140
      %s158 = sphi 0, %s158
      %s160 = sphi 0, %s158
      %s161 = sphi 0, %s160
      %s175 = sphi 0, %s161
      %s179 = sphi 0, %s179
      %s181 = sphi 0, %s179
      %s182 = sphi 0, %s181
      %s196 = sphi 0, %s182
      %s200 = sphi 0, %s200
      %s202 = sphi 0, %s200
      %s203 = sphi 0, %s202
      %s217 = sphi 0, %s203
      %s221 = sphi 0, %s221
      %s223 = sphi 0, %s221
      %s224 = sphi 0, %s223
      %s238 = sphi 0, %s224
      %s242 = sphi 0, %s242
      %s244 = sphi 0, %s242
      %s245 = sphi 0, %s244
      %s259 = sphi 0, %s245
      %s265 = sphi 0, %s267
      %s268 = sphi 0, %s265
      %s269 = sphi 0, %s268
      %s285 = sphi 0, %s269
    $region4: #{tpu_custom_call.1} parent=1 // loop_header_branch
      %28 = sbr.rel (%p26) target = $region8
    $region5: #{tpu_custom_call.1} parent=1 // loop_body
      %s30 = ssub.s32 %s25, 1
      %s31 = ssub.s32 %s25, 2
      %s32 = sadd.s32 %s25, 1
      %s33 = ssub.s32 %s25, %s32
      %p34 = scmp.eq.s32.totalorder %s33, 0
      %s36 = sadd.s32 %s35, 1
      %s37 = scalar_select %p34, %s35, %s36
      %p40 = pneg %p34
      %p41 = scmp.eq.s32.totalorder %s25, 1
      %p42 = por %p40, %p41
      %p43 = scmp.ne.s32.totalorder %s35, %s38
      %p44 = scmp.eq.s32.totalorder %s25, 0
      %p45 = por %p43, %p44
      %p46 = scmp.ne.s32.totalorder %s35, %s38
      %p47 = scmp.eq.s32.totalorder %s30, 1
      %p48 = por %p46, %p47
      %p49 = scmp.ne.s32.totalorder %s38, %s39
      %p50 = scmp.eq.s32.totalorder %s30, 0
      %p51 = por %p49, %p50
      %p52 = scmp.ne.s32.totalorder %s38, %s39
      %p53 = scmp.eq.s32.totalorder %s31, 1
      %p54 = por %p52, %p53
      %p56 = scmp.ne.s32.totalorder %s39, %s55
      %p57 = scmp.eq.s32.totalorder %s31, 0
      %p58 = por %p56, %p57
      %s59 = ssub.s32 %s25, %s32
      %p60 = scmp.eq.s32.totalorder %s59, 0
      %s62 = sadd.s32 %s61, 1
      %s63 = scalar_select %p60, %s61, %s62
      %p66 = pneg %p60
      %p67 = scmp.eq.s32.totalorder %s25, 1
      %p68 = por %p66, %p67
      %p69 = scmp.ne.s32.totalorder %s61, %s64
      %p70 = scmp.eq.s32.totalorder %s25, 0
      %p71 = por %p69, %p70
      %p72 = scmp.ne.s32.totalorder %s61, %s64
      %p73 = scmp.eq.s32.totalorder %s30, 1
      %p74 = por %p72, %p73
      %p75 = scmp.ne.s32.totalorder %s64, %s65
      %p76 = scmp.eq.s32.totalorder %s30, 0
      %p77 = por %p75, %p76
      %p78 = scmp.ne.s32.totalorder %s64, %s65
      %p79 = scmp.eq.s32.totalorder %s31, 1
      %p80 = por %p78, %p79
      %p82 = scmp.ne.s32.totalorder %s65, %s81
      %p83 = scmp.eq.s32.totalorder %s31, 0
      %p84 = por %p82, %p83
      %s85 = ssub.s32 %s25, %s32
      %p86 = scmp.eq.s32.totalorder %s85, 0
      %s88 = sadd.s32 %s87, 1
      %s89 = scalar_select %p86, %s87, %s88
      %p92 = pneg %p86
      %p93 = scmp.eq.s32.totalorder %s25, 1
      %p94 = por %p92, %p93
      %p95 = scmp.ne.s32.totalorder %s87, %s90
      %p96 = scmp.eq.s32.totalorder %s25, 0
      %p97 = por %p95, %p96
      %p98 = scmp.ne.s32.totalorder %s87, %s90
      %p99 = scmp.eq.s32.totalorder %s30, 1
      %p100 = por %p98, %p99
      %p101 = scmp.ne.s32.totalorder %s90, %s91
      %p102 = scmp.eq.s32.totalorder %s30, 0
      %p103 = por %p101, %p102
      %p104 = scmp.ne.s32.totalorder %s90, %s91
      %p105 = scmp.eq.s32.totalorder %s31, 1
      %p106 = por %p104, %p105
      %p108 = scmp.ne.s32.totalorder %s91, %s107
      %p109 = scmp.eq.s32.totalorder %s31, 0
      %p110 = por %p108, %p109
      %s111 = ssub.s32 %s25, %s32
      %p112 = scmp.eq.s32.totalorder %s111, 0
      %s114 = sadd.s32 %s113, 1
      %s115 = scalar_select %p112, %s113, %s114
      %p118 = pneg %p112
      %p119 = scmp.eq.s32.totalorder %s25, 1
      %p120 = por %p118, %p119
      %p121 = scmp.ne.s32.totalorder %s113, %s116
      %p122 = scmp.eq.s32.totalorder %s25, 0
      %p123 = por %p121, %p122
      %p124 = scmp.ne.s32.totalorder %s113, %s116
      %p125 = scmp.eq.s32.totalorder %s30, 1
      %p126 = por %p124, %p125
      %p127 = scmp.ne.s32.totalorder %s116, %s117
      %p128 = scmp.eq.s32.totalorder %s30, 0
      %p129 = por %p127, %p128
      %p130 = scmp.ne.s32.totalorder %s116, %s117
      %p131 = scmp.eq.s32.totalorder %s31, 1
      %p132 = por %p130, %p131
      %p134 = scmp.ne.s32.totalorder %s117, %s133
      %p135 = scmp.eq.s32.totalorder %s31, 0
      %p136 = por %p134, %p135
      %s138 = sadd.s32 %s137, 1
      %p141 = scmp.eq.s32.totalorder %s25, 1
      %p142 = scmp.ne.s32.totalorder %s137, %s139
      %p143 = scmp.eq.s32.totalorder %s25, 0
      %p144 = por %p142, %p143
      %p145 = scmp.ne.s32.totalorder %s137, %s139
      %p146 = scmp.eq.s32.totalorder %s30, 1
      %p147 = por %p145, %p146
      %p148 = scmp.ne.s32.totalorder %s139, %s140
      %p149 = scmp.eq.s32.totalorder %s30, 0
      %p150 = por %p148, %p149
      %p151 = scmp.ne.s32.totalorder %s139, %s140
      %p152 = scmp.eq.s32.totalorder %s31, 1
      %p153 = por %p151, %p152
      %p155 = scmp.ne.s32.totalorder %s140, %s154
      %p156 = scmp.eq.s32.totalorder %s31, 0
      %p157 = por %p155, %p156
      %s159 = sadd.s32 %s158, 1
      %p162 = scmp.eq.s32.totalorder %s25, 1
      %p163 = scmp.ne.s32.totalorder %s158, %s160
      %p164 = scmp.eq.s32.totalorder %s25, 0
      %p165 = por %p163, %p164
      %p166 = scmp.ne.s32.totalorder %s158, %s160
      %p167 = scmp.eq.s32.totalorder %s30, 1
      %p168 = por %p166, %p167
      %p169 = scmp.ne.s32.totalorder %s160, %s161
      %p170 = scmp.eq.s32.totalorder %s30, 0
      %p171 = por %p169, %p170
      %p172 = scmp.ne.s32.totalorder %s160, %s161
      %p173 = scmp.eq.s32.totalorder %s31, 1
      %p174 = por %p172, %p173
      %p176 = scmp.ne.s32.totalorder %s161, %s175
      %p177 = scmp.eq.s32.totalorder %s31, 0
      %p178 = por %p176, %p177
      %s180 = sadd.s32 %s179, 1
      %p183 = scmp.eq.s32.totalorder %s25, 1
      %p184 = scmp.ne.s32.totalorder %s179, %s181
      %p185 = scmp.eq.s32.totalorder %s25, 0
      %p186 = por %p184, %p185
      %p187 = scmp.ne.s32.totalorder %s179, %s181
      %p188 = scmp.eq.s32.totalorder %s30, 1
      %p189 = por %p187, %p188
      %p190 = scmp.ne.s32.totalorder %s181, %s182
      %p191 = scmp.eq.s32.totalorder %s30, 0
      %p192 = por %p190, %p191
      %p193 = scmp.ne.s32.totalorder %s181, %s182
      %p194 = scmp.eq.s32.totalorder %s31, 1
      %p195 = por %p193, %p194
      %p197 = scmp.ne.s32.totalorder %s182, %s196
      %p198 = scmp.eq.s32.totalorder %s31, 0
      %p199 = por %p197, %p198
      %s201 = sadd.s32 %s200, 1
      %p204 = scmp.eq.s32.totalorder %s25, 1
      %p205 = scmp.ne.s32.totalorder %s200, %s202
      %p206 = scmp.eq.s32.totalorder %s25, 0
      %p207 = por %p205, %p206
      %p208 = scmp.ne.s32.totalorder %s200, %s202
      %p209 = scmp.eq.s32.totalorder %s30, 1
      %p210 = por %p208, %p209
      %p211 = scmp.ne.s32.totalorder %s202, %s203
      %p212 = scmp.eq.s32.totalorder %s30, 0
      %p213 = por %p211, %p212
      %p214 = scmp.ne.s32.totalorder %s202, %s203
      %p215 = scmp.eq.s32.totalorder %s31, 1
      %p216 = por %p214, %p215
      %p218 = scmp.ne.s32.totalorder %s203, %s217
      %p219 = scmp.eq.s32.totalorder %s31, 0
      %p220 = por %p218, %p219
      %s222 = sadd.s32 %s221, 1
      %p225 = scmp.eq.s32.totalorder %s25, 1
      %p226 = scmp.ne.s32.totalorder %s221, %s223
      %p227 = scmp.eq.s32.totalorder %s25, 0
      %p228 = por %p226, %p227
      %p229 = scmp.ne.s32.totalorder %s221, %s223
      %p230 = scmp.eq.s32.totalorder %s30, 1
      %p231 = por %p229, %p230
      %p232 = scmp.ne.s32.totalorder %s223, %s224
      %p233 = scmp.eq.s32.totalorder %s30, 0
      %p234 = por %p232, %p233
      %p235 = scmp.ne.s32.totalorder %s223, %s224
      %p236 = scmp.eq.s32.totalorder %s31, 1
      %p237 = por %p235, %p236
      %p239 = scmp.ne.s32.totalorder %s224, %s238
      %p240 = scmp.eq.s32.totalorder %s31, 0
      %p241 = por %p239, %p240
      %s243 = sadd.s32 %s242, 1
      %p246 = scmp.eq.s32.totalorder %s25, 1
      %p247 = scmp.ne.s32.totalorder %s242, %s244
      %p248 = scmp.eq.s32.totalorder %s25, 0
      %p249 = por %p247, %p248
      %p250 = scmp.ne.s32.totalorder %s242, %s244
      %p251 = scmp.eq.s32.totalorder %s30, 1
      %p252 = por %p250, %p251
      %p253 = scmp.ne.s32.totalorder %s244, %s245
      %p254 = scmp.eq.s32.totalorder %s30, 0
      %p255 = por %p253, %p254
      %p256 = scmp.ne.s32.totalorder %s244, %s245
      %p257 = scmp.eq.s32.totalorder %s31, 1
      %p258 = por %p256, %p257
      %p260 = scmp.ne.s32.totalorder %s245, %s259
      %p261 = scmp.eq.s32.totalorder %s31, 0
      %p262 = por %p260, %p261
      %s263 = ssub.s32 %s25, %s32
      %p264 = scmp.eq.s32.totalorder %s263, 0
      %s266 = sadd.s32 %s265, 1
      %s267 = scalar_select %p264, %s265, %s266
      %p270 = pneg %p264
      %p271 = scmp.eq.s32.totalorder %s25, 1
      %p272 = por %p270, %p271
      %p273 = scmp.ne.s32.totalorder %s265, %s268
      %p274 = scmp.eq.s32.totalorder %s25, 0
      %p275 = por %p273, %p274
      %p276 = scmp.ne.s32.totalorder %s265, %s268
      %p277 = scmp.eq.s32.totalorder %s30, 1
      %p278 = por %p276, %p277
      %p279 = scmp.ne.s32.totalorder %s268, %s269
      %p280 = scmp.eq.s32.totalorder %s30, 0
      %p281 = por %p279, %p280
      %p282 = scmp.ne.s32.totalorder %s268, %s269
      %p283 = scmp.eq.s32.totalorder %s31, 1
      %p284 = por %p282, %p283
      %p286 = scmp.ne.s32.totalorder %s269, %s285
      %p287 = scmp.eq.s32.totalorder %s31, 0
      %p288 = por %p286, %p287
      %p289 = scmp.le.s32.totalorder 1, %s25
      %p290 = scmp.lt.s32.totalorder %s25, 3
      %p291 = pnand %p289, %p290
      %p292 = pneg %p291
      // Predicated region
      $region9: #{tpu_custom_call.1} parent=5 // pred_check
        _
      $region10: #{tpu_custom_call.1} parent=5 // pred_check_branch
        %294 = sbr.rel (%p291) target = $region12
      $region11: #{tpu_custom_call.1} parent=5 // pred_region
        %s295 = ssub.s32 %s25, 1
        // Predicated region
        $region13: #{tpu_custom_call.1} parent=11 // pred_check
          %p296 = pneg %p150
        $region14: #{tpu_custom_call.1} parent=11 // pred_check_branch
          %298 = sbr.rel (%p296) target = $region16
        $region15: #{tpu_custom_call.1} parent=11 // pred_region
          _
        $region16: #{tpu_custom_call.1} parent=11 // pred_fallthru
          _
        // Predicated region
        $region17: #{tpu_custom_call.1} parent=11 // pred_check
          %p299 = pneg %p171
        $region18: #{tpu_custom_call.1} parent=11 // pred_check_branch
          %301 = sbr.rel (%p299) target = $region20
        $region19: #{tpu_custom_call.1} parent=11 // pred_region
          _
        $region20: #{tpu_custom_call.1} parent=11 // pred_fallthru
          _
        // Predicated region
        $region21: #{tpu_custom_call.1} parent=11 // pred_check
          %p302 = pneg %p192
        $region22: #{tpu_custom_call.1} parent=11 // pred_check_branch
          %304 = sbr.rel (%p302) target = $region24
        $region23: #{tpu_custom_call.1} parent=11 // pred_region
          _
        $region24: #{tpu_custom_call.1} parent=11 // pred_fallthru
          _
        // Predicated region
        $region25: #{tpu_custom_call.1} parent=11 // pred_check
          %p305 = pneg %p213
        $region26: #{tpu_custom_call.1} parent=11 // pred_check_branch
          %307 = sbr.rel (%p305) target = $region28
        $region27: #{tpu_custom_call.1} parent=11 // pred_region
          %s309 = ssub.s32 256, 256
          %310 = vsyncadd [#allocation6], %s309
          %s311 = sshll.u32 [#allocation7], 4
          %s312 = int_to_ptr.vmem [resolvable:$true] %s311
          %317 = dma.hbm_to_vmem [thread:$0]  %s7, 256, %s312, [#allocation6], 64, 64, 4
        $region28: #{tpu_custom_call.1} parent=11 // pred_fallthru
          _
        // Predicated region
        $region29: #{tpu_custom_call.1} parent=11 // pred_check
          %p318 = pneg %p234
        $region30: #{tpu_custom_call.1} parent=11 // pred_check_branch
          %320 = sbr.rel (%p318) target = $region32
        $region31: #{tpu_custom_call.1} parent=11 // pred_region
          _
        $region32: #{tpu_custom_call.1} parent=11 // pred_fallthru
          _
        // Predicated region
        $region33: #{tpu_custom_call.1} parent=11 // pred_check
          %p321 = pneg %p255
        $region34: #{tpu_custom_call.1} parent=11 // pred_check_branch
          %323 = sbr.rel (%p321) target = $region36
        $region35: #{tpu_custom_call.1} parent=11 // pred_region
          _
        $region36: #{tpu_custom_call.1} parent=11 // pred_fallthru
          _
      $region12: #{tpu_custom_call.1} parent=5 // pred_fallthru
        _
      %p324 = scmp.lt.s32.totalorder %s25, 2
      // Predicated region
      $region37: #{tpu_custom_call.1} parent=5 // pred_check
        %p325 = pneg %p324
      $region38: #{tpu_custom_call.1} parent=5 // pred_check_branch
        %327 = sbr.rel (%p325) target = $region40
      $region39: #{tpu_custom_call.1} parent=5 // pred_region
        // Predicated region
        $region41: #{tpu_custom_call.1} parent=39 // pred_check
          %p328 = pneg %p45
        $region42: #{tpu_custom_call.1} parent=39 // pred_check_branch
          %330 = sbr.rel (%p328) target = $region44
        $region43: #{tpu_custom_call.1} parent=39 // pred_region
          %p331 = scmp.lt.s32.totalorder %s25, 1
          %s332 = scalar_select %p331, %s25, 1
          %s333 = smul.addr %s332, 8
          %s334 = scalar_lea.vmem %s0, %s333
        $region44: #{tpu_custom_call.1} parent=39 // pred_fallthru
          _
        // Predicated region
        $region45: #{tpu_custom_call.1} parent=39 // pred_check
          %p335 = pneg %p71
        $region46: #{tpu_custom_call.1} parent=39 // pred_check_branch
          %337 = sbr.rel (%p335) target = $region48
        $region47: #{tpu_custom_call.1} parent=39 // pred_region
          %s338 = sand.u32 %s61, 1
          %s339 = scalar_lea.sflag [#allocation3], %s338
          %s340 = sand.u32 %s61, 1
          %s341 = scalar_lea.vmem [#allocation2], %s340
          %s343 = ssub.s32 16, 16
          %344 = vsyncadd %s339, %s343
          %s345 = smul.addr %s25, 16
          %s346 = scalar_lea.hbm %s1, %s345
          %s348 = sshll.u32 %s341, 4
          %s349 = int_to_ptr.vmem [resolvable:$true] %s348
          %351 = dma.hbm_to_vmem [thread:$0]  %s346, 16, %s349, %s339
        $region48: #{tpu_custom_call.1} parent=39 // pred_fallthru
          _
        // Predicated region
        $region49: #{tpu_custom_call.1} parent=39 // pred_check
          %p352 = pneg %p97
        $region50: #{tpu_custom_call.1} parent=39 // pred_check_branch
          %354 = sbr.rel (%p352) target = $region52
        $region51: #{tpu_custom_call.1} parent=39 // pred_region
          %s355 = sand.u32 %s25, 1
          %s356 = scalar_lea.sflag [#allocation6], %s355
          %s357 = sand.u32 %s87, 1
          %s358 = smul.addr %s357, 4
          %s359 = scalar_lea.vmem [#allocation5], %s358
          %s361 = ssub.s32 64, 64
          %362 = vsyncadd %s356, %s361
          %s363 = smul.addr %s25, 64
          %s364 = scalar_lea.hbm %s2, %s363
          %s366 = sshll.u32 %s359, 4
          %s367 = int_to_ptr.vmem [resolvable:$true] %s366
          %369 = dma.hbm_to_vmem [thread:$0]  %s364, 64, %s367, %s356
        $region52: #{tpu_custom_call.1} parent=39 // pred_fallthru
          _
        // Predicated region
        $region53: #{tpu_custom_call.1} parent=39 // pred_check
          %p370 = pneg %p123
        $region54: #{tpu_custom_call.1} parent=39 // pred_check_branch
          %372 = sbr.rel (%p370) target = $region56
        $region55: #{tpu_custom_call.1} parent=39 // pred_region
          %p373 = scmp.lt.s32.totalorder %s25, 1
          %s374 = scalar_select %p373, %s25, 1
          %s375 = smul.addr %s374, 8
          %s376 = scalar_lea.vmem %s3, %s375
        $region56: #{tpu_custom_call.1} parent=39 // pred_fallthru
          _
      $region40: #{tpu_custom_call.1} parent=5 // pred_fallthru
        _
      %p377 = scmp.le.s32.totalorder 1, %s25
      %p378 = scmp.lt.s32.totalorder %s25, 3
      %p379 = pnand %p377, %p378
      %p380 = pneg %p379
      // Predicated region
      $region57: #{tpu_custom_call.1} parent=5 // pred_check
        _
      $region58: #{tpu_custom_call.1} parent=5 // pred_check_branch
        %382 = sbr.rel (%p379) target = $region60
      $region59: #{tpu_custom_call.1} parent=5 // pred_region
        %s383 = ssub.s32 %s25, 1
        %s384 = sand.u32 %s64, 1
        %s385 = scalar_lea.sflag [#allocation3], %s384
        %s386 = sand.u32 %s64, 1
        %s387 = scalar_lea.vmem [#allocation2], %s386
        // Predicated region
        $region61: #{tpu_custom_call.1} parent=59 // pred_check
          %p388 = pneg %p77
        $region62: #{tpu_custom_call.1} parent=59 // pred_check_branch
          %390 = sbr.rel (%p388) target = $region64
        $region63: #{tpu_custom_call.1} parent=59 // pred_region
          %391 = dma.done %s385, 16
        $region64: #{tpu_custom_call.1} parent=59 // pred_fallthru
          _
        %s392 = sand.u32 %s30, 1
        %s393 = scalar_lea.sflag [#allocation6], %s392
        %s394 = sand.u32 %s90, 1
        %s395 = smul.addr %s394, 4
        %s396 = scalar_lea.vmem [#allocation5], %s395
        // Predicated region
        $region65: #{tpu_custom_call.1} parent=59 // pred_check
          %p397 = pneg %p103
        $region66: #{tpu_custom_call.1} parent=59 // pred_check_branch
          %399 = sbr.rel (%p397) target = $region68
        $region67: #{tpu_custom_call.1} parent=59 // pred_region
          %400 = dma.done %s393, 64
        $region68: #{tpu_custom_call.1} parent=59 // pred_fallthru
          _
        // Predicated region
        $region69: #{tpu_custom_call.1} parent=59 // pred_check
          %p401 = pneg %p213
        $region70: #{tpu_custom_call.1} parent=59 // pred_check_branch
          %403 = sbr.rel (%p401) target = $region72
        $region71: #{tpu_custom_call.1} parent=59 // pred_region
          %404 = dma.done [#allocation6], 256
        $region72: #{tpu_custom_call.1} parent=59 // pred_fallthru
          _
        %p405 = scmp.lt.s32.totalorder %s30, 1
        %s406 = scalar_select %p405, %s30, 1
        %s407 = smul.addr %s406, 8
        %s408 = scalar_lea.vmem %s0, %s407
        %p409 = pneg %p51
        %p410 = pneg %p48
        %s411 = sand.u32 %s64, 1
        %s412 = scalar_lea.sflag [#allocation3], %s411
        %s413 = sand.u32 %s64, 1
        %s414 = scalar_lea.vmem [#allocation2], %s413
        %p415 = pneg %p77
        %p416 = pneg %p74
        %s417 = sand.u32 %s30, 1
        %s418 = scalar_lea.sflag [#allocation6], %s417
        %s419 = sand.u32 %s90, 1
        %s420 = smul.addr %s419, 4
        %s421 = scalar_lea.vmem [#allocation5], %s420
        %p422 = pneg %p103
        %p423 = pneg %p100
        %p424 = scmp.lt.s32.totalorder %s30, 1
        %s425 = scalar_select %p424, %s30, 1
        %s426 = smul.addr %s425, 8
        %s427 = scalar_lea.vmem %s3, %s426
        %p428 = pneg %p129
        %p429 = pneg %p126
        %p430 = pneg %p150
        %p431 = pneg %p147
        %p432 = pneg %p171
        %p433 = pneg %p168
        %p434 = pneg %p192
        %p435 = pneg %p189
        %p436 = pneg %p213
        %p437 = pneg %p210
        %p438 = pneg %p234
        %p439 = pneg %p231
        %p440 = pneg %p255
        %p441 = pneg %p252
        %p442 = pneg %p281
        %p443 = pneg %p278
        %s444 = sand.u32 %s268, 1
        %s445 = scalar_lea.sflag [#allocation4], %s444
        %s446 = sand.u32 %s268, 1
        %s447 = smul.addr %s446, 8
        %s448 = scalar_lea.vmem [#allocation8], %s447
        %p449 = scmp.lt.s32.totalorder %s30, 1
        %s450 = scalar_select %p449, %s30, 1
        %s451 = smul.addr %s450, 8
        %s452 = scalar_lea.vmem %s0, %s451
        %p453 = scmp.lt.s32.totalorder %s30, 1
        %s454 = scalar_select %p453, %s30, 1
        %s455 = smul.addr %s454, 8
        %s456 = scalar_lea.vmem %s3, %s455
        %v458 = vld [vmem:[%s9] sm:$0x1]
        %v459 = vld [vmem:[%s9 + $0x1] sm:$0x1]
        %v460 = vld [vmem:[%s9 + $0x2] sm:$0x1]
        %v461 = vld [vmem:[%s9 + $0x3] sm:$0x1]
        %v462 = vld [vmem:[%s9 + $0x4] sm:$0x1]
        %v463 = vld [vmem:[%s9 + $0x5] sm:$0x1]
        %v464 = vld [vmem:[%s9 + $0x6] sm:$0x1]
        %v465 = vld [vmem:[%s456] sm:$0xff]
        %v466 = vld [vmem:[%s452] sm:$0xff]
        %v467 = vsub.f32 1.0, %v466
        %v468 = vld [vmem:[%s387] sm:$0x1]
        %vm469 = vcmask 7168
        %v470 = vsel %vm469, %v467, 0.0
        %v471 = vrot.slane %v470, 4
        %v472 = vadd.f32 %v470, %v471
        %v473 = vrot.slane %v472, 2
        %v474 = vadd.f32 %v472, %v473
        %v475 = vrot.slane %v474, 1
        %v476 = vadd.f32 %v474, %v475
        %v477 = vmax.f32 %v476, 1.0
        %v478 = vrcp.pop %v477
        %v479 = vmul.f32 1.0, %v478
        %481 = vset.pattern.permute.xlu0 0
        %482 = vperm.xlu0 %481, %v467
        %v483 = vpop.permute.xlu0 %482
        %v485 = vmul.f32 %v465, %v483
        %vm486 = vcmask 261120
        %v487 = vsel %vm486, %v485, 0.0
        %v488 = vrot.slane %v487, 4
        %v489 = vadd.f32 %v487, %v488
        %v490 = vrot.slane %v489, 2
        %v491 = vadd.f32 %v489, %v490
        %v492 = vrot.slane %v491, 1
        %v493 = vadd.f32 %v491, %v492
        %v494 = vmul.f32 %v467, %v479
        %496 = vset.pattern.permute.xlu0 0
        %497 = vperm.xlu0 %496, %v494
        %v498 = vpop.permute.xlu0 %497
        %v500 = vmul.f32 %v498, %v493
        %v501 = vpack.c.bf16 %v500, %v500
        %v502 = vld [vmem:[%s4] sm:$0xf]
        %v503 = vld [vmem:[%s4 + $0x4] sm:$0xf]
        %v504 = vld [vmem:[%s4 + $0x8] sm:$0xf]
        %v505 = vld [vmem:[%s4 + $0xc] sm:$0xf]
        %v506 = vlaneseq
        %v507 = vshrl.u32 %v506, 7
        %v508 = vsub.s32 0, %v507
        %v509 = vrot.slane %v458, %v508
        %v514 = vunpack.c.l.b16 %v502
        %v515 = vunpack.c.l.b16 %v503
        %v516 = vunpack.c.l.b16 %v504
        %v517 = vunpack.c.l.b16 %v505
        %v518 = vpack.c.b16 %v515, %v514
        %v519 = vpack.c.b16 %v517, %v516
        %v523 = vsel %vm486, %v501, 0
        %525 = vmatprep.subr.bf16.mxu0 0
        %526 = vmatpush1.bf16.msra.mxu0 %v518
        %527 = vmatprep.subr.bf16.mxu0 0
        %528 = vmatpush1.bf16.msra.mxu0 %v519
        %529 = vmatprep.subr.bf16.mxu0 0
        %530 = vmatpush1.bf16.msra.mxu0 0
        %531 = vmatprep.subr.bf16.mxu0 0
        %532 = vmatpush1.bf16.msra.mxu0 0
        %533 = vmatprep.subr.bf16.mxu0 0
        %534 = vmatpush1.bf16.msra.mxu0 0
        %535 = vmatprep.subr.bf16.mxu0 0
        %536 = vmatpush1.bf16.msra.mxu0 0
        %537 = vmatprep.subr.bf16.mxu0 0
        %538 = vmatpush1.bf16.msra.mxu0 0
        %539 = vmatprep.subr.bf16.mxu0 0
        %540 = vmatpush1.bf16.msra.mxu0 0
        %541 = vmatprep.subr.bf16.mxu0 0
        %542 = vmatpush1.bf16.msra.mxu0 0
        %543 = vmatprep.subr.bf16.mxu0 0
        %544 = vmatpush1.bf16.msra.mxu0 0
        %545 = vmatprep.subr.bf16.mxu0 0
        %546 = vmatpush1.bf16.msra.mxu0 0
        %547 = vmatprep.subr.bf16.mxu0 0
        %548 = vmatpush1.bf16.msra.mxu0 0
        %549 = vmatprep.subr.bf16.mxu0 0
        %550 = vmatpush1.bf16.msra.mxu0 0
        %551 = vmatprep.subr.bf16.mxu0 0
        %552 = vmatpush1.bf16.msra.mxu0 0
        %553 = vmatprep.subr.bf16.mxu0 0
        %554 = vmatpush1.bf16.msra.mxu0 0
        %555 = vmatprep.subr.bf16.mxu0 0
        %556 = vmatpush1.bf16.msra.mxu0 0
        %557 = vmatprep.mubr.bf16.mxu0 0
        %558 = vmatmul.mubr.bf16.gmra.mrb[0].mxu0 %v523
        %v559 = vpop.f32.mrb[0].mxu0
        %v560 = vadd.f32 %v509, %v559
        %v561 = vpop.f32.mrb[0].mxu0
        %v562 = vpop.f32.mrb[0].mxu0
        %v563 = vpop.f32.mrb[0].mxu0
        %564 = vdwg.mxu0
        %v565 = vmax.f32 %v560, 0.0
        %v566 = vpack.c.bf16 %v565, %v565
        %v567 = vld [vmem:[%s5] sm:$0xf]
        %v568 = vld [vmem:[%s5 + $0x4] sm:$0xf]
        %v569 = vld [vmem:[%s5 + $0x8] sm:$0xf]
        %v570 = vld [vmem:[%s5 + $0xc] sm:$0xf]
        %v571 = vlaneseq
        %v572 = vshrl.u32 %v571, 7
        %v573 = vsub.s32 0, %v572
        %v574 = vrot.slane %v459, %v573
        %v579 = vunpack.c.l.b16 %v567
        %v580 = vunpack.c.l.b16 %v568
        %v581 = vunpack.c.l.b16 %v569
        %v582 = vunpack.c.l.b16 %v570
        %v583 = vpack.c.b16 %v580, %v579
        %v584 = vpack.c.b16 %v582, %v581
        %v588 = vsel %vm486, %v566, 0
        %590 = vmatprep.subr.bf16.mxu0 0
        %591 = vmatpush1.bf16.msra.mxu0 %v583
        %592 = vmatprep.subr.bf16.mxu0 0
        %593 = vmatpush1.bf16.msra.mxu0 %v584
        %594 = vmatprep.subr.bf16.mxu0 0
        %595 = vmatpush1.bf16.msra.mxu0 0
        %596 = vmatprep.subr.bf16.mxu0 0
        %597 = vmatpush1.bf16.msra.mxu0 0
        %598 = vmatprep.subr.bf16.mxu0 0
        %599 = vmatpush1.bf16.msra.mxu0 0
        %600 = vmatprep.subr.bf16.mxu0 0
        %601 = vmatpush1.bf16.msra.mxu0 0
        %602 = vmatprep.subr.bf16.mxu0 0
        %603 = vmatpush1.bf16.msra.mxu0 0
        %604 = vmatprep.subr.bf16.mxu0 0
        %605 = vmatpush1.bf16.msra.mxu0 0
        %606 = vmatprep.subr.bf16.mxu0 0
        %607 = vmatpush1.bf16.msra.mxu0 0
        %608 = vmatprep.subr.bf16.mxu0 0
        %609 = vmatpush1.bf16.msra.mxu0 0
        %610 = vmatprep.subr.bf16.mxu0 0
        %611 = vmatpush1.bf16.msra.mxu0 0
        %612 = vmatprep.subr.bf16.mxu0 0
        %613 = vmatpush1.bf16.msra.mxu0 0
        %614 = vmatprep.subr.bf16.mxu0 0
        %615 = vmatpush1.bf16.msra.mxu0 0
        %616 = vmatprep.subr.bf16.mxu0 0
        %617 = vmatpush1.bf16.msra.mxu0 0
        %618 = vmatprep.subr.bf16.mxu0 0
        %619 = vmatpush1.bf16.msra.mxu0 0
        %620 = vmatprep.subr.bf16.mxu0 0
        %621 = vmatpush1.bf16.msra.mxu0 0
        %622 = vmatprep.mubr.bf16.mxu0 0
        %623 = vmatmul.mubr.bf16.gmra.mrb[0].mxu0 %v588
        %v624 = vpop.f32.mrb[0].mxu0
        %v625 = vadd.f32 %v574, %v624
        %v626 = vpop.f32.mrb[0].mxu0
        %v627 = vpop.f32.mrb[0].mxu0
        %v628 = vpop.f32.mrb[0].mxu0
        %629 = vdwg.mxu0
        %631 = vrot.lane.b32.xlu0 %v625, 120
        %v632 = vpop.permute.xlu0 %631
        %634 = vrot.lane.b32.xlu0 %v625, 112
        %v635 = vpop.permute.xlu0 %634
        %637 = vrot.lane.b32.xlu0 %v625, 104
        %v638 = vpop.permute.xlu0 %637
        %v640 = vpack.c.bf16 %v625, %v625
        %v641 = vpack.c.bf16 %v632, %v632
        %v642 = vpack.c.bf16 %v635, %v635
        %v643 = vpack.c.bf16 %v638, %v638
        %v644 = vld [vmem:[%s396] sm:$0xf]
        %v645 = vunpack.c.l.bf16 %v644
        %v646 = vmul.f32 %v468, -1e+09
        %v648 = vlaneseq
        %v649 = vshrl.u32 %v648, 7
        %v650 = vsub.s32 0, %v649
        %v651 = vrot.slane %v646, %v650
        %v653 = vadd.f32 %v645, %v651
        %655 = vrot.lane.b32.xlu0 %v640, 96
        %v656 = vpop.permute.xlu0 %655
        %vm657 = vcmask 64512
        %v659 = vsel %vm657, %v640, 0
        %v662 = vsel %vm657, %v656, 0
        %664 = vmatprep.subr.bf16.mxu0 0
        %665 = vmatpush1.bf16.xpose.msra.mxu0 %v662
        %666 = vmatprep.subr.bf16.mxu0 0
        %667 = vmatpush1.bf16.xpose.msra.mxu0 0
        %668 = vmatprep.subr.bf16.mxu0 0
        %669 = vmatpush1.bf16.xpose.msra.mxu0 0
        %670 = vmatprep.subr.bf16.mxu0 0
        %671 = vmatpush1.bf16.xpose.msra.mxu0 0
        %672 = vmatprep.subr.bf16.mxu0 0
        %673 = vmatpush1.bf16.xpose.msra.mxu0 0
        %674 = vmatprep.subr.bf16.mxu0 0
        %675 = vmatpush1.bf16.xpose.msra.mxu0 0
        %676 = vmatprep.subr.bf16.mxu0 0
        %677 = vmatpush1.bf16.xpose.msra.mxu0 0
        %678 = vmatprep.subr.bf16.mxu0 0
        %679 = vmatpush1.bf16.xpose.msra.mxu0 0
        %680 = vmatprep.subr.bf16.mxu0 0
        %681 = vmatpush1.bf16.xpose.msra.mxu0 0
        %682 = vmatprep.subr.bf16.mxu0 0
        %683 = vmatpush1.bf16.xpose.msra.mxu0 0
        %684 = vmatprep.subr.bf16.mxu0 0
        %685 = vmatpush1.bf16.xpose.msra.mxu0 0
        %686 = vmatprep.subr.bf16.mxu0 0
        %687 = vmatpush1.bf16.xpose.msra.mxu0 0
        %688 = vmatprep.subr.bf16.mxu0 0
        %689 = vmatpush1.bf16.xpose.msra.mxu0 0
        %690 = vmatprep.subr.bf16.mxu0 0
        %691 = vmatpush1.bf16.xpose.msra.mxu0 0
        %692 = vmatprep.subr.bf16.mxu0 0
        %693 = vmatpush1.bf16.xpose.msra.mxu0 0
        %694 = vmatprep.subr.bf16.mxu0 0
        %695 = vmatpush1.bf16.xpose.msra.mxu0 0
        %696 = vmatprep.mubr.bf16.mxu0 0
        %697 = vmatmul.mubr.bf16.gmra.mrb[0].mxu0 %v659
        %v698 = vpop.f32.mrb[0].mxu0
        %v699 = vadd.f32 0.0, %v698
        %v700 = vpop.f32.mrb[0].mxu0
        %v701 = vpop.f32.mrb[0].mxu0
        %v702 = vpop.f32.mrb[0].mxu0
        %703 = vdwg.mxu0
        %705 = vrot.lane.b32.xlu0 %v641, 96
        %v706 = vpop.permute.xlu0 %705
        %v708 = vsel %vm657, %v641, 0
        %v711 = vsel %vm657, %v706, 0
        %713 = vmatprep.subr.bf16.mxu0 0
        %714 = vmatpush1.bf16.xpose.msra.mxu0 %v711
        %715 = vmatprep.subr.bf16.mxu0 0
        %716 = vmatpush1.bf16.xpose.msra.mxu0 0
        %717 = vmatprep.subr.bf16.mxu0 0
        %718 = vmatpush1.bf16.xpose.msra.mxu0 0
        %719 = vmatprep.subr.bf16.mxu0 0
        %720 = vmatpush1.bf16.xpose.msra.mxu0 0
        %721 = vmatprep.subr.bf16.mxu0 0
        %722 = vmatpush1.bf16.xpose.msra.mxu0 0
        %723 = vmatprep.subr.bf16.mxu0 0
        %724 = vmatpush1.bf16.xpose.msra.mxu0 0
        %725 = vmatprep.subr.bf16.mxu0 0
        %726 = vmatpush1.bf16.xpose.msra.mxu0 0
        %727 = vmatprep.subr.bf16.mxu0 0
        %728 = vmatpush1.bf16.xpose.msra.mxu0 0
        %729 = vmatprep.subr.bf16.mxu0 0
        %730 = vmatpush1.bf16.xpose.msra.mxu0 0
        %731 = vmatprep.subr.bf16.mxu0 0
        %732 = vmatpush1.bf16.xpose.msra.mxu0 0
        %733 = vmatprep.subr.bf16.mxu0 0
        %734 = vmatpush1.bf16.xpose.msra.mxu0 0
        %735 = vmatprep.subr.bf16.mxu0 0
        %736 = vmatpush1.bf16.xpose.msra.mxu0 0
        %737 = vmatprep.subr.bf16.mxu0 0
        %738 = vmatpush1.bf16.xpose.msra.mxu0 0
        %739 = vmatprep.subr.bf16.mxu0 0
        %740 = vmatpush1.bf16.xpose.msra.mxu0 0
        %741 = vmatprep.subr.bf16.mxu0 0
        %742 = vmatpush1.bf16.xpose.msra.mxu0 0
        %743 = vmatprep.subr.bf16.mxu0 0
        %744 = vmatpush1.bf16.xpose.msra.mxu0 0
        %745 = vmatprep.mubr.bf16.mxu0 0
        %746 = vmatmul.mubr.bf16.gmra.mrb[0].mxu0 %v708
        %v747 = vpop.f32.mrb[0].mxu0
        %v748 = vadd.f32 0.0, %v747
        %v749 = vpop.f32.mrb[0].mxu0
        %v750 = vpop.f32.mrb[0].mxu0
        %v751 = vpop.f32.mrb[0].mxu0
        %752 = vdwg.mxu0
        %754 = vrot.lane.b32.xlu0 %v642, 96
        %v755 = vpop.permute.xlu0 %754
        %v757 = vsel %vm657, %v642, 0
        %v760 = vsel %vm657, %v755, 0
        %762 = vmatprep.subr.bf16.mxu0 0
        %763 = vmatpush1.bf16.xpose.msra.mxu0 %v760
        %764 = vmatprep.subr.bf16.mxu0 0
        %765 = vmatpush1.bf16.xpose.msra.mxu0 0
        %766 = vmatprep.subr.bf16.mxu0 0
        %767 = vmatpush1.bf16.xpose.msra.mxu0 0
        %768 = vmatprep.subr.bf16.mxu0 0
        %769 = vmatpush1.bf16.xpose.msra.mxu0 0
        %770 = vmatprep.subr.bf16.mxu0 0
        %771 = vmatpush1.bf16.xpose.msra.mxu0 0
        %772 = vmatprep.subr.bf16.mxu0 0
        %773 = vmatpush1.bf16.xpose.msra.mxu0 0
        %774 = vmatprep.subr.bf16.mxu0 0
        %775 = vmatpush1.bf16.xpose.msra.mxu0 0
        %776 = vmatprep.subr.bf16.mxu0 0
        %777 = vmatpush1.bf16.xpose.msra.mxu0 0
        %778 = vmatprep.subr.bf16.mxu0 0
        %779 = vmatpush1.bf16.xpose.msra.mxu0 0
        %780 = vmatprep.subr.bf16.mxu0 0
        %781 = vmatpush1.bf16.xpose.msra.mxu0 0
        %782 = vmatprep.subr.bf16.mxu0 0
        %783 = vmatpush1.bf16.xpose.msra.mxu0 0
        %784 = vmatprep.subr.bf16.mxu0 0
        %785 = vmatpush1.bf16.xpose.msra.mxu0 0
        %786 = vmatprep.subr.bf16.mxu0 0
        %787 = vmatpush1.bf16.xpose.msra.mxu0 0
        %788 = vmatprep.subr.bf16.mxu0 0
        %789 = vmatpush1.bf16.xpose.msra.mxu0 0
        %790 = vmatprep.subr.bf16.mxu0 0
        %791 = vmatpush1.bf16.xpose.msra.mxu0 0
        %792 = vmatprep.subr.bf16.mxu0 0
        %793 = vmatpush1.bf16.xpose.msra.mxu0 0
        %794 = vmatprep.mubr.bf16.mxu0 0
        %795 = vmatmul.mubr.bf16.gmra.mrb[0].mxu0 %v757
        %v796 = vpop.f32.mrb[0].mxu0
        %v797 = vadd.f32 0.0, %v796
        %v798 = vpop.f32.mrb[0].mxu0
        %v799 = vpop.f32.mrb[0].mxu0
        %v800 = vpop.f32.mrb[0].mxu0
        %801 = vdwg.mxu0
        %803 = vrot.lane.b32.xlu0 %v643, 96
        %v804 = vpop.permute.xlu0 %803
        %v806 = vsel %vm657, %v643, 0
        %v809 = vsel %vm657, %v804, 0
        %811 = vmatprep.subr.bf16.mxu0 0
        %812 = vmatpush1.bf16.xpose.msra.mxu0 %v809
        %813 = vmatprep.subr.bf16.mxu0 0
        %814 = vmatpush1.bf16.xpose.msra.mxu0 0
        %815 = vmatprep.subr.bf16.mxu0 0
        %816 = vmatpush1.bf16.xpose.msra.mxu0 0
        %817 = vmatprep.subr.bf16.mxu0 0
        %818 = vmatpush1.bf16.xpose.msra.mxu0 0
        %819 = vmatprep.subr.bf16.mxu0 0
        %820 = vmatpush1.bf16.xpose.msra.mxu0 0
        %821 = vmatprep.subr.bf16.mxu0 0
        %822 = vmatpush1.bf16.xpose.msra.mxu0 0
        %823 = vmatprep.subr.bf16.mxu0 0
        %824 = vmatpush1.bf16.xpose.msra.mxu0 0
        %825 = vmatprep.subr.bf16.mxu0 0
        %826 = vmatpush1.bf16.xpose.msra.mxu0 0
        %827 = vmatprep.subr.bf16.mxu0 0
        %828 = vmatpush1.bf16.xpose.msra.mxu0 0
        %829 = vmatprep.subr.bf16.mxu0 0
        %830 = vmatpush1.bf16.xpose.msra.mxu0 0
        %831 = vmatprep.subr.bf16.mxu0 0
        %832 = vmatpush1.bf16.xpose.msra.mxu0 0
        %833 = vmatprep.subr.bf16.mxu0 0
        %834 = vmatpush1.bf16.xpose.msra.mxu0 0
        %835 = vmatprep.subr.bf16.mxu0 0
        %836 = vmatpush1.bf16.xpose.msra.mxu0 0
        %837 = vmatprep.subr.bf16.mxu0 0
        %838 = vmatpush1.bf16.xpose.msra.mxu0 0
        %839 = vmatprep.subr.bf16.mxu0 0
        %840 = vmatpush1.bf16.xpose.msra.mxu0 0
        %841 = vmatprep.subr.bf16.mxu0 0
        %842 = vmatpush1.bf16.xpose.msra.mxu0 0
        %843 = vmatprep.mubr.bf16.mxu0 0
        %844 = vmatmul.mubr.bf16.gmra.mrb[0].mxu0 %v806
        %v845 = vpop.f32.mrb[0].mxu0
        %v846 = vadd.f32 0.0, %v845
        %v847 = vpop.f32.mrb[0].mxu0
        %v848 = vpop.f32.mrb[0].mxu0
        %v849 = vpop.f32.mrb[0].mxu0
        %850 = vdwg.mxu0
        %v851 = vadd.f32 %v699, %v653
        %v852 = vadd.f32 %v748, %v653
        %v853 = vadd.f32 %v797, %v653
        %v854 = vadd.f32 %v846, %v653
        %v855 = vsel %vm657, %v851, -inf
        %856 = vmax.xlane.f32.xlu0 %v855
        %v857 = vpop.xlane.xlu0 %856
        %v858 = vsel %vm657, %v852, -inf
        %859 = vmax.xlane.f32.xlu0 %v858
        %v860 = vpop.xlane.xlu0 %859
        %v861 = vsel %vm657, %v853, -inf
        %862 = vmax.xlane.f32.xlu0 %v861
        %v863 = vpop.xlane.xlu0 %862
        %v864 = vsel %vm657, %v854, -inf
        %865 = vmax.xlane.f32.xlu0 %v864
        %v866 = vpop.xlane.xlu0 %865
        %v867 = vsub.f32 %v851, %v857
        %v868 = vsub.f32 %v852, %v860
        %v869 = vsub.f32 %v853, %v863
        %v870 = vsub.f32 %v854, %v866
        %v871 = vmul.f32 %v867, 1.442695
        %v872 = vpow.pop %v871
        %v873 = vmul.f32 %v868, 1.442695
        %v874 = vpow.pop %v873
        %v875 = vmul.f32 %v869, 1.442695
        %v876 = vpow.pop %v875
        %v877 = vmul.f32 %v870, 1.442695
        %v878 = vpow.pop %v877
        %v879 = vsel %vm657, %v872, 0.0
        %880 = vadd.xlane.f32.xlu0 %v879
        %v881 = vpop.xlane.xlu0 %880
        %v882 = vsel %vm657, %v874, 0.0
        %883 = vadd.xlane.f32.xlu0 %v882
        %v884 = vpop.xlane.xlu0 %883
        %v885 = vsel %vm657, %v876, 0.0
        %886 = vadd.xlane.f32.xlu0 %v885
        %v887 = vpop.xlane.xlu0 %886
        %v888 = vsel %vm657, %v878, 0.0
        %889 = vadd.xlane.f32.xlu0 %v888
        %v890 = vpop.xlane.xlu0 %889
        %v891 = vrcp.pop %v881
        %v892 = vrcp.pop %v884
        %v893 = vrcp.pop %v887
        %v894 = vrcp.pop %v890
        %v895 = vmul.f32 %v872, %v891
        %v896 = vmul.f32 %v874, %v892
        %v897 = vmul.f32 %v876, %v893
        %v898 = vmul.f32 %v878, %v894
        %v899 = vpack.c.bf16 %v895, %v895
        %v900 = vpack.c.bf16 %v896, %v896
        %v901 = vpack.c.bf16 %v897, %v897
        %v902 = vpack.c.bf16 %v898, %v898
        %903 = vrot.lane.b32.xlu0 %v640, 64
        %v904 = vpop.permute.xlu0 %903
        %v906 = vsel %vm657, %v899, 0
        %vm908 = vcmask 1043456
        %v910 = vsel %vm908, %v904, 0
        %912 = vmatprep.subr.bf16.mxu0 0
        %913 = vmatpush1.bf16.msra.mxu0 %v910
        %914 = vmatprep.subr.bf16.mxu0 0
        %915 = vmatpush1.bf16.msra.mxu0 0
        %916 = vmatprep.subr.bf16.mxu0 0
        %917 = vmatpush1.bf16.msra.mxu0 0
        %918 = vmatprep.subr.bf16.mxu0 0
        %919 = vmatpush1.bf16.msra.mxu0 0
        %920 = vmatprep.subr.bf16.mxu0 0
        %921 = vmatpush1.bf16.msra.mxu0 0
        %922 = vmatprep.subr.bf16.mxu0 0
        %923 = vmatpush1.bf16.msra.mxu0 0
        %924 = vmatprep.subr.bf16.mxu0 0
        %925 = vmatpush1.bf16.msra.mxu0 0
        %926 = vmatprep.subr.bf16.mxu0 0
        %927 = vmatpush1.bf16.msra.mxu0 0
        %928 = vmatprep.subr.bf16.mxu0 0
        %929 = vmatpush1.bf16.msra.mxu0 0
        %930 = vmatprep.subr.bf16.mxu0 0
        %931 = vmatpush1.bf16.msra.mxu0 0
        %932 = vmatprep.subr.bf16.mxu0 0
        %933 = vmatpush1.bf16.msra.mxu0 0
        %934 = vmatprep.subr.bf16.mxu0 0
        %935 = vmatpush1.bf16.msra.mxu0 0
        %936 = vmatprep.subr.bf16.mxu0 0
        %937 = vmatpush1.bf16.msra.mxu0 0
        %938 = vmatprep.subr.bf16.mxu0 0
        %939 = vmatpush1.bf16.msra.mxu0 0
        %940 = vmatprep.subr.bf16.mxu0 0
        %941 = vmatpush1.bf16.msra.mxu0 0
        %942 = vmatprep.subr.bf16.mxu0 0
        %943 = vmatpush1.bf16.msra.mxu0 0
        %944 = vmatprep.mubr.bf16.mxu0 0
        %945 = vmatmul.mubr.bf16.gmra.mrb[0].mxu0 %v906
        %v946 = vpop.f32.mrb[0].mxu0
        %v947 = vadd.f32 0.0, %v946
        %v948 = vpop.f32.mrb[0].mxu0
        %v949 = vpop.f32.mrb[0].mxu0
        %v950 = vpop.f32.mrb[0].mxu0
        %951 = vdwg.mxu0
        %952 = vrot.lane.b32.xlu0 %v641, 64
        %v953 = vpop.permute.xlu0 %952
        %v955 = vsel %vm657, %v900, 0
        %v958 = vsel %vm908, %v953, 0
        %960 = vmatprep.subr.bf16.mxu0 0
        %961 = vmatpush1.bf16.msra.mxu0 %v958
        %962 = vmatprep.subr.bf16.mxu0 0
        %963 = vmatpush1.bf16.msra.mxu0 0
        %964 = vmatprep.subr.bf16.mxu0 0
        %965 = vmatpush1.bf16.msra.mxu0 0
        %966 = vmatprep.subr.bf16.mxu0 0
        %967 = vmatpush1.bf16.msra.mxu0 0
        %968 = vmatprep.subr.bf16.mxu0 0
        %969 = vmatpush1.bf16.msra.mxu0 0
        %970 = vmatprep.subr.bf16.mxu0 0
        %971 = vmatpush1.bf16.msra.mxu0 0
        %972 = vmatprep.subr.bf16.mxu0 0
        %973 = vmatpush1.bf16.msra.mxu0 0
        %974 = vmatprep.subr.bf16.mxu0 0
        %975 = vmatpush1.bf16.msra.mxu0 0
        %976 = vmatprep.subr.bf16.mxu0 0
        %977 = vmatpush1.bf16.msra.mxu0 0
        %978 = vmatprep.subr.bf16.mxu0 0
        %979 = vmatpush1.bf16.msra.mxu0 0
        %980 = vmatprep.subr.bf16.mxu0 0
        %981 = vmatpush1.bf16.msra.mxu0 0
        %982 = vmatprep.subr.bf16.mxu0 0
        %983 = vmatpush1.bf16.msra.mxu0 0
        %984 = vmatprep.subr.bf16.mxu0 0
        %985 = vmatpush1.bf16.msra.mxu0 0
        %986 = vmatprep.subr.bf16.mxu0 0
        %987 = vmatpush1.bf16.msra.mxu0 0
        %988 = vmatprep.subr.bf16.mxu0 0
        %989 = vmatpush1.bf16.msra.mxu0 0
        %990 = vmatprep.subr.bf16.mxu0 0
        %991 = vmatpush1.bf16.msra.mxu0 0
        %992 = vmatprep.mubr.bf16.mxu0 0
        %993 = vmatmul.mubr.bf16.gmra.mrb[0].mxu0 %v955
        %v994 = vpop.f32.mrb[0].mxu0
        %v995 = vadd.f32 0.0, %v994
        %v996 = vpop.f32.mrb[0].mxu0
        %v997 = vpop.f32.mrb[0].mxu0
        %v998 = vpop.f32.mrb[0].mxu0
        %999 = vdwg.mxu0
        %1000 = vrot.lane.b32.xlu0 %v642, 64
        %v1001 = vpop.permute.xlu0 %1000
        %v1003 = vsel %vm657, %v901, 0
        %v1006 = vsel %vm908, %v1001, 0
        %1008 = vmatprep.subr.bf16.mxu0 0
        %1009 = vmatpush1.bf16.msra.mxu0 %v1006
        %1010 = vmatprep.subr.bf16.mxu0 0
        %1011 = vmatpush1.bf16.msra.mxu0 0
        %1012 = vmatprep.subr.bf16.mxu0 0
        %1013 = vmatpush1.bf16.msra.mxu0 0
        %1014 = vmatprep.subr.bf16.mxu0 0
        %1015 = vmatpush1.bf16.msra.mxu0 0
        %1016 = vmatprep.subr.bf16.mxu0 0
        %1017 = vmatpush1.bf16.msra.mxu0 0
        %1018 = vmatprep.subr.bf16.mxu0 0
        %1019 = vmatpush1.bf16.msra.mxu0 0
        %1020 = vmatprep.subr.bf16.mxu0 0
        %1021 = vmatpush1.bf16.msra.mxu0 0
        %1022 = vmatprep.subr.bf16.mxu0 0
        %1023 = vmatpush1.bf16.msra.mxu0 0
        %1024 = vmatprep.subr.bf16.mxu0 0
        %1025 = vmatpush1.bf16.msra.mxu0 0
        %1026 = vmatprep.subr.bf16.mxu0 0
        %1027 = vmatpush1.bf16.msra.mxu0 0
        %1028 = vmatprep.subr.bf16.mxu0 0
        %1029 = vmatpush1.bf16.msra.mxu0 0
        %1030 = vmatprep.subr.bf16.mxu0 0
        %1031 = vmatpush1.bf16.msra.mxu0 0
        %1032 = vmatprep.subr.bf16.mxu0 0
        %1033 = vmatpush1.bf16.msra.mxu0 0
        %1034 = vmatprep.subr.bf16.mxu0 0
        %1035 = vmatpush1.bf16.msra.mxu0 0
        %1036 = vmatprep.subr.bf16.mxu0 0
        %1037 = vmatpush1.bf16.msra.mxu0 0
        %1038 = vmatprep.subr.bf16.mxu0 0
        %1039 = vmatpush1.bf16.msra.mxu0 0
        %1040 = vmatprep.mubr.bf16.mxu0 0
        %1041 = vmatmul.mubr.bf16.gmra.mrb[0].mxu0 %v1003
        %v1042 = vpop.f32.mrb[0].mxu0
        %v1043 = vadd.f32 0.0, %v1042
        %v1044 = vpop.f32.mrb[0].mxu0
        %v1045 = vpop.f32.mrb[0].mxu0
        %v1046 = vpop.f32.mrb[0].mxu0
        %1047 = vdwg.mxu0
        %1048 = vrot.lane.b32.xlu0 %v643, 64
        %v1049 = vpop.permute.xlu0 %1048
        %v1051 = vsel %vm657, %v902, 0
        %v1054 = vsel %vm908, %v1049, 0
        %1056 = vmatprep.subr.bf16.mxu0 0
        %1057 = vmatpush1.bf16.msra.mxu0 %v1054
        %1058 = vmatprep.subr.bf16.mxu0 0
        %1059 = vmatpush1.bf16.msra.mxu0 0
        %1060 = vmatprep.subr.bf16.mxu0 0
        %1061 = vmatpush1.bf16.msra.mxu0 0
        %1062 = vmatprep.subr.bf16.mxu0 0
        %1063 = vmatpush1.bf16.msra.mxu0 0
        %1064 = vmatprep.subr.bf16.mxu0 0
        %1065 = vmatpush1.bf16.msra.mxu0 0
        %1066 = vmatprep.subr.bf16.mxu0 0
        %1067 = vmatpush1.bf16.msra.mxu0 0
        %1068 = vmatprep.subr.bf16.mxu0 0
        %1069 = vmatpush1.bf16.msra.mxu0 0
        %1070 = vmatprep.subr.bf16.mxu0 0
        %1071 = vmatpush1.bf16.msra.mxu0 0
        %1072 = vmatprep.subr.bf16.mxu0 0
        %1073 = vmatpush1.bf16.msra.mxu0 0
        %1074 = vmatprep.subr.bf16.mxu0 0
        %1075 = vmatpush1.bf16.msra.mxu0 0
        %1076 = vmatprep.subr.bf16.mxu0 0
        %1077 = vmatpush1.bf16.msra.mxu0 0
        %1078 = vmatprep.subr.bf16.mxu0 0
        %1079 = vmatpush1.bf16.msra.mxu0 0
        %1080 = vmatprep.subr.bf16.mxu0 0
        %1081 = vmatpush1.bf16.msra.mxu0 0
        %1082 = vmatprep.subr.bf16.mxu0 0
        %1083 = vmatpush1.bf16.msra.mxu0 0
        %1084 = vmatprep.subr.bf16.mxu0 0
        %1085 = vmatpush1.bf16.msra.mxu0 0
        %1086 = vmatprep.subr.bf16.mxu0 0
        %1087 = vmatpush1.bf16.msra.mxu0 0
        %1088 = vmatprep.mubr.bf16.mxu0 0
        %1089 = vmatmul.mubr.bf16.gmra.mrb[0].mxu0 %v1051
        %v1090 = vpop.f32.mrb[0].mxu0
        %v1091 = vadd.f32 0.0, %v1090
        %v1092 = vpop.f32.mrb[0].mxu0
        %v1093 = vpop.f32.mrb[0].mxu0
        %v1094 = vpop.f32.mrb[0].mxu0
        %1095 = vdwg.mxu0
        %v1096 = vpack.c.bf16 %v947, %v947
        %v1097 = vpack.c.bf16 %v995, %v995
        %v1098 = vpack.c.bf16 %v1043, %v1043
        %v1099 = vpack.c.bf16 %v1091, %v1091
        %v1100 = vld [vmem:[%s6] sm:$0xf]
        %v1101 = vld [vmem:[%s6 + $0x4] sm:$0xf]
        %v1102 = vld [vmem:[%s6 + $0x8] sm:$0xf]
        %v1103 = vld [vmem:[%s6 + $0xc] sm:$0xf]
        %v1105 = vsel %vm657, %v1096, 0
        %v1108 = vsel %vm908, %v1100, 0
        %1110 = vmatprep.subr.bf16.mxu0 0
        %1111 = vmatpush1.bf16.msra.mxu0 %v1108
        %1112 = vmatprep.subr.bf16.mxu0 0
        %1113 = vmatpush1.bf16.msra.mxu0 0
        %1114 = vmatprep.subr.bf16.mxu0 0
        %1115 = vmatpush1.bf16.msra.mxu0 0
        %1116 = vmatprep.subr.bf16.mxu0 0
        %1117 = vmatpush1.bf16.msra.mxu0 0
        %1118 = vmatprep.subr.bf16.mxu0 0
        %1119 = vmatpush1.bf16.msra.mxu0 0
        %1120 = vmatprep.subr.bf16.mxu0 0
        %1121 = vmatpush1.bf16.msra.mxu0 0
        %1122 = vmatprep.subr.bf16.mxu0 0
        %1123 = vmatpush1.bf16.msra.mxu0 0
        %1124 = vmatprep.subr.bf16.mxu0 0
        %1125 = vmatpush1.bf16.msra.mxu0 0
        %1126 = vmatprep.subr.bf16.mxu0 0
        %1127 = vmatpush1.bf16.msra.mxu0 0
        %1128 = vmatprep.subr.bf16.mxu0 0
        %1129 = vmatpush1.bf16.msra.mxu0 0
        %1130 = vmatprep.subr.bf16.mxu0 0
        %1131 = vmatpush1.bf16.msra.mxu0 0
        %1132 = vmatprep.subr.bf16.mxu0 0
        %1133 = vmatpush1.bf16.msra.mxu0 0
        %1134 = vmatprep.subr.bf16.mxu0 0
        %1135 = vmatpush1.bf16.msra.mxu0 0
        %1136 = vmatprep.subr.bf16.mxu0 0
        %1137 = vmatpush1.bf16.msra.mxu0 0
        %1138 = vmatprep.subr.bf16.mxu0 0
        %1139 = vmatpush1.bf16.msra.mxu0 0
        %1140 = vmatprep.subr.bf16.mxu0 0
        %1141 = vmatpush1.bf16.msra.mxu0 0
        %1142 = vmatprep.mubr.bf16.mxu0 0
        %1143 = vmatmul.mubr.bf16.gmra.mrb[0].mxu0 %v1105
        %v1144 = vpop.f32.mrb[0].mxu0
        %v1145 = vadd.f32 0.0, %v1144
        %v1146 = vpop.f32.mrb[0].mxu0
        %v1147 = vpop.f32.mrb[0].mxu0
        %v1148 = vpop.f32.mrb[0].mxu0
        %1149 = vdwg.mxu0
        %v1151 = vsel %vm657, %v1097, 0
        %v1154 = vsel %vm908, %v1101, 0
        %1156 = vmatprep.subr.bf16.mxu0 0
        %1157 = vmatpush1.bf16.msra.mxu0 %v1154
        %1158 = vmatprep.subr.bf16.mxu0 0
        %1159 = vmatpush1.bf16.msra.mxu0 0
        %1160 = vmatprep.subr.bf16.mxu0 0
        %1161 = vmatpush1.bf16.msra.mxu0 0
        %1162 = vmatprep.subr.bf16.mxu0 0
        %1163 = vmatpush1.bf16.msra.mxu0 0
        %1164 = vmatprep.subr.bf16.mxu0 0
        %1165 = vmatpush1.bf16.msra.mxu0 0
        %1166 = vmatprep.subr.bf16.mxu0 0
        %1167 = vmatpush1.bf16.msra.mxu0 0
        %1168 = vmatprep.subr.bf16.mxu0 0
        %1169 = vmatpush1.bf16.msra.mxu0 0
        %1170 = vmatprep.subr.bf16.mxu0 0
        %1171 = vmatpush1.bf16.msra.mxu0 0
        %1172 = vmatprep.subr.bf16.mxu0 0
        %1173 = vmatpush1.bf16.msra.mxu0 0
        %1174 = vmatprep.subr.bf16.mxu0 0
        %1175 = vmatpush1.bf16.msra.mxu0 0
        %1176 = vmatprep.subr.bf16.mxu0 0
        %1177 = vmatpush1.bf16.msra.mxu0 0
        %1178 = vmatprep.subr.bf16.mxu0 0
        %1179 = vmatpush1.bf16.msra.mxu0 0
        %1180 = vmatprep.subr.bf16.mxu0 0
        %1181 = vmatpush1.bf16.msra.mxu0 0
        %1182 = vmatprep.subr.bf16.mxu0 0
        %1183 = vmatpush1.bf16.msra.mxu0 0
        %1184 = vmatprep.subr.bf16.mxu0 0
        %1185 = vmatpush1.bf16.msra.mxu0 0
        %1186 = vmatprep.subr.bf16.mxu0 0
        %1187 = vmatpush1.bf16.msra.mxu0 0
        %1188 = vmatprep.mubr.bf16.mxu0 0
        %1189 = vmatmul.mubr.bf16.gmra.mrb[0].mxu0 %v1151
        %v1190 = vpop.f32.mrb[0].mxu0
        %v1191 = vadd.f32 0.0, %v1190
        %v1192 = vpop.f32.mrb[0].mxu0
        %v1193 = vpop.f32.mrb[0].mxu0
        %v1194 = vpop.f32.mrb[0].mxu0
        %1195 = vdwg.mxu0
        %v1197 = vsel %vm657, %v1098, 0
        %v1200 = vsel %vm908, %v1102, 0
        %1202 = vmatprep.subr.bf16.mxu0 0
        %1203 = vmatpush1.bf16.msra.mxu0 %v1200
        %1204 = vmatprep.subr.bf16.mxu0 0
        %1205 = vmatpush1.bf16.msra.mxu0 0
        %1206 = vmatprep.subr.bf16.mxu0 0
        %1207 = vmatpush1.bf16.msra.mxu0 0
        %1208 = vmatprep.subr.bf16.mxu0 0
        %1209 = vmatpush1.bf16.msra.mxu0 0
        %1210 = vmatprep.subr.bf16.mxu0 0
        %1211 = vmatpush1.bf16.msra.mxu0 0
        %1212 = vmatprep.subr.bf16.mxu0 0
        %1213 = vmatpush1.bf16.msra.mxu0 0
        %1214 = vmatprep.subr.bf16.mxu0 0
        %1215 = vmatpush1.bf16.msra.mxu0 0
        %1216 = vmatprep.subr.bf16.mxu0 0
        %1217 = vmatpush1.bf16.msra.mxu0 0
        %1218 = vmatprep.subr.bf16.mxu0 0
        %1219 = vmatpush1.bf16.msra.mxu0 0
        %1220 = vmatprep.subr.bf16.mxu0 0
        %1221 = vmatpush1.bf16.msra.mxu0 0
        %1222 = vmatprep.subr.bf16.mxu0 0
        %1223 = vmatpush1.bf16.msra.mxu0 0
        %1224 = vmatprep.subr.bf16.mxu0 0
        %1225 = vmatpush1.bf16.msra.mxu0 0
        %1226 = vmatprep.subr.bf16.mxu0 0
        %1227 = vmatpush1.bf16.msra.mxu0 0
        %1228 = vmatprep.subr.bf16.mxu0 0
        %1229 = vmatpush1.bf16.msra.mxu0 0
        %1230 = vmatprep.subr.bf16.mxu0 0
        %1231 = vmatpush1.bf16.msra.mxu0 0
        %1232 = vmatprep.subr.bf16.mxu0 0
        %1233 = vmatpush1.bf16.msra.mxu0 0
        %1234 = vmatprep.mubr.bf16.mxu0 0
        %1235 = vmatmul.mubr.bf16.gmra.mrb[0].mxu0 %v1197
        %v1236 = vpop.f32.mrb[0].mxu0
        %v1237 = vadd.f32 0.0, %v1236
        %v1238 = vpop.f32.mrb[0].mxu0
        %v1239 = vpop.f32.mrb[0].mxu0
        %v1240 = vpop.f32.mrb[0].mxu0
        %1241 = vdwg.mxu0
        %v1243 = vsel %vm657, %v1099, 0
        %v1246 = vsel %vm908, %v1103, 0
        %1248 = vmatprep.subr.bf16.mxu0 0
        %1249 = vmatpush1.bf16.msra.mxu0 %v1246
        %1250 = vmatprep.subr.bf16.mxu0 0
        %1251 = vmatpush1.bf16.msra.mxu0 0
        %1252 = vmatprep.subr.bf16.mxu0 0
        %1253 = vmatpush1.bf16.msra.mxu0 0
        %1254 = vmatprep.subr.bf16.mxu0 0
        %1255 = vmatpush1.bf16.msra.mxu0 0
        %1256 = vmatprep.subr.bf16.mxu0 0
        %1257 = vmatpush1.bf16.msra.mxu0 0
        %1258 = vmatprep.subr.bf16.mxu0 0
        %1259 = vmatpush1.bf16.msra.mxu0 0
        %1260 = vmatprep.subr.bf16.mxu0 0
        %1261 = vmatpush1.bf16.msra.mxu0 0
        %1262 = vmatprep.subr.bf16.mxu0 0
        %1263 = vmatpush1.bf16.msra.mxu0 0
        %1264 = vmatprep.subr.bf16.mxu0 0
        %1265 = vmatpush1.bf16.msra.mxu0 0
        %1266 = vmatprep.subr.bf16.mxu0 0
        %1267 = vmatpush1.bf16.msra.mxu0 0
        %1268 = vmatprep.subr.bf16.mxu0 0
        %1269 = vmatpush1.bf16.msra.mxu0 0
        %1270 = vmatprep.subr.bf16.mxu0 0
        %1271 = vmatpush1.bf16.msra.mxu0 0
        %1272 = vmatprep.subr.bf16.mxu0 0
        %1273 = vmatpush1.bf16.msra.mxu0 0
        %1274 = vmatprep.subr.bf16.mxu0 0
        %1275 = vmatpush1.bf16.msra.mxu0 0
        %1276 = vmatprep.subr.bf16.mxu0 0
        %1277 = vmatpush1.bf16.msra.mxu0 0
        %1278 = vmatprep.subr.bf16.mxu0 0
        %1279 = vmatpush1.bf16.msra.mxu0 0
        %1280 = vmatprep.mubr.bf16.mxu0 0
        %1281 = vmatmul.mubr.bf16.gmra.mrb[0].mxu0 %v1243
        %v1282 = vpop.f32.mrb[0].mxu0
        %v1283 = vadd.f32 0.0, %v1282
        %v1284 = vpop.f32.mrb[0].mxu0
        %v1285 = vpop.f32.mrb[0].mxu0
        %v1286 = vpop.f32.mrb[0].mxu0
        %1287 = vdwg.mxu0
        %v1288 = vsel %vm486, %v1145, 0.0
        %v1289 = vsel %vm486, %v1191, 0.0
        %v1290 = vadd.f32 %v1288, %v1289
        %v1291 = vsel %vm486, %v1237, 0.0
        %v1292 = vadd.f32 %v1290, %v1291
        %v1293 = vsel %vm486, %v1283, 0.0
        %v1294 = vadd.f32 %v1292, %v1293
        %v1295 = vlaneseq
        %v1296 = vshrl.u32 %v1295, 7
        %v1297 = vsub.s32 0, %v1296
        %v1298 = vrot.slane %v460, %v1297
        %v1299 = vadd.f32 %v1294, %v1298
        %v1300 = vadd.f32 %v1299, %v565
        %v1301 = vpack.c.bf16 %v1300, %v1300
        %v1302 = vld [vmem:[#allocation7] sm:$0xf]
        %v1303 = vld [vmem:[#allocation7 + $0x4] sm:$0xf]
        %v1304 = vld [vmem:[#allocation7 + $0x8] sm:$0xf]
        %v1305 = vld [vmem:[#allocation7 + $0xc] sm:$0xf]
        %v1306 = vlaneseq
        %v1307 = vshrl.u32 %v1306, 7
        %v1308 = vsub.s32 0, %v1307
        %v1309 = vrot.slane %v461, %v1308
        %v1314 = vunpack.c.l.b16 %v1302
        %v1315 = vunpack.c.l.b16 %v1303
        %v1316 = vunpack.c.l.b16 %v1304
        %v1317 = vunpack.c.l.b16 %v1305
        %v1318 = vpack.c.b16 %v1315, %v1314
        %v1319 = vpack.c.b16 %v1317, %v1316
        %v1323 = vsel %vm486, %v1301, 0
        %1325 = vmatprep.subr.bf16.mxu0 0
        %1326 = vmatpush1.bf16.msra.mxu0 %v1318
        %1327 = vmatprep.subr.bf16.mxu0 0
        %1328 = vmatpush1.bf16.msra.mxu0 %v1319
        %1329 = vmatprep.subr.bf16.mxu0 0
        %1330 = vmatpush1.bf16.msra.mxu0 0
        %1331 = vmatprep.subr.bf16.mxu0 0
        %1332 = vmatpush1.bf16.msra.mxu0 0
        %1333 = vmatprep.subr.bf16.mxu0 0
        %1334 = vmatpush1.bf16.msra.mxu0 0
        %1335 = vmatprep.subr.bf16.mxu0 0
        %1336 = vmatpush1.bf16.msra.mxu0 0
        %1337 = vmatprep.subr.bf16.mxu0 0
        %1338 = vmatpush1.bf16.msra.mxu0 0
        %1339 = vmatprep.subr.bf16.mxu0 0
        %1340 = vmatpush1.bf16.msra.mxu0 0
        %1341 = vmatprep.subr.bf16.mxu0 0
        %1342 = vmatpush1.bf16.msra.mxu0 0
        %1343 = vmatprep.subr.bf16.mxu0 0
        %1344 = vmatpush1.bf16.msra.mxu0 0
        %1345 = vmatprep.subr.bf16.mxu0 0
        %1346 = vmatpush1.bf16.msra.mxu0 0
        %1347 = vmatprep.subr.bf16.mxu0 0
        %1348 = vmatpush1.bf16.msra.mxu0 0
        %1349 = vmatprep.subr.bf16.mxu0 0
        %1350 = vmatpush1.bf16.msra.mxu0 0
        %1351 = vmatprep.subr.bf16.mxu0 0
        %1352 = vmatpush1.bf16.msra.mxu0 0
        %1353 = vmatprep.subr.bf16.mxu0 0
        %1354 = vmatpush1.bf16.msra.mxu0 0
        %1355 = vmatprep.subr.bf16.mxu0 0
        %1356 = vmatpush1.bf16.msra.mxu0 0
        %1357 = vmatprep.mubr.bf16.mxu0 0
        %1358 = vmatmul.mubr.bf16.gmra.mrb[0].mxu0 %v1323
        %v1359 = vpop.f32.mrb[0].mxu0
        %v1360 = vadd.f32 %v1309, %v1359
        %v1361 = vpop.f32.mrb[0].mxu0
        %v1362 = vpop.f32.mrb[0].mxu0
        %v1363 = vpop.f32.mrb[0].mxu0
        %1364 = vdwg.mxu0
        %v1365 = vmax.f32 %v1360, 0.0
        %v1366 = vpack.c.bf16 %v1365, %v1365
        %v1367 = vld [vmem:[%s8] sm:$0xf]
        %v1368 = vld [vmem:[%s8 + $0x4] sm:$0xf]
        %v1369 = vld [vmem:[%s8 + $0x8] sm:$0xf]
        %v1370 = vld [vmem:[%s8 + $0xc] sm:$0xf]
        %v1371 = vld [vmem:[%s8 + $0x10] sm:$0xf]
        %v1372 = vld [vmem:[%s8 + $0x14] sm:$0xf]
        %v1373 = vld [vmem:[%s8 + $0x18] sm:$0xf]
        %v1374 = vld [vmem:[%s8 + $0x1c] sm:$0xf]
        %v1375 = vlaneseq
        %v1376 = vshrl.u32 %v1375, 7
        %v1377 = vsub.s32 0, %v1376
        %v1378 = vrot.slane %v462, %v1377
        %v1387 = vunpack.c.l.b16 %v1367
        %v1388 = vunpack.c.l.b16 %v1368
        %v1389 = vunpack.c.l.b16 %v1369
        %v1390 = vunpack.c.l.b16 %v1370
        %v1391 = vunpack.c.l.b16 %v1371
        %v1392 = vunpack.c.l.b16 %v1372
        %v1393 = vunpack.c.l.b16 %v1373
        %v1394 = vunpack.c.l.b16 %v1374
        %v1395 = vpack.c.b16 %v1388, %v1387
        %v1396 = vpack.c.b16 %v1390, %v1389
        %v1397 = vpack.c.b16 %v1392, %v1391
        %v1398 = vpack.c.b16 %v1394, %v1393
        %vm1403 = vcmask 523264
        %v1405 = vsel %vm1403, %v1366, 0
        %1407 = vmatprep.subr.bf16.mxu0 0
        %1408 = vmatpush1.bf16.msra.mxu0 %v1395
        %1409 = vmatprep.subr.bf16.mxu0 0
        %1410 = vmatpush1.bf16.msra.mxu0 %v1396
        %1411 = vmatprep.subr.bf16.mxu0 0
        %1412 = vmatpush1.bf16.msra.mxu0 %v1397
        %1413 = vmatprep.subr.bf16.mxu0 0
        %1414 = vmatpush1.bf16.msra.mxu0 %v1398
        %1415 = vmatprep.subr.bf16.mxu0 0
        %1416 = vmatpush1.bf16.msra.mxu0 0
        %1417 = vmatprep.subr.bf16.mxu0 0
        %1418 = vmatpush1.bf16.msra.mxu0 0
        %1419 = vmatprep.subr.bf16.mxu0 0
        %1420 = vmatpush1.bf16.msra.mxu0 0
        %1421 = vmatprep.subr.bf16.mxu0 0
        %1422 = vmatpush1.bf16.msra.mxu0 0
        %1423 = vmatprep.subr.bf16.mxu0 0
        %1424 = vmatpush1.bf16.msra.mxu0 0
        %1425 = vmatprep.subr.bf16.mxu0 0
        %1426 = vmatpush1.bf16.msra.mxu0 0
        %1427 = vmatprep.subr.bf16.mxu0 0
        %1428 = vmatpush1.bf16.msra.mxu0 0
        %1429 = vmatprep.subr.bf16.mxu0 0
        %1430 = vmatpush1.bf16.msra.mxu0 0
        %1431 = vmatprep.subr.bf16.mxu0 0
        %1432 = vmatpush1.bf16.msra.mxu0 0
        %1433 = vmatprep.subr.bf16.mxu0 0
        %1434 = vmatpush1.bf16.msra.mxu0 0
        %1435 = vmatprep.subr.bf16.mxu0 0
        %1436 = vmatpush1.bf16.msra.mxu0 0
        %1437 = vmatprep.subr.bf16.mxu0 0
        %1438 = vmatpush1.bf16.msra.mxu0 0
        %1439 = vmatprep.mubr.bf16.mxu0 0
        %1440 = vmatmul.mubr.bf16.gmra.mrb[0].mxu0 %v1405
        %v1441 = vpop.f32.mrb[0].mxu0
        %v1442 = vadd.f32 %v1378, %v1441
        %v1443 = vpop.f32.mrb[0].mxu0
        %v1444 = vpop.f32.mrb[0].mxu0
        %v1445 = vpop.f32.mrb[0].mxu0
        %1446 = vdwg.mxu0
        %v1447 = vadd.f32 %v1300, %v1442
        %v1448 = vsel %vm486, %v1447, 0.0
        %1449 = vadd.xlane.f32.xlu0 %v1448
        %v1450 = vpop.xlane.xlu0 %1449
        %v1451 = vrcp.pop 32.0
        %v1452 = vmul.f32 %v1450, %v1451
        %v1453 = vsub.f32 %v1447, %v1452
        %v1454 = vmul.f32 %v1453, %v1453
        %v1455 = vsel %vm486, %v1454, 0.0
        %1456 = vadd.xlane.f32.xlu0 %v1455
        %v1457 = vpop.xlane.xlu0 %1456
        %v1458 = vmul.f32 %v1457, %v1451
        %v1459 = vadd.f32 %v1458, 1e-05
        %v1460 = vrsqrt.pop %v1459
        %v1461 = vmul.f32 %v1453, %v1460
        %v1462 = vlaneseq
        %v1463 = vshrl.u32 %v1462, 7
        %v1464 = vsub.s32 0, %v1463
        %v1465 = vrot.slane %v463, %v1464
        %v1466 = vmul.f32 %v1461, %v1465
        %v1467 = vlaneseq
        %v1468 = vshrl.u32 %v1467, 7
        %v1469 = vsub.s32 0, %v1468
        %v1470 = vrot.slane %v464, %v1469
        %v1471 = vadd.f32 %v1466, %v1470
        %1472 = vst.msk [vmem:[%s448] sm:$0xff] %vm486, %v1471
        %s1473 = sand.u32 %s268, 1
        %s1474 = scalar_lea.sflag [#allocation4], %s1473
        %s1475 = sand.u32 %s268, 1
        %s1476 = smul.addr %s1475, 8
        %s1477 = scalar_lea.vmem [#allocation8], %s1476
        // Predicated region
        $region73: #{tpu_custom_call.1} parent=59 // pred_check
          %p1478 = pneg %p278
        $region74: #{tpu_custom_call.1} parent=59 // pred_check_branch
          %1480 = sbr.rel (%p1478) target = $region76
        $region75: #{tpu_custom_call.1} parent=59 // pred_region
          %s1482 = ssub.s32 128, 128
          %1483 = vsyncadd %s1474, %s1482
          %s1484 = smul.addr %s30, 128
          %s1485 = scalar_lea.hbm %s10, %s1484
          %s1487 = sshll.u32 %s1477, 4
          %s1488 = int_to_ptr.vmem [resolvable:$true] %s1487
          %1490 = dma.vmem_to_hbm [thread:$0]  %s1488, 128, %s1485, %s1474
        $region76: #{tpu_custom_call.1} parent=59 // pred_fallthru
          _
      $region60: #{tpu_custom_call.1} parent=5 // pred_fallthru
        _
      %p1491 = scmp.le.s32.totalorder 2, %s25
      // Predicated region
      $region77: #{tpu_custom_call.1} parent=5 // pred_check
        %p1492 = pneg %p1491
      $region78: #{tpu_custom_call.1} parent=5 // pred_check_branch
        %1494 = sbr.rel (%p1492) target = $region80
      $region79: #{tpu_custom_call.1} parent=5 // pred_region
        %s1495 = ssub.s32 %s25, 2
        // Predicated region
        $region81: #{tpu_custom_call.1} parent=79 // pred_check
          %p1496 = pneg %p284
        $region82: #{tpu_custom_call.1} parent=79 // pred_check_branch
          %1498 = sbr.rel (%p1496) target = $region84
        $region83: #{tpu_custom_call.1} parent=79 // pred_region
          %s1499 = sand.u32 %s269, 1
          %s1500 = scalar_lea.sflag [#allocation4], %s1499
          %s1501 = sand.u32 %s269, 1
          %s1502 = smul.addr %s1501, 8
          %s1503 = scalar_lea.vmem [#allocation8], %s1502
          %1504 = dma.done %s1500, 128
        $region84: #{tpu_custom_call.1} parent=79 // pred_fallthru
          _
      $region80: #{tpu_custom_call.1} parent=5 // pred_fallthru
        _
    $region6: #{tpu_custom_call.1} parent=1 // loop_footer
      %s29 = sadd.s32 1, %s25
    $region7: #{tpu_custom_call.1} parent=1 // loop_footer_branch
      %24 = sbr.rel target = $region3
    $region8: #{tpu_custom_call.1} parent=1 // loop_exit
      _
    %1505 = vsyncpa [#allocation3], 1
    %s1506 = scalar_lea.sflag [#allocation3], 1
    %1507 = vsyncpa %s1506, 1
    %1508 = vsyncpa [#allocation6], 1
    %s1509 = scalar_lea.sflag [#allocation6], 1
    %1510 = vsyncpa %s1509, 1
    %1511 = vsyncpa [#allocation4], 1
    %s1512 = scalar_lea.sflag [#allocation4], 1
    %1513 = vsyncpa %s1512, 1

// kernel: tpu_custom_call.1
$region0: #{tpu_custom_call.1}
  #allocation0 [shape = 'u32[]', space=smem, size = 0x4, offset = 0x4, fixed_abs, tag = 'smem constant byte address 0x4 - core index']
  #allocation1 [shape = 'u32[144,128]{1,0:T(1,128)}', space=vmem, size = 0x12000, scoped, tag = 'internal scratch']
  %s0 = inlined_call_operand.vmem [shape: f32[2,8,1], index: 0, kind: input, shape index: {}]
  %s1 = inlined_call_operand.hbm [shape: f32[2,1,8], index: 1, kind: input, shape index: {}]
  %s2 = inlined_call_operand.hbm [shape: bf16[2,8,8], index: 2, kind: input, shape index: {}]
  %s3 = inlined_call_operand.vmem [shape: f32[2,8,32], index: 3, kind: input, shape index: {}]
  %s4 = inlined_call_operand.vmem [shape: bf16[32,32], index: 4, kind: input, shape index: {}]
  %s5 = inlined_call_operand.vmem [shape: bf16[32,96], index: 5, kind: input, shape index: {}]
  %s6 = inlined_call_operand.vmem [shape: bf16[4,8,32], index: 6, kind: input, shape index: {}]
  %s7 = inlined_call_operand.hbm [shape: bf16[32,64], index: 7, kind: input, shape index: {}]
  %s8 = inlined_call_operand.vmem [shape: bf16[64,32], index: 8, kind: input, shape index: {}]
  %s9 = inlined_call_operand.vmem [shape: f32[7,96], index: 9, kind: input, shape index: {}]
  %s10 = inlined_call_operand.hbm [shape: f32[2,8,32], index: 10, kind: output, shape index: {}]
  %s11 = sld [smem:[#allocation0]]
  $region85: #{tpu_custom_call.1} parent=0
    _
  %s13 = ssub.s32 1, %s11
  %s14 = scalar_select 0, %s13, %s11
  $region1: #{tpu_custom_call.1} parent=0
    #allocation2 [shape = 'u8[1024]{0}', space=vmem, size = 0x400, scoped, tag = 'input window, operand 1']
    #allocation3 [shape = 's32[2]{0}', space=sflag, size = 0x8, scoped, tag = 'scoped memory for tpu_custom_call.1']
    #allocation4 [shape = 's32[2]{0}', space=sflag, size = 0x8, scoped, tag = 'scoped memory for tpu_custom_call.1']
    #allocation5 [shape = 'u8[4096]{0}', space=vmem, size = 0x1000, scoped, tag = 'input window, operand 2']
    #allocation6 [shape = 's32[2]{0}', space=sflag, size = 0x8, scoped, tag = 'scoped memory for tpu_custom_call.1']
    #allocation7 [shape = 'u8[8192]{0}', space=vmem, size = 0x2000, scoped, tag = 'input window, operand 7, single buffered']
    #allocation8 [shape = 'u8[8192]{0}', space=vmem, size = 0x2000, scoped, tag = 'output window, operand 0']
    %15 = vsyncpa [#allocation3], 0
    %s16 = scalar_lea.sflag [#allocation3], 1
    %17 = vsyncpa %s16, 0
    %18 = vsyncpa [#allocation6], 0
    %s19 = scalar_lea.sflag [#allocation6], 1
    %20 = vsyncpa %s19, 0
    %21 = vsyncpa [#allocation4], 0
    %s22 = scalar_lea.sflag [#allocation4], 1
    %23 = vsyncpa %s22, 0
    loop: start=0, step=1, limit=4
    $region2: #{tpu_custom_call.1} parent=1 // loop_pre_header
      _
    $region3: #{tpu_custom_call.1} parent=1 // loop_header
      %s25 = sphi 0, %s29
      %p26 = scmp.ge.s32.totalorder %s25, 4
      %s35 = sphi 0, %s37
      %s38 = sphi 0, %s35
      %s39 = sphi 0, %s38
      %s55 = sphi 0, %s39
      %s61 = sphi 0, %s63
      %s64 = sphi 0, %s61
      %s65 = sphi 0, %s64
      %s81 = sphi 0, %s65
      %s87 = sphi 0, %s89
      %s90 = sphi 0, %s87
      %s91 = sphi 0, %s90
      %s107 = sphi 0, %s91
      %s113 = sphi 0, %s115
      %s116 = sphi 0, %s113
      %s117 = sphi 0, %s116
      %s133 = sphi 0, %s117
      %s137 = sphi 0, %s137
      %s139 = sphi 0, %s137
      %s140 = sphi 0, %s139
      %s154 = sphi 0, %s140
      %s158 = sphi 0, %s158
      %s160 = sphi 0, %s158
      %s161 = sphi 0, %s160
      %s175 = sphi 0, %s161
      %s179 = sphi 0, %s179
      %s181 = sphi 0, %s179
      %s182 = sphi 0, %s181
      %s196 = sphi 0, %s182
      %s200 = sphi 0, %s200
      %s202 = sphi 0, %s200
      %s203 = sphi 0, %s202
      %s217 = sphi 0, %s203
      %s221 = sphi 0, %s221
      %s223 = sphi 0, %s221
      %s224 = sphi 0, %s223
      %s238 = sphi 0, %s224
      %s242 = sphi 0, %s242
      %s244 = sphi 0, %s242
      %s245 = sphi 0, %s244
      %s259 = sphi 0, %s245
      %s265 = sphi 0, %s267
      %s268 = sphi 0, %s265
      %s269 = sphi 0, %s268
      %s285 = sphi 0, %s269
    $region4: #{tpu_custom_call.1} parent=1 // loop_header_branch
      %28 = sbr.rel (%p26) target = $region8
    $region5: #{tpu_custom_call.1} parent=1 // loop_body
      %s30 = ssub.s32 %s25, 1
      %s31 = ssub.s32 %s25, 2
      %s32 = sadd.s32 %s25, 1
      %s33 = ssub.s32 %s25, %s32
      %p34 = scmp.eq.s32.totalorder %s33, 0
      %s36 = sadd.s32 %s35, 1
      %s37 = scalar_select %p34, %s35, %s36
      %p40 = pneg %p34
      %p41 = scmp.eq.s32.totalorder %s25, 1
      %p42 = por %p40, %p41
      %p43 = scmp.ne.s32.totalorder %s35, %s38
      %p44 = scmp.eq.s32.totalorder %s25, 0
      %p45 = por %p43, %p44
      %p46 = scmp.ne.s32.totalorder %s35, %s38
      %p47 = scmp.eq.s32.totalorder %s30, 1
      %p48 = por %p46, %p47
      %p49 = scmp.ne.s32.totalorder %s38, %s39
      %p50 = scmp.eq.s32.totalorder %s30, 0
      %p51 = por %p49, %p50
      %p52 = scmp.ne.s32.totalorder %s38, %s39
      %p53 = scmp.eq.s32.totalorder %s31, 1
      %p54 = por %p52, %p53
      %p56 = scmp.ne.s32.totalorder %s39, %s55
      %p57 = scmp.eq.s32.totalorder %s31, 0
      %p58 = por %p56, %p57
      %s59 = ssub.s32 %s25, %s32
      %p60 = scmp.eq.s32.totalorder %s59, 0
      %s62 = sadd.s32 %s61, 1
      %s63 = scalar_select %p60, %s61, %s62
      %p66 = pneg %p60
      %p67 = scmp.eq.s32.totalorder %s25, 1
      %p68 = por %p66, %p67
      %p69 = scmp.ne.s32.totalorder %s61, %s64
      %p70 = scmp.eq.s32.totalorder %s25, 0
      %p71 = por %p69, %p70
      %p72 = scmp.ne.s32.totalorder %s61, %s64
      %p73 = scmp.eq.s32.totalorder %s30, 1
      %p74 = por %p72, %p73
      %p75 = scmp.ne.s32.totalorder %s64, %s65
      %p76 = scmp.eq.s32.totalorder %s30, 0
      %p77 = por %p75, %p76
      %p78 = scmp.ne.s32.totalorder %s64, %s65
      %p79 = scmp.eq.s32.totalorder %s31, 1
      %p80 = por %p78, %p79
      %p82 = scmp.ne.s32.totalorder %s65, %s81
      %p83 = scmp.eq.s32.totalorder %s31, 0
      %p84 = por %p82, %p83
      %s85 = ssub.s32 %s25, %s32
      %p86 = scmp.eq.s32.totalorder %s85, 0
      %s88 = sadd.s32 %s87, 1
      %s89 = scalar_select %p86, %s87, %s88
      %p92 = pneg %p86
      %p93 = scmp.eq.s32.totalorder %s25, 1
      %p94 = por %p92, %p93
      %p95 = scmp.ne.s32.totalorder %s87, %s90
      %p96 = scmp.eq.s32.totalorder %s25, 0
      %p97 = por %p95, %p96
      %p98 = scmp.ne.s32.totalorder %s87, %s90
      %p99 = scmp.eq.s32.totalorder %s30, 1
      %p100 = por %p98, %p99
      %p101 = scmp.ne.s32.totalorder %s90, %s91
      %p102 = scmp.eq.s32.totalorder %s30, 0
      %p103 = por %p101, %p102
      %p104 = scmp.ne.s32.totalorder %s90, %s91
      %p105 = scmp.eq.s32.totalorder %s31, 1
      %p106 = por %p104, %p105
      %p108 = scmp.ne.s32.totalorder %s91, %s107
      %p109 = scmp.eq.s32.totalorder %s31, 0
      %p110 = por %p108, %p109
      %s111 = ssub.s32 %s25, %s32
      %p112 = scmp.eq.s32.totalorder %s111, 0
      %s114 = sadd.s32 %s113, 1
      %s115 = scalar_select %p112, %s113, %s114
      %p118 = pneg %p112
      %p119 = scmp.eq.s32.totalorder %s25, 1
      %p120 = por %p118, %p119
      %p121 = scmp.ne.s32.totalorder %s113, %s116
      %p122 = scmp.eq.s32.totalorder %s25, 0
      %p123 = por %p121, %p122
      %p124 = scmp.ne.s32.totalorder %s113, %s116
      %p125 = scmp.eq.s32.totalorder %s30, 1
      %p126 = por %p124, %p125
      %p127 = scmp.ne.s32.totalorder %s116, %s117
      %p128 = scmp.eq.s32.totalorder %s30, 0
      %p129 = por %p127, %p128
      %p130 = scmp.ne.s32.totalorder %s116, %s117
      %p131 = scmp.eq.s32.totalorder %s31, 1
      %p132 = por %p130, %p131
      %p134 = scmp.ne.s32.totalorder %s117, %s133
      %p135 = scmp.eq.s32.totalorder %s31, 0
      %p136 = por %p134, %p135
      %s138 = sadd.s32 %s137, 1
      %p141 = scmp.eq.s32.totalorder %s25, 1
      %p142 = scmp.ne.s32.totalorder %s137, %s139
      %p143 = scmp.eq.s32.totalorder %s25, 0
      %p144 = por %p142, %p143
      %p145 = scmp.ne.s32.totalorder %s137, %s139
      %p146 = scmp.eq.s32.totalorder %s30, 1
      %p147 = por %p145, %p146
      %p148 = scmp.ne.s32.totalorder %s139, %s140
      %p149 = scmp.eq.s32.totalorder %s30, 0
      %p150 = por %p148, %p149
      %p151 = scmp.ne.s32.totalorder %s139, %s140
      %p152 = scmp.eq.s32.totalorder %s31, 1
      %p153 = por %p151, %p152
      %p155 = scmp.ne.s32.totalorder %s140, %s154
      %p156 = scmp.eq.s32.totalorder %s31, 0
      %p157 = por %p155, %p156
      %s159 = sadd.s32 %s158, 1
      %p162 = scmp.eq.s32.totalorder %s25, 1
      %p163 = scmp.ne.s32.totalorder %s158, %s160
      %p164 = scmp.eq.s32.totalorder %s25, 0
      %p165 = por %p163, %p164
      %p166 = scmp.ne.s32.totalorder %s158, %s160
      %p167 = scmp.eq.s32.totalorder %s30, 1
      %p168 = por %p166, %p167
      %p169 = scmp.ne.s32.totalorder %s160, %s161
      %p170 = scmp.eq.s32.totalorder %s30, 0
      %p171 = por %p169, %p170
      %p172 = scmp.ne.s32.totalorder %s160, %s161
      %p173 = scmp.eq.s32.totalorder %s31, 1
      %p174 = por %p172, %p173
      %p176 = scmp.ne.s32.totalorder %s161, %s175
      %p177 = scmp.eq.s32.totalorder %s31, 0
      %p178 = por %p176, %p177
      %s180 = sadd.s32 %s179, 1
      %p183 = scmp.eq.s32.totalorder %s25, 1
      %p184 = scmp.ne.s32.totalorder %s179, %s181
      %p185 = scmp.eq.s32.totalorder %s25, 0
      %p186 = por %p184, %p185
      %p187 = scmp.ne.s32.totalorder %s179, %s181
      %p188 = scmp.eq.s32.totalorder %s30, 1
      %p189 = por %p187, %p188
      %p190 = scmp.ne.s32.totalorder %s181, %s182
      %p191 = scmp.eq.s32.totalorder %s30, 0
      %p192 = por %p190, %p191
      %p193 = scmp.ne.s32.totalorder %s181, %s182
      %p194 = scmp.eq.s32.totalorder %s31, 1
      %p195 = por %p193, %p194
      %p197 = scmp.ne.s32.totalorder %s182, %s196
      %p198 = scmp.eq.s32.totalorder %s31, 0
      %p199 = por %p197, %p198
      %s201 = sadd.s32 %s200, 1
      %p204 = scmp.eq.s32.totalorder %s25, 1
      %p205 = scmp.ne.s32.totalorder %s200, %s202
      %p206 = scmp.eq.s32.totalorder %s25, 0
      %p207 = por %p205, %p206
      %p208 = scmp.ne.s32.totalorder %s200, %s202
      %p209 = scmp.eq.s32.totalorder %s30, 1
      %p210 = por %p208, %p209
      %p211 = scmp.ne.s32.totalorder %s202, %s203
      %p212 = scmp.eq.s32.totalorder %s30, 0
      %p213 = por %p211, %p212
      %p214 = scmp.ne.s32.totalorder %s202, %s203
      %p215 = scmp.eq.s32.totalorder %s31, 1
      %p216 = por %p214, %p215
      %p218 = scmp.ne.s32.totalorder %s203, %s217
      %p219 = scmp.eq.s32.totalorder %s31, 0
      %p220 = por %p218, %p219
      %s222 = sadd.s32 %s221, 1
      %p225 = scmp.eq.s32.totalorder %s25, 1
      %p226 = scmp.ne.s32.totalorder %s221, %s223
      %p227 = scmp.eq.s32.totalorder %s25, 0
      %p228 = por %p226, %p227
      %p229 = scmp.ne.s32.totalorder %s221, %s223
      %p230 = scmp.eq.s32.totalorder %s30, 1
      %p231 = por %p229, %p230
      %p232 = scmp.ne.s32.totalorder %s223, %s224
      %p233 = scmp.eq.s32.totalorder %s30, 0
      %p234 = por %p232, %p233
      %p235 = scmp.ne.s32.totalorder %s223, %s224
      %p236 = scmp.eq.s32.totalorder %s31, 1
      %p237 = por %p235, %p236
      %p239 = scmp.ne.s32.totalorder %s224, %s238
      %p240 = scmp.eq.s32.totalorder %s31, 0
      %p241 = por %p239, %p240
      %s243 = sadd.s32 %s242, 1
      %p246 = scmp.eq.s32.totalorder %s25, 1
      %p247 = scmp.ne.s32.totalorder %s242, %s244
      %p248 = scmp.eq.s32.totalorder %s25, 0
      %p249 = por %p247, %p248
      %p250 = scmp.ne.s32.totalorder %s242, %s244
      %p251 = scmp.eq.s32.totalorder %s30, 1
      %p252 = por %p250, %p251
      %p253 = scmp.ne.s32.totalorder %s244, %s245
      %p254 = scmp.eq.s32.totalorder %s30, 0
      %p255 = por %p253, %p254
      %p256 = scmp.ne.s32.totalorder %s244, %s245
      %p257 = scmp.eq.s32.totalorder %s31, 1
      %p258 = por %p256, %p257
      %p260 = scmp.ne.s32.totalorder %s245, %s259
      %p261 = scmp.eq.s32.totalorder %s31, 0
      %p262 = por %p260, %p261
      %s263 = ssub.s32 %s25, %s32
      %p264 = scmp.eq.s32.totalorder %s263, 0
      %s266 = sadd.s32 %s265, 1
      %s267 = scalar_select %p264, %s265, %s266
      %p270 = pneg %p264
      %p271 = scmp.eq.s32.totalorder %s25, 1
      %p272 = por %p270, %p271
      %p273 = scmp.ne.s32.totalorder %s265, %s268
      %p274 = scmp.eq.s32.totalorder %s25, 0
      %p275 = por %p273, %p274
      %p276 = scmp.ne.s32.totalorder %s265, %s268
      %p277 = scmp.eq.s32.totalorder %s30, 1
      %p278 = por %p276, %p277
      %p279 = scmp.ne.s32.totalorder %s268, %s269
      %p280 = scmp.eq.s32.totalorder %s30, 0
      %p281 = por %p279, %p280
      %p282 = scmp.ne.s32.totalorder %s268, %s269
      %p283 = scmp.eq.s32.totalorder %s31, 1
      %p284 = por %p282, %p283
      %p286 = scmp.ne.s32.totalorder %s269, %s285
      %p287 = scmp.eq.s32.totalorder %s31, 0
      %p288 = por %p286, %p287
      %p289 = scmp.le.s32.totalorder 1, %s25
      %p290 = scmp.lt.s32.totalorder %s25, 3
      %p291 = pnand %p289, %p290
      %p292 = pneg %p291
      // Predicated region
      $region9: #{tpu_custom_call.1} parent=5 // pred_check
        _
      $region10: #{tpu_custom_call.1} parent=5 // pred_check_branch
        %294 = sbr.rel (%p291) target = $region12
      $region11: #{tpu_custom_call.1} parent=5 // pred_region
        %s295 = ssub.s32 %s25, 1
        // Predicated region
        $region13: #{tpu_custom_call.1} parent=11 // pred_check
          %p296 = pneg %p150
        $region14: #{tpu_custom_call.1} parent=11 // pred_check_branch
          %298 = sbr.rel (%p296) target = $region16
        $region15: #{tpu_custom_call.1} parent=11 // pred_region
          _
        $region16: #{tpu_custom_call.1} parent=11 // pred_fallthru
          _
        // Predicated region
        $region17: #{tpu_custom_call.1} parent=11 // pred_check
          %p299 = pneg %p171
        $region18: #{tpu_custom_call.1} parent=11 // pred_check_branch
          %301 = sbr.rel (%p299) target = $region20
        $region19: #{tpu_custom_call.1} parent=11 // pred_region
          _
        $region20: #{tpu_custom_call.1} parent=11 // pred_fallthru
          _
        // Predicated region
        $region21: #{tpu_custom_call.1} parent=11 // pred_check
          %p302 = pneg %p192
        $region22: #{tpu_custom_call.1} parent=11 // pred_check_branch
          %304 = sbr.rel (%p302) target = $region24
        $region23: #{tpu_custom_call.1} parent=11 // pred_region
          _
        $region24: #{tpu_custom_call.1} parent=11 // pred_fallthru
          _
        // Predicated region
        $region25: #{tpu_custom_call.1} parent=11 // pred_check
          %p305 = pneg %p213
        $region26: #{tpu_custom_call.1} parent=11 // pred_check_branch
          %307 = sbr.rel (%p305) target = $region28
        $region27: #{tpu_custom_call.1} parent=11 // pred_region
          %s309 = ssub.s32 256, 256
          %310 = vsyncadd [#allocation6], %s309
          %s311 = sshll.u32 [#allocation7], 4
          %s312 = int_to_ptr.vmem [resolvable:$true] %s311
          %317 = dma.hbm_to_vmem [thread:$0]  %s7, 256, %s312, [#allocation6], 64, 64, 4
        $region28: #{tpu_custom_call.1} parent=11 // pred_fallthru
          _
        // Predicated region
        $region29: #{tpu_custom_call.1} parent=11 // pred_check
          %p318 = pneg %p234
        $region30: #{tpu_custom_call.1} parent=11 // pred_check_branch
          %320 = sbr.rel (%p318) target = $region32
        $region31: #{tpu_custom_call.1} parent=11 // pred_region
          _
        $region32: #{tpu_custom_call.1} parent=11 // pred_fallthru
          _
        // Predicated region
        $region33: #{tpu_custom_call.1} parent=11 // pred_check
          %p321 = pneg %p255
        $region34: #{tpu_custom_call.1} parent=11 // pred_check_branch
          %323 = sbr.rel (%p321) target = $region36
        $region35: #{tpu_custom_call.1} parent=11 // pred_region
          _
        $region36: #{tpu_custom_call.1} parent=11 // pred_fallthru
          _
      $region12: #{tpu_custom_call.1} parent=5 // pred_fallthru
        _
      %p324 = scmp.lt.s32.totalorder %s25, 2
      // Predicated region
      $region37: #{tpu_custom_call.1} parent=5 // pred_check
        %p325 = pneg %p324
      $region38: #{tpu_custom_call.1} parent=5 // pred_check_branch
        %327 = sbr.rel (%p325) target = $region40
      $region39: #{tpu_custom_call.1} parent=5 // pred_region
        // Predicated region
        $region41: #{tpu_custom_call.1} parent=39 // pred_check
          %p328 = pneg %p45
        $region42: #{tpu_custom_call.1} parent=39 // pred_check_branch
          %330 = sbr.rel (%p328) target = $region44
        $region43: #{tpu_custom_call.1} parent=39 // pred_region
          %p331 = scmp.lt.s32.totalorder %s25, 1
          %s332 = scalar_select %p331, %s25, 1
          %s333 = smul.addr %s332, 8
          %s334 = scalar_lea.vmem %s0, %s333
        $region44: #{tpu_custom_call.1} parent=39 // pred_fallthru
          _
        // Predicated region
        $region45: #{tpu_custom_call.1} parent=39 // pred_check
          %p335 = pneg %p71
        $region46: #{tpu_custom_call.1} parent=39 // pred_check_branch
          %337 = sbr.rel (%p335) target = $region48
        $region47: #{tpu_custom_call.1} parent=39 // pred_region
          %s338 = sand.u32 %s61, 1
          %s339 = scalar_lea.sflag [#allocation3], %s338
          %s340 = sand.u32 %s61, 1
          %s341 = scalar_lea.vmem [#allocation2], %s340
          %s343 = ssub.s32 16, 16
          %344 = vsyncadd %s339, %s343
          %s345 = smul.addr %s25, 16
          %s346 = scalar_lea.hbm %s1, %s345
          %s348 = sshll.u32 %s341, 4
          %s349 = int_to_ptr.vmem [resolvable:$true] %s348
          %351 = dma.hbm_to_vmem [thread:$0]  %s346, 16, %s349, %s339
        $region48: #{tpu_custom_call.1} parent=39 // pred_fallthru
          _
        // Predicated region
        $region49: #{tpu_custom_call.1} parent=39 // pred_check
          %p352 = pneg %p97
        $region50: #{tpu_custom_call.1} parent=39 // pred_check_branch
          %354 = sbr.rel (%p352) target = $region52
        $region51: #{tpu_custom_call.1} parent=39 // pred_region
          %s355 = sand.u32 %s25, 1
          %s356 = scalar_lea.sflag [#allocation6], %s355
          %s357 = sand.u32 %s87, 1
          %s358 = smul.addr %s357, 4
          %s359 = scalar_lea.vmem [#allocation5], %s358
          %s361 = ssub.s32 64, 64
          %362 = vsyncadd %s356, %s361
          %s363 = smul.addr %s25, 64
          %s364 = scalar_lea.hbm %s2, %s363
          %s366 = sshll.u32 %s359, 4
          %s367 = int_to_ptr.vmem [resolvable:$true] %s366
          %369 = dma.hbm_to_vmem [thread:$0]  %s364, 64, %s367, %s356
        $region52: #{tpu_custom_call.1} parent=39 // pred_fallthru
          _
        // Predicated region
        $region53: #{tpu_custom_call.1} parent=39 // pred_check
          %p370 = pneg %p123
        $region54: #{tpu_custom_call.1} parent=39 // pred_check_branch
          %372 = sbr.rel (%p370) target = $region56
        $region55: #{tpu_custom_call.1} parent=39 // pred_region
          %p373 = scmp.lt.s32.totalorder %s25, 1
          %s374 = scalar_select %p373, %s25, 1
          %s375 = smul.addr %s374, 8
          %s376 = scalar_lea.vmem %s3, %s375
        $region56: #{tpu_custom_call.1} parent=39 // pred_fallthru
          _
      $region40: #{tpu_custom_call.1} parent=5 // pred_fallthru
        _
      %p377 = scmp.le.s32.totalorder 1, %s25
      %p378 = scmp.lt.s32.totalorder %s25, 3
      %p379 = pnand %p377, %p378
      %p380 = pneg %p379
      // Predicated region
      $region57: #{tpu_custom_call.1} parent=5 // pred_check
        _
      $region58: #{tpu_custom_call.1} parent=5 // pred_check_branch
        %382 = sbr.rel (%p379) target = $region60
      $region59: #{tpu_custom_call.1} parent=5 // pred_region
        %s383 = ssub.s32 %s25, 1
        %s384 = sand.u32 %s64, 1
        %s385 = scalar_lea.sflag [#allocation3], %s384
        %s386 = sand.u32 %s64, 1
        %s387 = scalar_lea.vmem [#allocation2], %s386
        // Predicated region
        $region61: #{tpu_custom_call.1} parent=59 // pred_check
          %p388 = pneg %p77
        $region62: #{tpu_custom_call.1} parent=59 // pred_check_branch
          %390 = sbr.rel (%p388) target = $region64
        $region63: #{tpu_custom_call.1} parent=59 // pred_region
          %391 = dma.done %s385, 16
        $region64: #{tpu_custom_call.1} parent=59 // pred_fallthru
          _
        %s392 = sand.u32 %s30, 1
        %s393 = scalar_lea.sflag [#allocation6], %s392
        %s394 = sand.u32 %s90, 1
        %s395 = smul.addr %s394, 4
        %s396 = scalar_lea.vmem [#allocation5], %s395
        // Predicated region
        $region65: #{tpu_custom_call.1} parent=59 // pred_check
          %p397 = pneg %p103
        $region66: #{tpu_custom_call.1} parent=59 // pred_check_branch
          %399 = sbr.rel (%p397) target = $region68
        $region67: #{tpu_custom_call.1} parent=59 // pred_region
          %400 = dma.done %s393, 64
        $region68: #{tpu_custom_call.1} parent=59 // pred_fallthru
          _
        // Predicated region
        $region69: #{tpu_custom_call.1} parent=59 // pred_check
          %p401 = pneg %p213
        $region70: #{tpu_custom_call.1} parent=59 // pred_check_branch
          %403 = sbr.rel (%p401) target = $region72
        $region71: #{tpu_custom_call.1} parent=59 // pred_region
          %404 = dma.done [#allocation6], 256
        $region72: #{tpu_custom_call.1} parent=59 // pred_fallthru
          _
        %p405 = scmp.lt.s32.totalorder %s30, 1
        %s406 = scalar_select %p405, %s30, 1
        %s407 = smul.addr %s406, 8
        %s408 = scalar_lea.vmem %s0, %s407
        %p409 = pneg %p51
        %p410 = pneg %p48
        %s411 = sand.u32 %s64, 1
        %s412 = scalar_lea.sflag [#allocation3], %s411
        %s413 = sand.u32 %s64, 1
        %s414 = scalar_lea.vmem [#allocation2], %s413
        %p415 = pneg %p77
        %p416 = pneg %p74
        %s417 = sand.u32 %s30, 1
        %s418 = scalar_lea.sflag [#allocation6], %s417
        %s419 = sand.u32 %s90, 1
        %s420 = smul.addr %s419, 4
        %s421 = scalar_lea.vmem [#allocation5], %s420
        %p422 = pneg %p103
        %p423 = pneg %p100
        %p424 = scmp.lt.s32.totalorder %s30, 1
        %s425 = scalar_select %p424, %s30, 1
        %s426 = smul.addr %s425, 8
        %s427 = scalar_lea.vmem %s3, %s426
        %p428 = pneg %p129
        %p429 = pneg %p126
        %p430 = pneg %p150
        %p431 = pneg %p147
        %p432 = pneg %p171
        %p433 = pneg %p168
        %p434 = pneg %p192
        %p435 = pneg %p189
        %p436 = pneg %p213
        %p437 = pneg %p210
        %p438 = pneg %p234
        %p439 = pneg %p231
        %p440 = pneg %p255
        %p441 = pneg %p252
        %p442 = pneg %p281
        %p443 = pneg %p278
        %s444 = sand.u32 %s268, 1
        %s445 = scalar_lea.sflag [#allocation4], %s444
        %s446 = sand.u32 %s268, 1
        %s447 = smul.addr %s446, 8
        %s448 = scalar_lea.vmem [#allocation8], %s447
        %p449 = scmp.lt.s32.totalorder %s30, 1
        %s450 = scalar_select %p449, %s30, 1
        %s451 = smul.addr %s450, 8
        %s452 = scalar_lea.vmem %s0, %s451
        %p453 = scmp.lt.s32.totalorder %s30, 1
        %s454 = scalar_select %p453, %s30, 1
        %s455 = smul.addr %s454, 8
        %s456 = scalar_lea.vmem %s3, %s455
        %v458 = vld [vmem:[%s9] sm:$0x1]
        %v459 = vld [vmem:[%s9 + $0x1] sm:$0x1]
        %v460 = vld [vmem:[%s9 + $0x2] sm:$0x1]
        %v461 = vld [vmem:[%s9 + $0x3] sm:$0x1]
        %v462 = vld [vmem:[%s9 + $0x4] sm:$0x1]
        %v463 = vld [vmem:[%s9 + $0x5] sm:$0x1]
        %v464 = vld [vmem:[%s9 + $0x6] sm:$0x1]
        %v465 = vld [vmem:[%s456] sm:$0xff]
        %v466 = vld [vmem:[%s452] sm:$0xff]
        %v467 = vsub.f32 1.0, %v466
        %v468 = vld [vmem:[%s387] sm:$0x1]
        %vm469 = vcmask 7168
        %v470 = vsel %vm469, %v467, 0.0
        %v471 = vrot.slane %v470, 4
        %v472 = vadd.f32 %v470, %v471
        %v473 = vrot.slane %v472, 2
        %v474 = vadd.f32 %v472, %v473
        %v475 = vrot.slane %v474, 1
        %v476 = vadd.f32 %v474, %v475
        %v477 = vmax.f32 %v476, 1.0
        %v478 = vrcp.pop %v477
        %v479 = vmul.f32 1.0, %v478
        %481 = vset.pattern.permute.xlu0 0
        %482 = vperm.xlu0 %481, %v467
        %v483 = vpop.permute.xlu0 %482
        %v485 = vmul.f32 %v465, %v483
        %vm486 = vcmask 261120
        %v487 = vsel %vm486, %v485, 0.0
        %v488 = vrot.slane %v487, 4
        %v489 = vadd.f32 %v487, %v488
        %v490 = vrot.slane %v489, 2
        %v491 = vadd.f32 %v489, %v490
        %v492 = vrot.slane %v491, 1
        %v493 = vadd.f32 %v491, %v492
        %v494 = vmul.f32 %v467, %v479
        %496 = vset.pattern.permute.xlu0 0
        %497 = vperm.xlu0 %496, %v494
        %v498 = vpop.permute.xlu0 %497
        %v500 = vmul.f32 %v498, %v493
        %v501 = vpack.c.bf16 %v500, %v500
        %v502 = vld [vmem:[%s4] sm:$0xf]
        %v503 = vld [vmem:[%s4 + $0x4] sm:$0xf]
        %v504 = vld [vmem:[%s4 + $0x8] sm:$0xf]
        %v505 = vld [vmem:[%s4 + $0xc] sm:$0xf]
        %v506 = vlaneseq
        %v507 = vshrl.u32 %v506, 7
        %v508 = vsub.s32 0, %v507
        %v509 = vrot.slane %v458, %v508
        %v514 = vunpack.c.l.b16 %v502
        %v515 = vunpack.c.l.b16 %v503
        %v516 = vunpack.c.l.b16 %v504
        %v517 = vunpack.c.l.b16 %v505
        %v518 = vpack.c.b16 %v515, %v514
        %v519 = vpack.c.b16 %v517, %v516
        %v523 = vsel %vm486, %v501, 0
        %525 = vmatprep.subr.bf16.mxu0 0
        %526 = vmatpush1.bf16.msra.mxu0 %v518
        %527 = vmatprep.subr.bf16.mxu0 0
        %528 = vmatpush1.bf16.msra.mxu0 %v519
        %529 = vmatprep.subr.bf16.mxu0 0
        %530 = vmatpush1.bf16.msra.mxu0 0
        %531 = vmatprep.subr.bf16.mxu0 0
        %532 = vmatpush1.bf16.msra.mxu0 0
        %533 = vmatprep.subr.bf16.mxu0 0
        %534 = vmatpush1.bf16.msra.mxu0 0
        %535 = vmatprep.subr.bf16.mxu0 0
        %536 = vmatpush1.bf16.msra.mxu0 0
        %537 = vmatprep.subr.bf16.mxu0 0
        %538 = vmatpush1.bf16.msra.mxu0 0
        %539 = vmatprep.subr.bf16.mxu0 0
        %540 = vmatpush1.bf16.msra.mxu0 0
        %541 = vmatprep.subr.bf16.mxu0 0
        %542 = vmatpush1.bf16.msra.mxu0 0
        %543 = vmatprep.subr.bf16.mxu0 0
        %544 = vmatpush1.bf16.msra.mxu0 0
        %545 = vmatprep.subr.bf16.mxu0 0
        %546 = vmatpush1.bf16.msra.mxu0 0
        %547 = vmatprep.subr.bf16.mxu0 0
        %548 = vmatpush1.bf16.msra.mxu0 0
        %549 = vmatprep.subr.bf16.mxu0 0
        %550 = vmatpush1.bf16.msra.mxu0 0
        %551 = vmatprep.subr.bf16.mxu0 0
        %552 = vmatpush1.bf16.msra.mxu0 0
        %553 = vmatprep.subr.bf16.mxu0 0
        %554 = vmatpush1.bf16.msra.mxu0 0
        %555 = vmatprep.subr.bf16.mxu0 0
        %556 = vmatpush1.bf16.msra.mxu0 0
        %557 = vmatprep.mubr.bf16.mxu0 0
        %558 = vmatmul.mubr.bf16.gmra.mrb[0].mxu0 %v523
        %v559 = vpop.f32.mrb[0].mxu0
        %v560 = vadd.f32 %v509, %v559
        %v561 = vpop.f32.mrb[0].mxu0
        %v562 = vpop.f32.mrb[0].mxu0
        %v563 = vpop.f32.mrb[0].mxu0
        %564 = vdwg.mxu0
        %v565 = vmax.f32 %v560, 0.0
        %v566 = vpack.c.bf16 %v565, %v565
        %v567 = vld [vmem:[%s5] sm:$0xf]
        %v568 = vld [vmem:[%s5 + $0x4] sm:$0xf]
        %v569 = vld [vmem:[%s5 + $0x8] sm:$0xf]
        %v570 = vld [vmem:[%s5 + $0xc] sm:$0xf]
        %v571 = vlaneseq
        %v572 = vshrl.u32 %v571, 7
        %v573 = vsub.s32 0, %v572
        %v574 = vrot.slane %v459, %v573
        %v579 = vunpack.c.l.b16 %v567
        %v580 = vunpack.c.l.b16 %v568
        %v581 = vunpack.c.l.b16 %v569
        %v582 = vunpack.c.l.b16 %v570
        %v583 = vpack.c.b16 %v580, %v579
        %v584 = vpack.c.b16 %v582, %v581
        %v588 = vsel %vm486, %v566, 0
        %590 = vmatprep.subr.bf16.mxu0 0
        %591 = vmatpush1.bf16.msra.mxu0 %v583
        %592 = vmatprep.subr.bf16.mxu0 0
        %593 = vmatpush1.bf16.msra.mxu0 %v584
        %594 = vmatprep.subr.bf16.mxu0 0
        %595 = vmatpush1.bf16.msra.mxu0 0
        %596 = vmatprep.subr.bf16.mxu0 0
        %597 = vmatpush1.bf16.msra.mxu0 0
        %598 = vmatprep.subr.bf16.mxu0 0
        %599 = vmatpush1.bf16.msra.mxu0 0
        %600 = vmatprep.subr.bf16.mxu0 0
        %601 = vmatpush1.bf16.msra.mxu0 0
        %602 = vmatprep.subr.bf16.mxu0 0
        %603 = vmatpush1.bf16.msra.mxu0 0
        %604 = vmatprep.subr.bf16.mxu0 0
        %605 = vmatpush1.bf16.msra.mxu0 0
        %606 = vmatprep.subr.bf16.mxu0 0
        %607 = vmatpush1.bf16.msra.mxu0 0
        %608 = vmatprep.subr.bf16.mxu0 0
        %609 = vmatpush1.bf16.msra.mxu0 0
        %610 = vmatprep.subr.bf16.mxu0 0
        %611 = vmatpush1.bf16.msra.mxu0 0
        %612 = vmatprep.subr.bf16.mxu0 0
        %613 = vmatpush1.bf16.msra.mxu0 0
        %614 = vmatprep.subr.bf16.mxu0 0
        %615 = vmatpush1.bf16.msra.mxu0 0
        %616 = vmatprep.subr.bf16.mxu0 0
        %617 = vmatpush1.bf16.msra.mxu0 0
        %618 = vmatprep.subr.bf16.mxu0 0
        %619 = vmatpush1.bf16.msra.mxu0 0
        %620 = vmatprep.subr.bf16.mxu0 0
        %621 = vmatpush1.bf16.msra.mxu0 0
        %622 = vmatprep.mubr.bf16.mxu0 0
        %623 = vmatmul.mubr.bf16.gmra.mrb[0].mxu0 %v588
        %v624 = vpop.f32.mrb[0].mxu0
        %v625 = vadd.f32 %v574, %v624
        %v626 = vpop.f32.mrb[0].mxu0
        %v627 = vpop.f32.mrb[0].mxu0
        %v628 = vpop.f32.mrb[0].mxu0
        %629 = vdwg.mxu0
        %631 = vrot.lane.b32.xlu0 %v625, 120
        %v632 = vpop.permute.xlu0 %631
        %634 = vrot.lane.b32.xlu0 %v625, 112
        %v635 = vpop.permute.xlu0 %634
        %637 = vrot.lane.b32.xlu0 %v625, 104
        %v638 = vpop.permute.xlu0 %637
        %v640 = vpack.c.bf16 %v625, %v625
        %v641 = vpack.c.bf16 %v632, %v632
        %v642 = vpack.c.bf16 %v635, %v635
        %v643 = vpack.c.bf16 %v638, %v638
        %v644 = vld [vmem:[%s396] sm:$0xf]
        %v645 = vunpack.c.l.bf16 %v644
        %v646 = vmul.f32 %v468, -1e+09
        %v648 = vlaneseq
        %v649 = vshrl.u32 %v648, 7
        %v650 = vsub.s32 0, %v649
        %v651 = vrot.slane %v646, %v650
        %v653 = vadd.f32 %v645, %v651
        %655 = vrot.lane.b32.xlu0 %v640, 96
        %v656 = vpop.permute.xlu0 %655
        %vm657 = vcmask 64512
        %v659 = vsel %vm657, %v640, 0
        %v662 = vsel %vm657, %v656, 0
        %664 = vmatprep.subr.bf16.mxu0 0
        %665 = vmatpush1.bf16.xpose.msra.mxu0 %v662
        %666 = vmatprep.subr.bf16.mxu0 0
        %667 = vmatpush1.bf16.xpose.msra.mxu0 0
        %668 = vmatprep.subr.bf16.mxu0 0
        %669 = vmatpush1.bf16.xpose.msra.mxu0 0
        %670 = vmatprep.subr.bf16.mxu0 0
        %671 = vmatpush1.bf16.xpose.msra.mxu0 0
        %672 = vmatprep.subr.bf16.mxu0 0
        %673 = vmatpush1.bf16.xpose.msra.mxu0 0
        %674 = vmatprep.subr.bf16.mxu0 0
        %675 = vmatpush1.bf16.xpose.msra.mxu0 0
        %676 = vmatprep.subr.bf16.mxu0 0
        %677 = vmatpush1.bf16.xpose.msra.mxu0 0
        %678 = vmatprep.subr.bf16.mxu0 0
        %679 = vmatpush1.bf16.xpose.msra.mxu0 0
        %680 = vmatprep.subr.bf16.mxu0 0
        %681 = vmatpush1.bf16.xpose.msra.mxu0 0
        %682 = vmatprep.subr.bf16.mxu0 0
        %683 = vmatpush1.bf16.xpose.msra.mxu0 0
        %684 = vmatprep.subr.bf16.mxu0 0
        %685 = vmatpush1.bf16.xpose.msra.mxu0 0
        %686 = vmatprep.subr.bf16.mxu0 0
        %687 = vmatpush1.bf16.xpose.msra.mxu0 0
        %688 = vmatprep.subr.bf16.mxu0 0
        %689 = vmatpush1.bf16.xpose.msra.mxu0 0
        %690 = vmatprep.subr.bf16.mxu0 0
        %691 = vmatpush1.bf16.xpose.msra.mxu0 0
        %692 = vmatprep.subr.bf16.mxu0 0
        %693 = vmatpush1.bf16.xpose.msra.mxu0 0
        %694 = vmatprep.subr.bf16.mxu0 0
        %695 = vmatpush1.bf16.xpose.msra.mxu0 0
        %696 = vmatprep.mubr.bf16.mxu0 0
        %697 = vmatmul.mubr.bf16.gmra.mrb[0].mxu0 %v659
        %v698 = vpop.f32.mrb[0].mxu0
        %v699 = vadd.f32 0.0, %v698
        %v700 = vpop.f32.mrb[0].mxu0
        %v701 = vpop.f32.mrb[0].mxu0
        %v702 = vpop.f32.mrb[0].mxu0
        %703 = vdwg.mxu0
        %705 = vrot.lane.b32.xlu0 %v641, 96
        %v706 = vpop.permute.xlu0 %705
        %v708 = vsel %vm657, %v641, 0
        %v711 = vsel %vm657, %v706, 0
        %713 = vmatprep.subr.bf16.mxu0 0
        %714 = vmatpush1.bf16.xpose.msra.mxu0 %v711
        %715 = vmatprep.subr.bf16.mxu0 0
        %716 = vmatpush1.bf16.xpose.msra.mxu0 0
        %717 = vmatprep.subr.bf16.mxu0 0
        %718 = vmatpush1.bf16.xpose.msra.mxu0 0
        %719 = vmatprep.subr.bf16.mxu0 0
        %720 = vmatpush1.bf16.xpose.msra.mxu0 0
        %721 = vmatprep.subr.bf16.mxu0 0
        %722 = vmatpush1.bf16.xpose.msra.mxu0 0
        %723 = vmatprep.subr.bf16.mxu0 0
        %724 = vmatpush1.bf16.xpose.msra.mxu0 0
        %725 = vmatprep.subr.bf16.mxu0 0
        %726 = vmatpush1.bf16.xpose.msra.mxu0 0
        %727 = vmatprep.subr.bf16.mxu0 0
        %728 = vmatpush1.bf16.xpose.msra.mxu0 0
        %729 = vmatprep.subr.bf16.mxu0 0
        %730 = vmatpush1.bf16.xpose.msra.mxu0 0
        %731 = vmatprep.subr.bf16.mxu0 0
        %732 = vmatpush1.bf16.xpose.msra.mxu0 0
        %733 = vmatprep.subr.bf16.mxu0 0
        %734 = vmatpush1.bf16.xpose.msra.mxu0 0
        %735 = vmatprep.subr.bf16.mxu0 0
        %736 = vmatpush1.bf16.xpose.msra.mxu0 0
        %737 = vmatprep.subr.bf16.mxu0 0
        %738 = vmatpush1.bf16.xpose.msra.mxu0 0
        %739 = vmatprep.subr.bf16.mxu0 0
        %740 = vmatpush1.bf16.xpose.msra.mxu0 0
        %741 = vmatprep.subr.bf16.mxu0 0
        %742 = vmatpush1.bf16.xpose.msra.mxu0 0
        %743 = vmatprep.subr.bf16.mxu0 0
        %744 = vmatpush1.bf16.xpose.msra.mxu0 0
        %745 = vmatprep.mubr.bf16.mxu0 0
        %746 = vmatmul.mubr.bf16.gmra.mrb[0].mxu0 %v708
        %v747 = vpop.f32.mrb[0].mxu0
        %v748 = vadd.f32 0.0, %v747
        %v749 = vpop.f32.mrb[0].mxu0
        %v750 = vpop.f32.mrb[0].mxu0
        %v751 = vpop.f32.mrb[0].mxu0
        %752 = vdwg.mxu0
        %754 = vrot.lane.b32.xlu0 %v642, 96
        %v755 = vpop.permute.xlu0 %754
        %v757 = vsel %vm657, %v642, 0
        %v760 = vsel %vm657, %v755, 0
        %762 = vmatprep.subr.bf16.mxu0 0
        %763 = vmatpush1.bf16.xpose.msra.mxu0 %v760
        %764 = vmatprep.subr.bf16.mxu0 0
        %765 = vmatpush1.bf16.xpose.msra.mxu0 0
        %766 = vmatprep.subr.bf16.mxu0 0
        %767 = vmatpush1.bf16.xpose.msra.mxu0 0
        %768 = vmatprep.subr.bf16.mxu0 0
        %769 = vmatpush1.bf16.xpose.msra.mxu0 0
        %770 = vmatprep.subr.bf16.mxu0 0
        %771 = vmatpush1.bf16.xpose.msra.mxu0 0
        %772 = vmatprep.subr.bf16.mxu0 0
        %773 = vmatpush1.bf16.xpose.msra.mxu0 0
        %774 = vmatprep.subr.bf16.mxu0 0
        %775 = vmatpush1.bf16.xpose.msra.mxu0 0
        %776 = vmatprep.subr.bf16.mxu0 0
        %777 = vmatpush1.bf16.xpose.msra.mxu0 0
        %778 = vmatprep.subr.bf16.mxu0 0
        %779 = vmatpush1.bf16.xpose.msra.mxu0 0
        %780 = vmatprep.subr.bf16.mxu0 0
        %781 = vmatpush1.bf16.xpose.msra.mxu0 0
        %782 = vmatprep.subr.bf16.mxu0 0
        %783 = vmatpush1.bf16.xpose.msra.mxu0 0
        %784 = vmatprep.subr.bf16.mxu0 0
        %785 = vmatpush1.bf16.xpose.msra.mxu0 0
        %786 = vmatprep.subr.bf16.mxu0 0
        %787 = vmatpush1.bf16.xpose.msra.mxu0 0
        %788 = vmatprep.subr.bf16.mxu0 0
        %789 = vmatpush1.bf16.xpose.msra.mxu0 0
        %790 = vmatprep.subr.bf16.mxu0 0
        %791 = vmatpush1.bf16.xpose.msra.mxu0 0
        %792 = vmatprep.subr.bf16.mxu0 0
        %793 = vmatpush1.bf16.xpose.msra.mxu0 0
        %794 = vmatprep.mubr.bf16.mxu0 0
        %795 = vmatmul.mubr.bf16.gmra.mrb[0].mxu0 %v757
        %v796 = vpop.f32.mrb[0].mxu0
        %v797 = vadd.f32 0.0, %v796
        %v798 = vpop.f32.mrb[0].mxu0
        %v799 = vpop.f32.mrb[0].mxu0
        %v800 = vpop.f32.mrb[0].mxu0
        %801 = vdwg.mxu0
        %803 = vrot.lane.b32.xlu0 %v643, 96
        %v804 = vpop.permute.xlu0 %803
        %v806 = vsel %vm657, %v643, 0
        %v809 = vsel %vm657, %v804, 0
        %811 = vmatprep.subr.bf16.mxu0 0
        %812 = vmatpush1.bf16.xpose.msra.mxu0 %v809
        %813 = vmatprep.subr.bf16.mxu0 0
        %814 = vmatpush1.bf16.xpose.msra.mxu0 0
        %815 = vmatprep.subr.bf16.mxu0 0
        %816 = vmatpush1.bf16.xpose.msra.mxu0 0
        %817 = vmatprep.subr.bf16.mxu0 0
        %818 = vmatpush1.bf16.xpose.msra.mxu0 0
        %819 = vmatprep.subr.bf16.mxu0 0
        %820 = vmatpush1.bf16.xpose.msra.mxu0 0
        %821 = vmatprep.subr.bf16.mxu0 0
        %822 = vmatpush1.bf16.xpose.msra.mxu0 0
        %823 = vmatprep.subr.bf16.mxu0 0
        %824 = vmatpush1.bf16.xpose.msra.mxu0 0
        %825 = vmatprep.subr.bf16.mxu0 0
        %826 = vmatpush1.bf16.xpose.msra.mxu0 0
        %827 = vmatprep.subr.bf16.mxu0 0
        %828 = vmatpush1.bf16.xpose.msra.mxu0 0
        %829 = vmatprep.subr.bf16.mxu0 0
        %830 = vmatpush1.bf16.xpose.msra.mxu0 0
        %831 = vmatprep.subr.bf16.mxu0 0
        %832 = vmatpush1.bf16.xpose.msra.mxu0 0
        %833 = vmatprep.subr.bf16.mxu0 0
        %834 = vmatpush1.bf16.xpose.msra.mxu0 0
        %835 = vmatprep.subr.bf16.mxu0 0
        %836 = vmatpush1.bf16.xpose.msra.mxu0 0
        %837 = vmatprep.subr.bf16.mxu0 0
        %838 = vmatpush1.bf16.xpose.msra.mxu0 0
        %839 = vmatprep.subr.bf16.mxu0 0
        %840 = vmatpush1.bf16.xpose.msra.mxu0 0
        %841 = vmatprep.subr.bf16.mxu0 0
        %842 = vmatpush1.bf16.xpose.msra.mxu0 0
        %843 = vmatprep.mubr.bf16.mxu0 0
        %844 = vmatmul.mubr.bf16.gmra.mrb[0].mxu0 %v806
        %v845 = vpop.f32.mrb[0].mxu0
        %v846 = vadd.f32 0.0, %v845
        %v847 = vpop.f32.mrb[0].mxu0
        %v848 = vpop.f32.mrb[0].mxu0
        %v849 = vpop.f32.mrb[0].mxu0
        %850 = vdwg.mxu0
        %v851 = vadd.f32 %v699, %v653
        %v852 = vadd.f32 %v748, %v653
        %v853 = vadd.f32 %v797, %v653
        %v854 = vadd.f32 %v846, %v653
        %v855 = vsel %vm657, %v851, -inf
        %856 = vmax.xlane.f32.xlu0 %v855
        %v857 = vpop.xlane.xlu0 %856
        %v858 = vsel %vm657, %v852, -inf
        %859 = vmax.xlane.f32.xlu0 %v858
        %v860 = vpop.xlane.xlu0 %859
        %v861 = vsel %vm657, %v853, -inf
        %862 = vmax.xlane.f32.xlu0 %v861
        %v863 = vpop.xlane.xlu0 %862
        %v864 = vsel %vm657, %v854, -inf
        %865 = vmax.xlane.f32.xlu0 %v864
        %v866 = vpop.xlane.xlu0 %865
        %v867 = vsub.f32 %v851, %v857
        %v868 = vsub.f32 %v852, %v860
        %v869 = vsub.f32 %v853, %v863
        %v870 = vsub.f32 %v854, %v866
        %v871 = vmul.f32 %v867, 1.442695
        %v872 = vpow.pop %v871
        %v873 = vmul.f32 %v868, 1.442695
        %v874 = vpow.pop %v873
        %v875 = vmul.f32 %v869, 1.442695
        %v876 = vpow.pop %v875
        %v877 = vmul.f32 %v870, 1.442695
        %v878 = vpow.pop %v877
        %v879 = vsel %vm657, %v872, 0.0
        %880 = vadd.xlane.f32.xlu0 %v879
        %v881 = vpop.xlane.xlu0 %880
        %v882 = vsel %vm657, %v874, 0.0
        %883 = vadd.xlane.f32.xlu0 %v882
        %v884 = vpop.xlane.xlu0 %883
        %v885 = vsel %vm657, %v876, 0.0
        %886 = vadd.xlane.f32.xlu0 %v885
        %v887 = vpop.xlane.xlu0 %886
        %v888 = vsel %vm657, %v878, 0.0
        %889 = vadd.xlane.f32.xlu0 %v888
        %v890 = vpop.xlane.xlu0 %889
        %v891 = vrcp.pop %v881
        %v892 = vrcp.pop %v884
        %v893 = vrcp.pop %v887
        %v894 = vrcp.pop %v890
        %v895 = vmul.f32 %v872, %v891
        %v896 = vmul.f32 %v874, %v892
        %v897 = vmul.f32 %v876, %v893
        %v898 = vmul.f32 %v878, %v894
        %v899 = vpack.c.bf16 %v895, %v895
        %v900 = vpack.c.bf16 %v896, %v896
        %v901 = vpack.c.bf16 %v897, %v897
        %v902 = vpack.c.bf16 %v898, %v898
        %903 = vrot.lane.b32.xlu0 %v640, 64
        %v904 = vpop.permute.xlu0 %903
        %v906 = vsel %vm657, %v899, 0
        %vm908 = vcmask 1043456
        %v910 = vsel %vm908, %v904, 0
        %912 = vmatprep.subr.bf16.mxu0 0
        %913 = vmatpush1.bf16.msra.mxu0 %v910
        %914 = vmatprep.subr.bf16.mxu0 0
        %915 = vmatpush1.bf16.msra.mxu0 0
        %916 = vmatprep.subr.bf16.mxu0 0
        %917 = vmatpush1.bf16.msra.mxu0 0
        %918 = vmatprep.subr.bf16.mxu0 0
        %919 = vmatpush1.bf16.msra.mxu0 0
        %920 = vmatprep.subr.bf16.mxu0 0
        %921 = vmatpush1.bf16.msra.mxu0 0
        %922 = vmatprep.subr.bf16.mxu0 0
        %923 = vmatpush1.bf16.msra.mxu0 0
        %924 = vmatprep.subr.bf16.mxu0 0
        %925 = vmatpush1.bf16.msra.mxu0 0
        %926 = vmatprep.subr.bf16.mxu0 0
        %927 = vmatpush1.bf16.msra.mxu0 0
        %928 = vmatprep.subr.bf16.mxu0 0
        %929 = vmatpush1.bf16.msra.mxu0 0
        %930 = vmatprep.subr.bf16.mxu0 0
        %931 = vmatpush1.bf16.msra.mxu0 0
        %932 = vmatprep.subr.bf16.mxu0 0
        %933 = vmatpush1.bf16.msra.mxu0 0
        %934 = vmatprep.subr.bf16.mxu0 0
        %935 = vmatpush1.bf16.msra.mxu0 0
        %936 = vmatprep.subr.bf16.mxu0 0
        %937 = vmatpush1.bf16.msra.mxu0 0
        %938 = vmatprep.subr.bf16.mxu0 0
        %939 = vmatpush1.bf16.msra.mxu0 0
        %940 = vmatprep.subr.bf16.mxu0 0
        %941 = vmatpush1.bf16.msra.mxu0 0
        %942 = vmatprep.subr.bf16.mxu0 0
        %943 = vmatpush1.bf16.msra.mxu0 0
        %944 = vmatprep.mubr.bf16.mxu0 0
        %945 = vmatmul.mubr.bf16.gmra.mrb[0].mxu0 %v906
        %v946 = vpop.f32.mrb[0].mxu0
        %v947 = vadd.f32 0.0, %v946
        %v948 = vpop.f32.mrb[0].mxu0
        %v949 = vpop.f32.mrb[0].mxu0
        %v950 = vpop.f32.mrb[0].mxu0
        %951 = vdwg.mxu0
        %952 = vrot.lane.b32.xlu0 %v641, 64
        %v953 = vpop.permute.xlu0 %952
        %v955 = vsel %vm657, %v900, 0
        %v958 = vsel %vm908, %v953, 0
        %960 = vmatprep.subr.bf16.mxu0 0
        %961 = vmatpush1.bf16.msra.mxu0 %v958
        %962 = vmatprep.subr.bf16.mxu0 0
        %963 = vmatpush1.bf16.msra.mxu0 0
        %964 = vmatprep.subr.bf16.mxu0 0
        %965 = vmatpush1.bf16.msra.mxu0 0
        %966 = vmatprep.subr.bf16.mxu0 0
        %967 = vmatpush1.bf16.msra.mxu0 0
        %968 = vmatprep.subr.bf16.mxu0 0
        %969 = vmatpush1.bf16.msra.mxu0 0
        %970 = vmatprep.subr.bf16.mxu0 0
        %971 = vmatpush1.bf16.msra.mxu0 0
        %972 = vmatprep.subr.bf16.mxu0 0
        %973 = vmatpush1.bf16.msra.mxu0 0
        %974 = vmatprep.subr.bf16.mxu0 0
        %975 = vmatpush1.bf16.msra.mxu0 0
        %976 = vmatprep.subr.bf16.mxu0 0
        %977 = vmatpush1.bf16.msra.mxu0 0
        %978 = vmatprep.subr.bf16.mxu0 0
        %979 = vmatpush1.bf16.msra.mxu0 0
        %980 = vmatprep.subr.bf16.mxu0 0
        %981 = vmatpush1.bf16.msra.mxu0 0
        %982 = vmatprep.subr.bf16.mxu0 0
        %983 = vmatpush1.bf16.msra.mxu0 0
        %984 = vmatprep.subr.bf16.mxu0 0
        %985 = vmatpush1.bf16.msra.mxu0 0
        %986 = vmatprep.subr.bf16.mxu0 0
        %987 = vmatpush1.bf16.msra.mxu0 0
        %988 = vmatprep.subr.bf16.mxu0 0
        %989 = vmatpush1.bf16.msra.mxu0 0
        %990 = vmatprep.subr.bf16.mxu0 0
        %991 = vmatpush1.bf16.msra.mxu0 0
        %992 = vmatprep.mubr.bf16.mxu0 0
        %993 = vmatmul.mubr.bf16.gmra.mrb[0].mxu0 %v955
        %v994 = vpop.f32.mrb[0].mxu0
        %v995 = vadd.f32 0.0, %v994
        %v996 = vpop.f32.mrb[0].mxu0
        %v997 = vpop.f32.mrb[0].mxu0
        %v998 = vpop.f32.mrb[0].mxu0
        %999 = vdwg.mxu0
        %1000 = vrot.lane.b32.xlu0 %v642, 64
        %v1001 = vpop.permute.xlu0 %1000
        %v1003 = vsel %vm657, %v901, 0
        %v1006 = vsel %vm908, %v1001, 0
        %1008 = vmatprep.subr.bf16.mxu0 0
        %1009 = vmatpush1.bf16.msra.mxu0 %v1006
        %1010 = vmatprep.subr.bf16.mxu0 0
        %1011 = vmatpush1.bf16.msra.mxu0 0
        %1012 = vmatprep.subr.bf16.mxu0 0
        %1013 = vmatpush1.bf16.msra.mxu0 0
        %1014 = vmatprep.subr.bf16.mxu0 0
        %1015 = vmatpush1.bf16.msra.mxu0 0
        %1016 = vmatprep.subr.bf16.mxu0 0
        %1017 = vmatpush1.bf16.msra.mxu0 0
        %1018 = vmatprep.subr.bf16.mxu0 0
        %1019 = vmatpush1.bf16.msra.mxu0 0
        %1020 = vmatprep.subr.bf16.mxu0 0
        %1021 = vmatpush1.bf16.msra.mxu0 0
        %1022 = vmatprep.subr.bf16.mxu0 0
        %1023 = vmatpush1.bf16.msra.mxu0 0
        %1024 = vmatprep.subr.bf16.mxu0 0
        %1025 = vmatpush1.bf16.msra.mxu0 0
        %1026 = vmatprep.subr.bf16.mxu0 0
        %1027 = vmatpush1.bf16.msra.mxu0 0
        %1028 = vmatprep.subr.bf16.mxu0 0
        %1029 = vmatpush1.bf16.msra.mxu0 0
        %1030 = vmatprep.subr.bf16.mxu0 0
        %1031 = vmatpush1.bf16.msra.mxu0 0
        %1032 = vmatprep.subr.bf16.mxu0 0
        %1033 = vmatpush1.bf16.msra.mxu0 0
        %1034 = vmatprep.subr.bf16.mxu0 0
        %1035 = vmatpush1.bf16.msra.mxu0 0
        %1036 = vmatprep.subr.bf16.mxu0 0
        %1037 = vmatpush1.bf16.msra.mxu0 0
        %1038 = vmatprep.subr.bf16.mxu0 0
        %1039 = vmatpush1.bf16.msra.mxu0 0
        %1040 = vmatprep.mubr.bf16.mxu0 0
        %1041 = vmatmul.mubr.bf16.gmra.mrb[0].mxu0 %v1003
        %v1042 = vpop.f32.mrb[0].mxu0
        %v1043 = vadd.f32 0.0, %v1042
        %v1044 = vpop.f32.mrb[0].mxu0
        %v1045 = vpop.f32.mrb[0].mxu0
        %v1046 = vpop.f32.mrb[0].mxu0
        %1047 = vdwg.mxu0
        %1048 = vrot.lane.b32.xlu0 %v643, 64
        %v1049 = vpop.permute.xlu0 %1048
        %v1051 = vsel %vm657, %v902, 0
        %v1054 = vsel %vm908, %v1049, 0
        %1056 = vmatprep.subr.bf16.mxu0 0
        %1057 = vmatpush1.bf16.msra.mxu0 %v1054
        %1058 = vmatprep.subr.bf16.mxu0 0
        %1059 = vmatpush1.bf16.msra.mxu0 0
        %1060 = vmatprep.subr.bf16.mxu0 0
        %1061 = vmatpush1.bf16.msra.mxu0 0
        %1062 = vmatprep.subr.bf16.mxu0 0
        %1063 = vmatpush1.bf16.msra.mxu0 0
        %1064 = vmatprep.subr.bf16.mxu0 0
        %1065 = vmatpush1.bf16.msra.mxu0 0
        %1066 = vmatprep.subr.bf16.mxu0 0
        %1067 = vmatpush1.bf16.msra.mxu0 0
        %1068 = vmatprep.subr.bf16.mxu0 0
        %1069 = vmatpush1.bf16.msra.mxu0 0
        %1070 = vmatprep.subr.bf16.mxu0 0
        %1071 = vmatpush1.bf16.msra.mxu0 0
        %1072 = vmatprep.subr.bf16.mxu0 0
        %1073 = vmatpush1.bf16.msra.mxu0 0
        %1074 = vmatprep.subr.bf16.mxu0 0
        %1075 = vmatpush1.bf16.msra.mxu0 0
        %1076 = vmatprep.subr.bf16.mxu0 0
        %1077 = vmatpush1.bf16.msra.mxu0 0
        %1078 = vmatprep.subr.bf16.mxu0 0
        %1079 = vmatpush1.bf16.msra.mxu0 0
        %1080 = vmatprep.subr.bf16.mxu0 0
        %1081 = vmatpush1.bf16.msra.mxu0 0
        %1082 = vmatprep.subr.bf16.mxu0 0
        %1083 = vmatpush1.bf16.msra.mxu0 0
        %1084 = vmatprep.subr.bf16.mxu0 0
        %1085 = vmatpush1.bf16.msra.mxu0 0
        %1086 = vmatprep.subr.bf16.mxu0 0
        %1087 = vmatpush1.bf16.msra.mxu0 0
        %1088 = vmatprep.mubr.bf16.mxu0 0
        %1089 = vmatmul.mubr.bf16.gmra.mrb[0].mxu0 %v1051
        %v1090 = vpop.f32.mrb[0].mxu0
        %v1091 = vadd.f32 0.0, %v1090
        %v1092 = vpop.f32.mrb[0].mxu0
        %v1093 = vpop.f32.mrb[0].mxu0
        %v1094 = vpop.f32.mrb[0].mxu0
        %1095 = vdwg.mxu0
        %v1096 = vpack.c.bf16 %v947, %v947
        %v1097 = vpack.c.bf16 %v995, %v995
        %v1098 = vpack.c.bf16 %v1043, %v1043
        %v1099 = vpack.c.bf16 %v1091, %v1091
        %v1100 = vld [vmem:[%s6] sm:$0xf]
        %v1101 = vld [vmem:[%s6 + $0x4] sm:$0xf]
        %v1102 = vld [vmem:[%s6 + $0x8] sm:$0xf]
        %v1103 = vld [vmem:[%s6 + $0xc] sm:$0xf]
        %v1105 = vsel %vm657, %v1096, 0
        %v1108 = vsel %vm908, %v1100, 0
        %1110 = vmatprep.subr.bf16.mxu0 0
        %1111 = vmatpush1.bf16.msra.mxu0 %v1108
        %1112 = vmatprep.subr.bf16.mxu0 0
        %1113 = vmatpush1.bf16.msra.mxu0 0
        %1114 = vmatprep.subr.bf16.mxu0 0
        %1115 = vmatpush1.bf16.msra.mxu0 0
        %1116 = vmatprep.subr.bf16.mxu0 0
        %1117 = vmatpush1.bf16.msra.mxu0 0
        %1118 = vmatprep.subr.bf16.mxu0 0
        %1119 = vmatpush1.bf16.msra.mxu0 0
        %1120 = vmatprep.subr.bf16.mxu0 0
        %1121 = vmatpush1.bf16.msra.mxu0 0
        %1122 = vmatprep.subr.bf16.mxu0 0
        %1123 = vmatpush1.bf16.msra.mxu0 0
        %1124 = vmatprep.subr.bf16.mxu0 0
        %1125 = vmatpush1.bf16.msra.mxu0 0
        %1126 = vmatprep.subr.bf16.mxu0 0
        %1127 = vmatpush1.bf16.msra.mxu0 0
        %1128 = vmatprep.subr.bf16.mxu0 0
        %1129 = vmatpush1.bf16.msra.mxu0 0
        %1130 = vmatprep.subr.bf16.mxu0 0
        %1131 = vmatpush1.bf16.msra.mxu0 0
        %1132 = vmatprep.subr.bf16.mxu0 0
        %1133 = vmatpush1.bf16.msra.mxu0 0
        %1134 = vmatprep.subr.bf16.mxu0 0
        %1135 = vmatpush1.bf16.msra.mxu0 0
        %1136 = vmatprep.subr.bf16.mxu0 0
        %1137 = vmatpush1.bf16.msra.mxu0 0
        %1138 = vmatprep.subr.bf16.mxu0 0
        %1139 = vmatpush1.bf16.msra.mxu0 0
        %1140 = vmatprep.subr.bf16.mxu0 0
        %1141 = vmatpush1.bf16.msra.mxu0 0
        %1142 = vmatprep.mubr.bf16.mxu0 0
        %1143 = vmatmul.mubr.bf16.gmra.mrb[0].mxu0 %v1105
        %v1144 = vpop.f32.mrb[0].mxu0
        %v1145 = vadd.f32 0.0, %v1144
        %v1146 = vpop.f32.mrb[0].mxu0
        %v1147 = vpop.f32.mrb[0].mxu0
        %v1148 = vpop.f32.mrb[0].mxu0
        %1149 = vdwg.mxu0
        %v1151 = vsel %vm657, %v1097, 0
        %v1154 = vsel %vm908, %v1101, 0
        %1156 = vmatprep.subr.bf16.mxu0 0
        %1157 = vmatpush1.bf16.msra.mxu0 %v1154
        %1158 = vmatprep.subr.bf16.mxu0 0
        %1159 = vmatpush1.bf16.msra.mxu0 0
        %1160 = vmatprep.subr.bf16.mxu0 0
        %1161 = vmatpush1.bf16.msra.mxu0 0
        %1162 = vmatprep.subr.bf16.mxu0 0
        %1163 = vmatpush1.bf16.msra.mxu0 0
        %1164 = vmatprep.subr.bf16.mxu0 0
        %1165 = vmatpush1.bf16.msra.mxu0 0
        %1166 = vmatprep.subr.bf16.mxu0 0
        %1167 = vmatpush1.bf16.msra.mxu0 0
        %1168 = vmatprep.subr.bf16.mxu0 0
        %1169 = vmatpush1.bf16.msra.mxu0 0
        %1170 = vmatprep.subr.bf16.mxu0 0
        %1171 = vmatpush1.bf16.msra.mxu0 0
        %1172 = vmatprep.subr.bf16.mxu0 0
        %1173 = vmatpush1.bf16.msra.mxu0 0
        %1174 = vmatprep.subr.bf16.mxu0 0
        %1175 = vmatpush1.bf16.msra.mxu0 0
        %1176 = vmatprep.subr.bf16.mxu0 0
        %1177 = vmatpush1.bf16.msra.mxu0 0
        %1178 = vmatprep.subr.bf16.mxu0 0
        %1179 = vmatpush1.bf16.msra.mxu0 0
        %1180 = vmatprep.subr.bf16.mxu0 0
        %1181 = vmatpush1.bf16.msra.mxu0 0
        %1182 = vmatprep.subr.bf16.mxu0 0
        %1183 = vmatpush1.bf16.msra.mxu0 0
        %1184 = vmatprep.subr.bf16.mxu0 0
        %1185 = vmatpush1.bf16.msra.mxu0 0
        %1186 = vmatprep.subr.bf16.mxu0 0
        %1187 = vmatpush1.bf16.msra.mxu0 0
        %1188 = vmatprep.mubr.bf16.mxu0 0
        %1189 = vmatmul.mubr.bf16.gmra.mrb[0].mxu0 %v1151
        %v1190 = vpop.f32.mrb[0].mxu0
        %v1191 = vadd.f32 0.0, %v1190
        %v1192 = vpop.f32.mrb[0].mxu0
        %v1193 = vpop.f32.mrb[0].mxu0
        %v1194 = vpop.f32.mrb[0].mxu0
        %1195 = vdwg.mxu0
        %v1197 = vsel %vm657, %v1098, 0
        %v1200 = vsel %vm908, %v1102, 0
        %1202 = vmatprep.subr.bf16.mxu0 0
        %1203 = vmatpush1.bf16.msra.mxu0 %v1200
        %1204 = vmatprep.subr.bf16.mxu0 0
        %1205 = vmatpush1.bf16.msra.mxu0 0
        %1206 = vmatprep.subr.bf16.mxu0 0
        %1207 = vmatpush1.bf16.msra.mxu0 0
        %1208 = vmatprep.subr.bf16.mxu0 0
        %1209 = vmatpush1.bf16.msra.mxu0 0
        %1210 = vmatprep.subr.bf16.mxu0 0
        %1211 = vmatpush1.bf16.msra.mxu0 0
        %1212 = vmatprep.subr.bf16.mxu0 0
        %1213 = vmatpush1.bf16.msra.mxu0 0
        %1214 = vmatprep.subr.bf16.mxu0 0
        %1215 = vmatpush1.bf16.msra.mxu0 0
        %1216 = vmatprep.subr.bf16.mxu0 0
        %1217 = vmatpush1.bf16.msra.mxu0 0
        %1218 = vmatprep.subr.bf16.mxu0 0
        %1219 = vmatpush1.bf16.msra.mxu0 0
        %1220 = vmatprep.subr.bf16.mxu0 0
        %1221 = vmatpush1.bf16.msra.mxu0 0
        %1222 = vmatprep.subr.bf16.mxu0 0
        %1223 = vmatpush1.bf16.msra.mxu0 0
        %1224 = vmatprep.subr.bf16.mxu0 0
        %1225 = vmatpush1.bf16.msra.mxu0 0
        %1226 = vmatprep.subr.bf16.mxu0 0
        %1227 = vmatpush1.bf16.msra.mxu0 0
        %1228 = vmatprep.subr.bf16.mxu0 0
        %1229 = vmatpush1.bf16.msra.mxu0 0
        %1230 = vmatprep.subr.bf16.mxu0 0
        %1231 = vmatpush1.bf16.msra.mxu0 0
        %1232 = vmatprep.subr.bf16.mxu0 0
        %1233 = vmatpush1.bf16.msra.mxu0 0
        %1234 = vmatprep.mubr.bf16.mxu0 0
        %1235 = vmatmul.mubr.bf16.gmra.mrb[0].mxu0 %v1197
        %v1236 = vpop.f32.mrb[0].mxu0
        %v1237 = vadd.f32 0.0, %v1236
        %v1238 = vpop.f32.mrb[0].mxu0
        %v1239 = vpop.f32.mrb[0].mxu0
        %v1240 = vpop.f32.mrb[0].mxu0
        %1241 = vdwg.mxu0
        %v1243 = vsel %vm657, %v1099, 0
        %v1246 = vsel %vm908, %v1103, 0
        %1248 = vmatprep.subr.bf16.mxu0 0
        %1249 = vmatpush1.bf16.msra.mxu0 %v1246
        %1250 = vmatprep.subr.bf16.mxu0 0
        %1251 = vmatpush1.bf16.msra.mxu0 0
        %1252 = vmatprep.subr.bf16.mxu0 0
        %1253 = vmatpush1.bf16.msra.mxu0 0
        %1254 = vmatprep.subr.bf16.mxu0 0
        %1255 = vmatpush1.bf16.msra.mxu0 0
        %1256 = vmatprep.subr.bf16.mxu0 0
        %1257 = vmatpush1.bf16.msra.mxu0 0
        %1258 = vmatprep.subr.bf16.mxu0 0
        %1259 = vmatpush1.bf16.msra.mxu0 0
        %1260 = vmatprep.subr.bf16.mxu0 0
        %1261 = vmatpush1.bf16.msra.mxu0 0
        %1262 = vmatprep.subr.bf16.mxu0 0
        %1263 = vmatpush1.bf16.msra.mxu0 0
        %1264 = vmatprep.subr.bf16.mxu0 0
        %1265 = vmatpush1.bf16.msra.mxu0 0
        %1266 = vmatprep.subr.bf16.mxu0 0
        %1267 = vmatpush1.bf16.msra.mxu0 0
        %1268 = vmatprep.subr.bf16.mxu0 0
        %1269 = vmatpush1.bf16.msra.mxu0 0
        %1270 = vmatprep.subr.bf16.mxu0 0
        %1271 = vmatpush1.bf16.msra.mxu0 0
        %1272 = vmatprep.subr.bf16.mxu0 0
        %1273 = vmatpush1.bf16.msra.mxu0 0
        %1274 = vmatprep.subr.bf16.mxu0 0
        %1275 = vmatpush1.bf16.msra.mxu0 0
        %1276 = vmatprep.subr.bf16.mxu0 0
        %1277 = vmatpush1.bf16.msra.mxu0 0
        %1278 = vmatprep.subr.bf16.mxu0 0
        %1279 = vmatpush1.bf16.msra.mxu0 0
        %1280 = vmatprep.mubr.bf16.mxu0 0
        %1281 = vmatmul.mubr.bf16.gmra.mrb[0].mxu0 %v1243
        %v1282 = vpop.f32.mrb[0].mxu0
        %v1283 = vadd.f32 0.0, %v1282
        %v1284 = vpop.f32.mrb[0].mxu0
        %v1285 = vpop.f32.mrb[0].mxu0
        %v1286 = vpop.f32.mrb[0].mxu0
        %1287 = vdwg.mxu0
        %v1288 = vsel %vm486, %v1145, 0.0
        %v1289 = vsel %vm486, %v1191, 0.0
        %v1290 = vadd.f32 %v1288, %v1289
        %v1291 = vsel %vm486, %v1237, 0.0
        %v1292 = vadd.f32 %v1290, %v1291
        %v1293 = vsel %vm486, %v1283, 0.0
        %v1294 = vadd.f32 %v1292, %v1293
        %v1295 = vlaneseq
        %v1296 = vshrl.u32 %v1295, 7
        %v1297 = vsub.s32 0, %v1296
        %v1298 = vrot.slane %v460, %v1297
        %v1299 = vadd.f32 %v1294, %v1298
        %v1300 = vadd.f32 %v1299, %v565
        %v1301 = vpack.c.bf16 %v1300, %v1300
        %v1302 = vld [vmem:[#allocation7] sm:$0xf]
        %v1303 = vld [vmem:[#allocation7 + $0x4] sm:$0xf]
        %v1304 = vld [vmem:[#allocation7 + $0x8] sm:$0xf]
        %v1305 = vld [vmem:[#allocation7 + $0xc] sm:$0xf]
        %v1306 = vlaneseq
        %v1307 = vshrl.u32 %v1306, 7
        %v1308 = vsub.s32 0, %v1307
        %v1309 = vrot.slane %v461, %v1308
        %v1314 = vunpack.c.l.b16 %v1302
        %v1315 = vunpack.c.l.b16 %v1303
        %v1316 = vunpack.c.l.b16 %v1304
        %v1317 = vunpack.c.l.b16 %v1305
        %v1318 = vpack.c.b16 %v1315, %v1314
        %v1319 = vpack.c.b16 %v1317, %v1316
        %v1323 = vsel %vm486, %v1301, 0
        %1325 = vmatprep.subr.bf16.mxu0 0
        %1326 = vmatpush1.bf16.msra.mxu0 %v1318
        %1327 = vmatprep.subr.bf16.mxu0 0
        %1328 = vmatpush1.bf16.msra.mxu0 %v1319
        %1329 = vmatprep.subr.bf16.mxu0 0
        %1330 = vmatpush1.bf16.msra.mxu0 0
        %1331 = vmatprep.subr.bf16.mxu0 0
        %1332 = vmatpush1.bf16.msra.mxu0 0
        %1333 = vmatprep.subr.bf16.mxu0 0
        %1334 = vmatpush1.bf16.msra.mxu0 0
        %1335 = vmatprep.subr.bf16.mxu0 0
        %1336 = vmatpush1.bf16.msra.mxu0 0
        %1337 = vmatprep.subr.bf16.mxu0 0
        %1338 = vmatpush1.bf16.msra.mxu0 0
        %1339 = vmatprep.subr.bf16.mxu0 0
        %1340 = vmatpush1.bf16.msra.mxu0 0
        %1341 = vmatprep.subr.bf16.mxu0 0
        %1342 = vmatpush1.bf16.msra.mxu0 0
        %1343 = vmatprep.subr.bf16.mxu0 0
        %1344 = vmatpush1.bf16.msra.mxu0 0
        %1345 = vmatprep.subr.bf16.mxu0 0
        %1346 = vmatpush1.bf16.msra.mxu0 0
        %1347 = vmatprep.subr.bf16.mxu0 0
        %1348 = vmatpush1.bf16.msra.mxu0 0
        %1349 = vmatprep.subr.bf16.mxu0 0
        %1350 = vmatpush1.bf16.msra.mxu0 0
        %1351 = vmatprep.subr.bf16.mxu0 0
        %1352 = vmatpush1.bf16.msra.mxu0 0
        %1353 = vmatprep.subr.bf16.mxu0 0
        %1354 = vmatpush1.bf16.msra.mxu0 0
        %1355 = vmatprep.subr.bf16.mxu0 0
        %1356 = vmatpush1.bf16.msra.mxu0 0
        %1357 = vmatprep.mubr.bf16.mxu0 0
        %1358 = vmatmul.mubr.bf16.gmra.mrb[0].mxu0 %v1323
        %v1359 = vpop.f32.mrb[0].mxu0
        %v1360 = vadd.f32 %v1309, %v1359
        %v1361 = vpop.f32.mrb[0].mxu0
        %v1362 = vpop.f32.mrb[0].mxu0
        %v1363 = vpop.f32.mrb[0].mxu0
        %1364 = vdwg.mxu0
        %v1365 = vmax.f32 %v1360, 0.0
        %v1366 = vpack.c.bf16 %v1365, %v1365
        %v1367 = vld [vmem:[%s8] sm:$0xf]
        %v1368 = vld [vmem:[%s8 + $0x4] sm:$0xf]
        %v1369 = vld [vmem:[%s8 + $0x8] sm:$0xf]
        %v1370 = vld [vmem:[%s8 + $0xc] sm:$0xf]
        %v1371 = vld [vmem:[%s8 + $0x10] sm:$0xf]
        %v1372 = vld [vmem:[%s8 + $0x14] sm:$0xf]
        %v1373 = vld [vmem:[%s8 + $0x18] sm:$0xf]
        %v1374 = vld [vmem:[%s8 + $0x1c] sm:$0xf]
        %v1375 = vlaneseq
        %v1376 = vshrl.u32 %v1375, 7
        %v1377 = vsub.s32 0, %v1376
        %v1378 = vrot.slane %v462, %v1377
        %v1387 = vunpack.c.l.b16 %v1367
        %v1388 = vunpack.c.l.b16 %v1368
        %v1389 = vunpack.c.l.b16 %v1369
        %v1390 = vunpack.c.l.b16 %v1370
        %v1391 = vunpack.c.l.b16 %v1371
        %v1392 = vunpack.c.l.b16 %v1372
        %v1393 = vunpack.c.l.b16 %v1373
        %v1394 = vunpack.c.l.b16 %v1374
        %v1395 = vpack.c.b16 %v1388, %v1387
        %v1396 = vpack.c.b16 %v1390, %v1389
        %v1397 = vpack.c.b16 %v1392, %v1391
        %v1398 = vpack.c.b16 %v1394, %v1393
        %vm1403 = vcmask 523264
        %v1405 = vsel %vm1403, %v1366, 0
        %1407 = vmatprep.subr.bf16.mxu0 0
        %1408 = vmatpush1.bf16.msra.mxu0 %v1395
        %1409 = vmatprep.subr.bf16.mxu0 0
        %1410 = vmatpush1.bf16.msra.mxu0 %v1396
        %1411 = vmatprep.subr.bf16.mxu0 0
        %1412 = vmatpush1.bf16.msra.mxu0 %v1397
        %1413 = vmatprep.subr.bf16.mxu0 0
        %1414 = vmatpush1.bf16.msra.mxu0 %v1398
        %1415 = vmatprep.subr.bf16.mxu0 0
        %1416 = vmatpush1.bf16.msra.mxu0 0
        %1417 = vmatprep.subr.bf16.mxu0 0
        %1418 = vmatpush1.bf16.msra.mxu0 0
        %1419 = vmatprep.subr.bf16.mxu0 0
        %1420 = vmatpush1.bf16.msra.mxu0 0
        %1421 = vmatprep.subr.bf16.mxu0 0
        %1422 = vmatpush1.bf16.msra.mxu0 0
        %1423 = vmatprep.subr.bf16.mxu0 0
        %1424 = vmatpush1.bf16.msra.mxu0 0
        %1425 = vmatprep.subr.bf16.mxu0 0
        %1426 = vmatpush1.bf16.msra.mxu0 0
        %1427 = vmatprep.subr.bf16.mxu0 0
        %1428 = vmatpush1.bf16.msra.mxu0 0
        %1429 = vmatprep.subr.bf16.mxu0 0
        %1430 = vmatpush1.bf16.msra.mxu0 0
        %1431 = vmatprep.subr.bf16.mxu0 0
        %1432 = vmatpush1.bf16.msra.mxu0 0
        %1433 = vmatprep.subr.bf16.mxu0 0
        %1434 = vmatpush1.bf16.msra.mxu0 0
        %1435 = vmatprep.subr.bf16.mxu0 0
        %1436 = vmatpush1.bf16.msra.mxu0 0
        %1437 = vmatprep.subr.bf16.mxu0 0
        %1438 = vmatpush1.bf16.msra.mxu0 0
        %1439 = vmatprep.mubr.bf16.mxu0 0
        %1440 = vmatmul.mubr.bf16.gmra.mrb[0].mxu0 %v1405
        %v1441 = vpop.f32.mrb[0].mxu0
        %v1442 = vadd.f32 %v1378, %v1441
        %v1443 = vpop.f32.mrb[0].mxu0
        %v1444 = vpop.f32.mrb[0].mxu0
        %v1445 = vpop.f32.mrb[0].mxu0
        %1446 = vdwg.mxu0
        %v1447 = vadd.f32 %v1300, %v1442
        %v1448 = vsel %vm486, %v1447, 0.0
        %1449 = vadd.xlane.f32.xlu0 %v1448
        %v1450 = vpop.xlane.xlu0 %1449
        %v1451 = vrcp.pop 32.0
        %v1452 = vmul.f32 %v1450, %v1451
        %v1453 = vsub.f32 %v1447, %v1452
        %v1454 = vmul.f32 %v1453, %v1453
        %v1455 = vsel %vm486, %v1454, 0.0
        %1456 = vadd.xlane.f32.xlu0 %v1455
        %v1457 = vpop.xlane.xlu0 %1456
        %v1458 = vmul.f32 %v1457, %v1451
        %v1459 = vadd.f32 %v1458, 1e-05
        %v1460 = vrsqrt.pop %v1459
        %v1461 = vmul.f32 %v1453, %v1460
        %v1462 = vlaneseq
        %v1463 = vshrl.u32 %v1462, 7
        %v1464 = vsub.s32 0, %v1463
        %v1465 = vrot.slane %v463, %v1464
        %v1466 = vmul.f32 %v1461, %v1465
        %v1467 = vlaneseq
        %v1468 = vshrl.u32 %v1467, 7
        %v1469 = vsub.s32 0, %v1468
        %v1470 = vrot.slane %v464, %v1469
        %v1471 = vadd.f32 %v1466, %v1470
        %1472 = vst.msk [vmem:[%s448] sm:$0xff] %vm486, %v1471
        %s1473 = sand.u32 %s268, 1
        %s1474 = scalar_lea.sflag [#allocation4], %s1473
        %s1475 = sand.u32 %s268, 1
        %s1476 = smul.addr %s1475, 8
        %s1477 = scalar_lea.vmem [#allocation8], %s1476
        // Predicated region
        $region73: #{tpu_custom_call.1} parent=59 // pred_check
          %p1478 = pneg %p278
        $region74: #{tpu_custom_call.1} parent=59 // pred_check_branch
          %1480 = sbr.rel (%p1478) target = $region76
        $region75: #{tpu_custom_call.1} parent=59 // pred_region
          %s1482 = ssub.s32 128, 128
          %1483 = vsyncadd %s1474, %s1482
          %s1484 = smul.addr %s30, 128
          %s1485 = scalar_lea.hbm %s10, %s1484
          %s1487 = sshll.u32 %s1477, 4
          %s1488 = int_to_ptr.vmem [resolvable:$true] %s1487
          %1490 = dma.vmem_to_hbm [thread:$0]  %s1488, 128, %s1485, %s1474
        $region76: #{tpu_custom_call.1} parent=59 // pred_fallthru
          _
      $region60: #{tpu_custom_call.1} parent=5 // pred_fallthru
        _
      %p1491 = scmp.le.s32.totalorder 2, %s25
      // Predicated region
      $region77: #{tpu_custom_call.1} parent=5 // pred_check
        %p1492 = pneg %p1491
      $region78: #{tpu_custom_call.1} parent=5 // pred_check_branch
        %1494 = sbr.rel (%p1492) target = $region80
      $region79: #{tpu_custom_call.1} parent=5 // pred_region
        %s1495 = ssub.s32 %s25, 2
        // Predicated region
        $region81: #{tpu_custom_call.1} parent=79 // pred_check
          %p1496 = pneg %p284
        $region82: #{tpu_custom_call.1} parent=79 // pred_check_branch
          %1498 = sbr.rel (%p1496) target = $region84
        $region83: #{tpu_custom_call.1} parent=79 // pred_region
          %s1499 = sand.u32 %s269, 1
          %s1500 = scalar_lea.sflag [#allocation4], %s1499
          %s1501 = sand.u32 %s269, 1
          %s1502 = smul.addr %s1501, 8
          %s1503 = scalar_lea.vmem [#allocation8], %s1502
          %1504 = dma.done %s1500, 128
        $region84: #{tpu_custom_call.1} parent=79 // pred_fallthru
          _
      $region80: #{tpu_custom_call.1} parent=5 // pred_fallthru
        _
    $region6: #{tpu_custom_call.1} parent=1 // loop_footer
      %s29 = sadd.s32 1, %s25
    $region7: #{tpu_custom_call.1} parent=1 // loop_footer_branch
      %24 = sbr.rel target = $region3
    $region8: #{tpu_custom_call.1} parent=1 // loop_exit
      _
    %1505 = vsyncpa [#allocation3], 1
    %s1506 = scalar_lea.sflag [#allocation3], 1
    %1507 = vsyncpa %s1506, 1
    %1508 = vsyncpa [#allocation6], 1
    %s1509 = scalar_lea.sflag [#allocation6], 1
    %1510 = vsyncpa %s1509, 1
    %1511 = vsyncpa [#allocation4], 1
    %s1512 = scalar_lea.sflag [#allocation4], 1
    %1513 = vsyncpa %s1512, 1

</llo_original>
